<compile_context>
chip_gen: v7x
topology: tpu7x:2x2x1
jax: 0.10.0
libtpu: 0.0.40
codegen_flags: <defaults>
</compile_context>

<pallas_src>
import functools
import math

import numpy as np
import jax
import jax.numpy as jnp
from jax.experimental import pallas as pl
from jax.experimental.pallas import tpu as pltpu

LN_EPS = 1e-5


def _erf(x):
    # Abramowitz & Stegun 7.1.26 rational approximation of erf.
    p = 0.3275911
    a1, a2, a3, a4, a5 = (0.254829592, -0.284496736, 1.421413741,
                          -1.453152027, 1.061405429)
    sgn = jnp.where(x >= 0.0, 1.0, -1.0)
    ax = jnp.abs(x)
    t = 1.0 / (1.0 + p * ax)
    poly = ((((a5 * t + a4) * t + a3) * t + a2) * t + a1) * t
    return sgn * (1.0 - poly * jnp.exp(-ax * ax))


def _gelu_exact(x):
    return 0.5 * x * (1.0 + _erf(x * (1.0 / math.sqrt(2.0))))


def _layer_norm(x, w, b):
    mu = jnp.mean(x, axis=-1, keepdims=True)
    var = jnp.mean((x - mu) ** 2, axis=-1, keepdims=True)
    return (x - mu) / jnp.sqrt(var + LN_EPS) * w + b


def _block_kernel(x_ref, ln1_w_ref, ln1_b_ref, wqkv_ref, bqkv_ref, wo_ref,
                  bo_ref, ln2_w_ref, ln2_b_ref, w1_ref, b1_ref, w2_ref,
                  b2_ref, o_ref, *, n_head):
    x = x_ref[0]                                   # (T, E) f32
    T, E = x.shape
    hd = E // n_head
    scale = 1.0 / math.sqrt(hd)

    # ---- ln1 + fused QKV projection (single MXU matmul, K=E, N=3E) ----
    h = _layer_norm(x, ln1_w_ref[...], ln1_b_ref[...])
    qkv = jnp.dot(h, wqkv_ref[...], preferred_element_type=jnp.float32)
    qkv = qkv + bqkv_ref[...]
    q = qkv[:, :E]
    k = qkv[:, E:2 * E]
    v = qkv[:, 2 * E:]

    # ---- multi-head self-attention (full T x T scores per head) ----
    heads = []
    for hh in range(n_head):
        sl = slice(hh * hd, (hh + 1) * hd)
        qh, kh, vh = q[:, sl], k[:, sl], v[:, sl]
        s = jnp.dot(qh, kh.T, preferred_element_type=jnp.float32) * scale
        s = s - jnp.max(s, axis=-1, keepdims=True)
        e = jnp.exp(s)
        p = e / jnp.sum(e, axis=-1, keepdims=True)
        heads.append(jnp.dot(p, vh, preferred_element_type=jnp.float32))
    attn = jnp.concatenate(heads, axis=-1)                       # (T, E)
    attn = jnp.dot(attn, wo_ref[...], preferred_element_type=jnp.float32)
    attn = attn + bo_ref[...]

    x1 = x + attn                                                # residual 1

    # ---- ln2 + MLP: Linear -> GELU(exact) -> Linear (dropout = identity) ----
    h2 = _layer_norm(x1, ln2_w_ref[...], ln2_b_ref[...])
    m = jnp.dot(h2, w1_ref[...], preferred_element_type=jnp.float32) + b1_ref[...]
    m = _gelu_exact(m)
    m = jnp.dot(m, w2_ref[...], preferred_element_type=jnp.float32) + b2_ref[...]

    o_ref[0] = x1 + m                                            # residual 2


def block_forward(x, params, n_head):
    """x: (B, T, E) f32.  params: weights in math layout (already transposed:
    y = x @ W + b)."""
    (ln1_w, ln1_b, wqkv, bqkv, wo, bo,
     ln2_w, ln2_b, w1, b1, w2, b2) = params
    B, T, E = x.shape
    assert E % n_head == 0

    weights = (ln1_w, ln1_b, wqkv, bqkv, wo, bo, ln2_w, ln2_b, w1, b1, w2, b2)

    def _full(a):
        nd = a.ndim
        return pl.BlockSpec(a.shape, lambda b, _nd=nd: (0,) * _nd)

    kernel = functools.partial(_block_kernel, n_head=n_head)
    return pl.pallas_call(
        kernel,
        out_shape=jax.ShapeDtypeStruct((B, T, E), jnp.float32),
        grid_spec=pltpu.PrefetchScalarGridSpec(
            num_scalar_prefetch=0,
            grid=(B,),
            in_specs=[pl.BlockSpec((1, T, E), lambda b: (b, 0, 0))]
                     + [_full(w) for w in weights],
            out_specs=pl.BlockSpec((1, T, E), lambda b: (b, 0, 0)),
        ),
        compiler_params=pltpu.CompilerParams(
            dimension_semantics=("parallel",)),
    )(x, *weights)


def block_reference(x, params, n_head):
    """Pure-JAX reference mirroring PyTorch `Block` (eval mode, dropout off)."""
    (ln1_w, ln1_b, wqkv, bqkv, wo, bo,
     ln2_w, ln2_b, w1, b1, w2, b2) = params
    B, T, E = x.shape
    hd = E // n_head
    hi = jax.lax.Precision.HIGHEST

    def ln(v, w, b):
        mu = jnp.mean(v, -1, keepdims=True)
        var = jnp.mean((v - mu) ** 2, -1, keepdims=True)
        return (v - mu) / jnp.sqrt(var + LN_EPS) * w.reshape(-1) + b.reshape(-1)

    h = ln(x, ln1_w, ln1_b)
    qkv = jnp.einsum("bte,ef->btf", h, wqkv, precision=hi) + bqkv.reshape(-1)
    q, k, v = jnp.split(qkv, 3, axis=-1)

    def split_heads(t):
        return t.reshape(B, T, n_head, hd).transpose(0, 2, 1, 3)

    qh, kh, vh = split_heads(q), split_heads(k), split_heads(v)
    s = jnp.einsum("bhtd,bhsd->bhts", qh, kh, precision=hi) / math.sqrt(hd)
    p = jax.nn.softmax(s, axis=-1)
    o = jnp.einsum("bhts,bhsd->bhtd", p, vh, precision=hi)
    o = o.transpose(0, 2, 1, 3).reshape(B, T, E)
    attn = jnp.einsum("bte,ef->btf", o, wo, precision=hi) + bo.reshape(-1)
    x1 = x + attn
    h2 = ln(x1, ln2_w, ln2_b)
    m = jnp.einsum("bte,ef->btf", h2, w1, precision=hi) + b1.reshape(-1)
    m = jax.nn.gelu(m, approximate=False)
    m = jnp.einsum("btf,fe->bte", m, w2, precision=hi) + b2.reshape(-1)
    return x1 + m


if __name__ == "__main__":
    B, T, E, n_head = 2, 32, 128, 4           # head_dim = 32

    key = jax.random.PRNGKey(0)
    keys = jax.random.split(key, 13)

    x = jax.random.normal(keys[0], (B, T, E), jnp.float32)

    def nrm(k, shape, scale=0.05):
        return scale * jax.random.normal(k, shape, jnp.float32)

    params = (
        1.0 + nrm(keys[1], (1, E)),            # ln1 weight
        nrm(keys[2], (1, E)),                  # ln1 bias
        nrm(keys[3], (E, 3 * E)),              # attn in_proj weight (transposed)
        nrm(keys[4], (1, 3 * E)),              # attn in_proj bias
        nrm(keys[5], (E, E)),                  # attn out_proj weight (transposed)
        nrm(keys[6], (1, E)),                  # attn out_proj bias
        1.0 + nrm(keys[7], (1, E)),            # ln2 weight
        nrm(keys[8], (1, E)),                  # ln2 bias
        nrm(keys[9], (E, 4 * E)),              # mlp fc1 weight (transposed)
        nrm(keys[10], (1, 4 * E)),             # mlp fc1 bias
        nrm(keys[11], (4 * E, E)),             # mlp fc2 weight (transposed)
        nrm(keys[12], (1, E)),                 # mlp fc2 bias
    )

    out = jax.block_until_ready(block_forward(x, params, n_head))
    ref = jax.block_until_ready(block_reference(x, params, n_head))

    # Loose-ish tolerance only to absorb MXU multi-pass f32 matmul rounding
    # differences vs the HIGHEST-precision XLA reference; logic errors would
    # show up at O(0.1-1).
    np.testing.assert_allclose(np.asarray(out), np.asarray(ref),
                               rtol=2e-2, atol=2e-2)
    print("KERNEL_OK")
</pallas_src>

<mosaic_0001>
module attributes {stable_mosaic.version = 11 : i64} {
  func.func @_block_kernel(%arg0: i32, %arg1: memref<1x32x128xf32, #tpu.memory_space<vmem>>, %arg2: memref<1x128xf32, #tpu.memory_space<vmem>>, %arg3: memref<1x128xf32, #tpu.memory_space<vmem>>, %arg4: memref<128x384xf32, #tpu.memory_space<vmem>>, %arg5: memref<1x384xf32, #tpu.memory_space<vmem>>, %arg6: memref<128x128xf32, #tpu.memory_space<vmem>>, %arg7: memref<1x128xf32, #tpu.memory_space<vmem>>, %arg8: memref<1x128xf32, #tpu.memory_space<vmem>>, %arg9: memref<1x128xf32, #tpu.memory_space<vmem>>, %arg10: memref<128x512xf32, #tpu.memory_space<vmem>>, %arg11: memref<1x512xf32, #tpu.memory_space<vmem>>, %arg12: memref<512x128xf32, #tpu.memory_space<vmem>>, %arg13: memref<1x128xf32, #tpu.memory_space<vmem>>, %arg14: memref<1x32x128xf32, #tpu.memory_space<vmem>>) attributes {dimension_semantics = [#tpu.dimension_semantics<parallel>], iteration_bounds = array<i64: 2>, scalar_prefetch = 0 : i64, scratch_operands = 0 : i64, tpu.core_type = #tpu.core_type<tc>, window_params = [{transform_indices = @transform_0, window_bounds = array<i64: 1, 32, 128>}, {pipeline_mode = #tpu.pipeline_mode<synchronous>, transform_indices = @transform_1, window_bounds = array<i64: 1, 128>}, {pipeline_mode = #tpu.pipeline_mode<synchronous>, transform_indices = @transform_2, window_bounds = array<i64: 1, 128>}, {pipeline_mode = #tpu.pipeline_mode<synchronous>, transform_indices = @transform_3, window_bounds = array<i64: 128, 384>}, {pipeline_mode = #tpu.pipeline_mode<synchronous>, transform_indices = @transform_4, window_bounds = array<i64: 1, 384>}, {pipeline_mode = #tpu.pipeline_mode<synchronous>, transform_indices = @transform_5, window_bounds = array<i64: 128, 128>}, {pipeline_mode = #tpu.pipeline_mode<synchronous>, transform_indices = @transform_6, window_bounds = array<i64: 1, 128>}, {pipeline_mode = #tpu.pipeline_mode<synchronous>, transform_indices = @transform_7, window_bounds = array<i64: 1, 128>}, {pipeline_mode = #tpu.pipeline_mode<synchronous>, transform_indices = @transform_8, window_bounds = array<i64: 1, 128>}, {pipeline_mode = #tpu.pipeline_mode<synchronous>, transform_indices = @transform_9, window_bounds = array<i64: 128, 512>}, {pipeline_mode = #tpu.pipeline_mode<synchronous>, transform_indices = @transform_10, window_bounds = array<i64: 1, 512>}, {pipeline_mode = #tpu.pipeline_mode<synchronous>, transform_indices = @transform_11, window_bounds = array<i64: 512, 128>}, {pipeline_mode = #tpu.pipeline_mode<synchronous>, transform_indices = @transform_12, window_bounds = array<i64: 1, 128>}, {transform_indices = @transform_13, window_bounds = array<i64: 1, 32, 128>}]} {
    %c0 = arith.constant 0 : index
    %c0_0 = arith.constant 0 : index
    %c0_1 = arith.constant 0 : index
    %0 = vector.load %arg1[%c0, %c0_0, %c0_1] : memref<1x32x128xf32, #tpu.memory_space<vmem>>, vector<1x32x128xf32>
    %1 = vector.shape_cast %0 : vector<1x32x128xf32> to vector<32x128xf32>
    %c0_2 = arith.constant 0 : index
    %c0_3 = arith.constant 0 : index
    %2 = vector.load %arg2[%c0_2, %c0_3] : memref<1x128xf32, #tpu.memory_space<vmem>>, vector<1x128xf32>
    %c0_4 = arith.constant 0 : index
    %c0_5 = arith.constant 0 : index
    %3 = vector.load %arg3[%c0_4, %c0_5] : memref<1x128xf32, #tpu.memory_space<vmem>>, vector<1x128xf32>
    %cst = arith.constant dense<0.000000e+00> : vector<32xf32>
    %4 = vector.multi_reduction <add>, %1, %cst [1] : vector<32x128xf32> to vector<32xf32>
    %5 = vector.shape_cast %4 : vector<32xf32> to vector<32x1xf32>
    %cst_6 = arith.constant 1.280000e+02 : f32
    %6 = vector.broadcast %cst_6 : f32 to vector<32x1xf32>
    %7 = arith.divf %5, %6 : vector<32x1xf32>
    %8 = vector.broadcast %7 : vector<32x1xf32> to vector<32x128xf32>
    %9 = arith.subf %1, %8 : vector<32x128xf32>
    %10 = arith.mulf %9, %9 : vector<32x128xf32>
    %cst_7 = arith.constant dense<0.000000e+00> : vector<32xf32>
    %11 = vector.multi_reduction <add>, %10, %cst_7 [1] : vector<32x128xf32> to vector<32xf32>
    %12 = vector.shape_cast %11 : vector<32xf32> to vector<32x1xf32>
    %cst_8 = arith.constant 1.280000e+02 : f32
    %13 = vector.broadcast %cst_8 : f32 to vector<32x1xf32>
    %14 = arith.divf %12, %13 : vector<32x1xf32>
    %15 = vector.broadcast %7 : vector<32x1xf32> to vector<32x128xf32>
    %16 = arith.subf %1, %15 : vector<32x128xf32>
    %cst_9 = arith.constant 9.99999974E-6 : f32
    %17 = vector.broadcast %cst_9 : f32 to vector<32x1xf32>
    %18 = arith.addf %14, %17 : vector<32x1xf32>
    %19 = math.sqrt %18 : vector<32x1xf32>
    %20 = vector.broadcast %19 : vector<32x1xf32> to vector<32x128xf32>
    %21 = arith.divf %16, %20 : vector<32x128xf32>
    %22 = vector.broadcast %2 : vector<1x128xf32> to vector<32x128xf32>
    %23 = arith.mulf %21, %22 : vector<32x128xf32>
    %24 = vector.broadcast %3 : vector<1x128xf32> to vector<32x128xf32>
    %25 = arith.addf %23, %24 : vector<32x128xf32>
    %c0_10 = arith.constant 0 : index
    %c0_11 = arith.constant 0 : index
    %26 = vector.load %arg4[%c0_10, %c0_11] : memref<128x384xf32, #tpu.memory_space<vmem>>, vector<128x384xf32>
    %cst_12 = arith.constant dense<0.000000e+00> : vector<32x384xf32>
    %27 = tpu.matmul %25, %26, %cst_12 {dimension_numbers = #tpu.dot_dimension_numbers<[1], [0], [0], [1], [0, 0, 1, 1], [], []>} : vector<32x128xf32>, vector<128x384xf32>, vector<32x384xf32> -> vector<32x384xf32>
    %c0_13 = arith.constant 0 : index
    %c0_14 = arith.constant 0 : index
    %28 = vector.load %arg5[%c0_13, %c0_14] : memref<1x384xf32, #tpu.memory_space<vmem>>, vector<1x384xf32>
    %29 = vector.broadcast %28 : vector<1x384xf32> to vector<32x384xf32>
    %30 = arith.addf %27, %29 : vector<32x384xf32>
    %31 = vector.extract_strided_slice %30 {offsets = [0, 0], sizes = [32, 128], strides = [1, 1]} : vector<32x384xf32> to vector<32x128xf32>
    %32 = vector.extract_strided_slice %30 {offsets = [0, 128], sizes = [32, 128], strides = [1, 1]} : vector<32x384xf32> to vector<32x128xf32>
    %33 = vector.extract_strided_slice %30 {offsets = [0, 256], sizes = [32, 128], strides = [1, 1]} : vector<32x384xf32> to vector<32x128xf32>
    %34 = vector.extract_strided_slice %31 {offsets = [0, 0], sizes = [32, 32], strides = [1, 1]} : vector<32x128xf32> to vector<32x32xf32>
    %35 = vector.extract_strided_slice %32 {offsets = [0, 0], sizes = [32, 32], strides = [1, 1]} : vector<32x128xf32> to vector<32x32xf32>
    %36 = vector.extract_strided_slice %33 {offsets = [0, 0], sizes = [32, 32], strides = [1, 1]} : vector<32x128xf32> to vector<32x32xf32>
    %37 = tpu.transpose %35, [1, 0] : vector<32x32xf32> -> vector<32x32xf32>
    %cst_15 = arith.constant dense<0.000000e+00> : vector<32x32xf32>
    %38 = tpu.matmul %34, %37, %cst_15 {dimension_numbers = #tpu.dot_dimension_numbers<[1], [0], [0], [1], [0, 0, 1, 1], [], []>} : vector<32x32xf32>, vector<32x32xf32>, vector<32x32xf32> -> vector<32x32xf32>
    %cst_16 = arith.constant 0.176776692 : f32
    %39 = vector.broadcast %cst_16 : f32 to vector<32x32xf32>
    %40 = arith.mulf %38, %39 : vector<32x32xf32>
    %cst_17 = arith.constant dense<0xFF800000> : vector<32xf32>
    %41 = vector.multi_reduction <maximumf>, %40, %cst_17 [1] : vector<32x32xf32> to vector<32xf32>
    %42 = vector.shape_cast %41 : vector<32xf32> to vector<32x1xf32>
    %43 = vector.broadcast %42 : vector<32x1xf32> to vector<32x32xf32>
    %44 = arith.subf %40, %43 : vector<32x32xf32>
    %45 = math.exp %44 : vector<32x32xf32>
    %cst_18 = arith.constant dense<0.000000e+00> : vector<32xf32>
    %46 = vector.multi_reduction <add>, %45, %cst_18 [1] : vector<32x32xf32> to vector<32xf32>
    %47 = vector.shape_cast %46 : vector<32xf32> to vector<32x1xf32>
    %48 = vector.broadcast %47 : vector<32x1xf32> to vector<32x32xf32>
    %49 = arith.divf %45, %48 : vector<32x32xf32>
    %cst_19 = arith.constant dense<0.000000e+00> : vector<32x32xf32>
    %50 = tpu.matmul %49, %36, %cst_19 {dimension_numbers = #tpu.dot_dimension_numbers<[1], [0], [0], [1], [0, 0, 1, 1], [], []>} : vector<32x32xf32>, vector<32x32xf32>, vector<32x32xf32> -> vector<32x32xf32>
    %51 = vector.extract_strided_slice %31 {offsets = [0, 32], sizes = [32, 32], strides = [1, 1]} : vector<32x128xf32> to vector<32x32xf32>
    %52 = vector.extract_strided_slice %32 {offsets = [0, 32], sizes = [32, 32], strides = [1, 1]} : vector<32x128xf32> to vector<32x32xf32>
    %53 = vector.extract_strided_slice %33 {offsets = [0, 32], sizes = [32, 32], strides = [1, 1]} : vector<32x128xf32> to vector<32x32xf32>
    %54 = tpu.transpose %52, [1, 0] : vector<32x32xf32> -> vector<32x32xf32>
    %cst_20 = arith.constant dense<0.000000e+00> : vector<32x32xf32>
    %55 = tpu.matmul %51, %54, %cst_20 {dimension_numbers = #tpu.dot_dimension_numbers<[1], [0], [0], [1], [0, 0, 1, 1], [], []>} : vector<32x32xf32>, vector<32x32xf32>, vector<32x32xf32> -> vector<32x32xf32>
    %cst_21 = arith.constant 0.176776692 : f32
    %56 = vector.broadcast %cst_21 : f32 to vector<32x32xf32>
    %57 = arith.mulf %55, %56 : vector<32x32xf32>
    %cst_22 = arith.constant dense<0xFF800000> : vector<32xf32>
    %58 = vector.multi_reduction <maximumf>, %57, %cst_22 [1] : vector<32x32xf32> to vector<32xf32>
    %59 = vector.shape_cast %58 : vector<32xf32> to vector<32x1xf32>
    %60 = vector.broadcast %59 : vector<32x1xf32> to vector<32x32xf32>
    %61 = arith.subf %57, %60 : vector<32x32xf32>
    %62 = math.exp %61 : vector<32x32xf32>
    %cst_23 = arith.constant dense<0.000000e+00> : vector<32xf32>
    %63 = vector.multi_reduction <add>, %62, %cst_23 [1] : vector<32x32xf32> to vector<32xf32>
    %64 = vector.shape_cast %63 : vector<32xf32> to vector<32x1xf32>
    %65 = vector.broadcast %64 : vector<32x1xf32> to vector<32x32xf32>
    %66 = arith.divf %62, %65 : vector<32x32xf32>
    %cst_24 = arith.constant dense<0.000000e+00> : vector<32x32xf32>
    %67 = tpu.matmul %66, %53, %cst_24 {dimension_numbers = #tpu.dot_dimension_numbers<[1], [0], [0], [1], [0, 0, 1, 1], [], []>} : vector<32x32xf32>, vector<32x32xf32>, vector<32x32xf32> -> vector<32x32xf32>
    %68 = vector.extract_strided_slice %31 {offsets = [0, 64], sizes = [32, 32], strides = [1, 1]} : vector<32x128xf32> to vector<32x32xf32>
    %69 = vector.extract_strided_slice %32 {offsets = [0, 64], sizes = [32, 32], strides = [1, 1]} : vector<32x128xf32> to vector<32x32xf32>
    %70 = vector.extract_strided_slice %33 {offsets = [0, 64], sizes = [32, 32], strides = [1, 1]} : vector<32x128xf32> to vector<32x32xf32>
    %71 = tpu.transpose %69, [1, 0] : vector<32x32xf32> -> vector<32x32xf32>
    %cst_25 = arith.constant dense<0.000000e+00> : vector<32x32xf32>
    %72 = tpu.matmul %68, %71, %cst_25 {dimension_numbers = #tpu.dot_dimension_numbers<[1], [0], [0], [1], [0, 0, 1, 1], [], []>} : vector<32x32xf32>, vector<32x32xf32>, vector<32x32xf32> -> vector<32x32xf32>
    %cst_26 = arith.constant 0.176776692 : f32
    %73 = vector.broadcast %cst_26 : f32 to vector<32x32xf32>
    %74 = arith.mulf %72, %73 : vector<32x32xf32>
    %cst_27 = arith.constant dense<0xFF800000> : vector<32xf32>
    %75 = vector.multi_reduction <maximumf>, %74, %cst_27 [1] : vector<32x32xf32> to vector<32xf32>
    %76 = vector.shape_cast %75 : vector<32xf32> to vector<32x1xf32>
    %77 = vector.broadcast %76 : vector<32x1xf32> to vector<32x32xf32>
    %78 = arith.subf %74, %77 : vector<32x32xf32>
    %79 = math.exp %78 : vector<32x32xf32>
    %cst_28 = arith.constant dense<0.000000e+00> : vector<32xf32>
    %80 = vector.multi_reduction <add>, %79, %cst_28 [1] : vector<32x32xf32> to vector<32xf32>
    %81 = vector.shape_cast %80 : vector<32xf32> to vector<32x1xf32>
    %82 = vector.broadcast %81 : vector<32x1xf32> to vector<32x32xf32>
    %83 = arith.divf %79, %82 : vector<32x32xf32>
    %cst_29 = arith.constant dense<0.000000e+00> : vector<32x32xf32>
    %84 = tpu.matmul %83, %70, %cst_29 {dimension_numbers = #tpu.dot_dimension_numbers<[1], [0], [0], [1], [0, 0, 1, 1], [], []>} : vector<32x32xf32>, vector<32x32xf32>, vector<32x32xf32> -> vector<32x32xf32>
    %85 = vector.extract_strided_slice %31 {offsets = [0, 96], sizes = [32, 32], strides = [1, 1]} : vector<32x128xf32> to vector<32x32xf32>
    %86 = vector.extract_strided_slice %32 {offsets = [0, 96], sizes = [32, 32], strides = [1, 1]} : vector<32x128xf32> to vector<32x32xf32>
    %87 = vector.extract_strided_slice %33 {offsets = [0, 96], sizes = [32, 32], strides = [1, 1]} : vector<32x128xf32> to vector<32x32xf32>
    %88 = tpu.transpose %86, [1, 0] : vector<32x32xf32> -> vector<32x32xf32>
    %cst_30 = arith.constant dense<0.000000e+00> : vector<32x32xf32>
    %89 = tpu.matmul %85, %88, %cst_30 {dimension_numbers = #tpu.dot_dimension_numbers<[1], [0], [0], [1], [0, 0, 1, 1], [], []>} : vector<32x32xf32>, vector<32x32xf32>, vector<32x32xf32> -> vector<32x32xf32>
    %cst_31 = arith.constant 0.176776692 : f32
    %90 = vector.broadcast %cst_31 : f32 to vector<32x32xf32>
    %91 = arith.mulf %89, %90 : vector<32x32xf32>
    %cst_32 = arith.constant dense<0xFF800000> : vector<32xf32>
    %92 = vector.multi_reduction <maximumf>, %91, %cst_32 [1] : vector<32x32xf32> to vector<32xf32>
    %93 = vector.shape_cast %92 : vector<32xf32> to vector<32x1xf32>
    %94 = vector.broadcast %93 : vector<32x1xf32> to vector<32x32xf32>
    %95 = arith.subf %91, %94 : vector<32x32xf32>
    %96 = math.exp %95 : vector<32x32xf32>
    %cst_33 = arith.constant dense<0.000000e+00> : vector<32xf32>
    %97 = vector.multi_reduction <add>, %96, %cst_33 [1] : vector<32x32xf32> to vector<32xf32>
    %98 = vector.shape_cast %97 : vector<32xf32> to vector<32x1xf32>
    %99 = vector.broadcast %98 : vector<32x1xf32> to vector<32x32xf32>
    %100 = arith.divf %96, %99 : vector<32x32xf32>
    %cst_34 = arith.constant dense<0.000000e+00> : vector<32x32xf32>
    %101 = tpu.matmul %100, %87, %cst_34 {dimension_numbers = #tpu.dot_dimension_numbers<[1], [0], [0], [1], [0, 0, 1, 1], [], []>} : vector<32x32xf32>, vector<32x32xf32>, vector<32x32xf32> -> vector<32x32xf32>
    %102 = tpu.concatenate %50, %67, %84, %101 in 1 : vector<32x32xf32>, vector<32x32xf32>, vector<32x32xf32>, vector<32x32xf32> -> vector<32x128xf32>
    %c0_35 = arith.constant 0 : index
    %c0_36 = arith.constant 0 : index
    %103 = vector.load %arg6[%c0_35, %c0_36] : memref<128x128xf32, #tpu.memory_space<vmem>>, vector<128x128xf32>
    %cst_37 = arith.constant dense<0.000000e+00> : vector<32x128xf32>
    %104 = tpu.matmul %102, %103, %cst_37 {dimension_numbers = #tpu.dot_dimension_numbers<[1], [0], [0], [1], [0, 0, 1, 1], [], []>} : vector<32x128xf32>, vector<128x128xf32>, vector<32x128xf32> -> vector<32x128xf32>
    %c0_38 = arith.constant 0 : index
    %c0_39 = arith.constant 0 : index
    %105 = vector.load %arg7[%c0_38, %c0_39] : memref<1x128xf32, #tpu.memory_space<vmem>>, vector<1x128xf32>
    %106 = vector.broadcast %105 : vector<1x128xf32> to vector<32x128xf32>
    %107 = arith.addf %104, %106 : vector<32x128xf32>
    %108 = arith.addf %1, %107 : vector<32x128xf32>
    %c0_40 = arith.constant 0 : index
    %c0_41 = arith.constant 0 : index
    %109 = vector.load %arg8[%c0_40, %c0_41] : memref<1x128xf32, #tpu.memory_space<vmem>>, vector<1x128xf32>
    %c0_42 = arith.constant 0 : index
    %c0_43 = arith.constant 0 : index
    %110 = vector.load %arg9[%c0_42, %c0_43] : memref<1x128xf32, #tpu.memory_space<vmem>>, vector<1x128xf32>
    %cst_44 = arith.constant dense<0.000000e+00> : vector<32xf32>
    %111 = vector.multi_reduction <add>, %108, %cst_44 [1] : vector<32x128xf32> to vector<32xf32>
    %112 = vector.shape_cast %111 : vector<32xf32> to vector<32x1xf32>
    %cst_45 = arith.constant 1.280000e+02 : f32
    %113 = vector.broadcast %cst_45 : f32 to vector<32x1xf32>
    %114 = arith.divf %112, %113 : vector<32x1xf32>
    %115 = vector.broadcast %114 : vector<32x1xf32> to vector<32x128xf32>
    %116 = arith.subf %108, %115 : vector<32x128xf32>
    %117 = arith.mulf %116, %116 : vector<32x128xf32>
    %cst_46 = arith.constant dense<0.000000e+00> : vector<32xf32>
    %118 = vector.multi_reduction <add>, %117, %cst_46 [1] : vector<32x128xf32> to vector<32xf32>
    %119 = vector.shape_cast %118 : vector<32xf32> to vector<32x1xf32>
    %cst_47 = arith.constant 1.280000e+02 : f32
    %120 = vector.broadcast %cst_47 : f32 to vector<32x1xf32>
    %121 = arith.divf %119, %120 : vector<32x1xf32>
    %122 = vector.broadcast %114 : vector<32x1xf32> to vector<32x128xf32>
    %123 = arith.subf %108, %122 : vector<32x128xf32>
    %cst_48 = arith.constant 9.99999974E-6 : f32
    %124 = vector.broadcast %cst_48 : f32 to vector<32x1xf32>
    %125 = arith.addf %121, %124 : vector<32x1xf32>
    %126 = math.sqrt %125 : vector<32x1xf32>
    %127 = vector.broadcast %126 : vector<32x1xf32> to vector<32x128xf32>
    %128 = arith.divf %123, %127 : vector<32x128xf32>
    %129 = vector.broadcast %109 : vector<1x128xf32> to vector<32x128xf32>
    %130 = arith.mulf %128, %129 : vector<32x128xf32>
    %131 = vector.broadcast %110 : vector<1x128xf32> to vector<32x128xf32>
    %132 = arith.addf %130, %131 : vector<32x128xf32>
    %c0_49 = arith.constant 0 : index
    %c0_50 = arith.constant 0 : index
    %133 = vector.load %arg10[%c0_49, %c0_50] : memref<128x512xf32, #tpu.memory_space<vmem>>, vector<128x512xf32>
    %cst_51 = arith.constant dense<0.000000e+00> : vector<32x512xf32>
    %134 = tpu.matmul %132, %133, %cst_51 {dimension_numbers = #tpu.dot_dimension_numbers<[1], [0], [0], [1], [0, 0, 1, 1], [], []>} : vector<32x128xf32>, vector<128x512xf32>, vector<32x512xf32> -> vector<32x512xf32>
    %c0_52 = arith.constant 0 : index
    %c0_53 = arith.constant 0 : index
    %135 = vector.load %arg11[%c0_52, %c0_53] : memref<1x512xf32, #tpu.memory_space<vmem>>, vector<1x512xf32>
    %136 = vector.broadcast %135 : vector<1x512xf32> to vector<32x512xf32>
    %137 = arith.addf %134, %136 : vector<32x512xf32>
    %cst_54 = arith.constant 5.000000e-01 : f32
    %138 = vector.broadcast %cst_54 : f32 to vector<32x512xf32>
    %139 = arith.mulf %138, %137 : vector<32x512xf32>
    %cst_55 = arith.constant 0.707106769 : f32
    %140 = vector.broadcast %cst_55 : f32 to vector<32x512xf32>
    %141 = arith.mulf %137, %140 : vector<32x512xf32>
    %cst_56 = arith.constant 0.000000e+00 : f32
    %142 = vector.broadcast %cst_56 : f32 to vector<32x512xf32>
    %143 = arith.cmpf oge, %141, %142 : vector<32x512xf32>
    %cst_57 = arith.constant 1.000000e+00 : f32
    %cst_58 = arith.constant -1.000000e+00 : f32
    %144 = vector.broadcast %cst_57 : f32 to vector<32x512xf32>
    %145 = vector.broadcast %cst_58 : f32 to vector<32x512xf32>
    %146 = arith.select %143, %144, %145 : vector<32x512xi1>, vector<32x512xf32>
    %147 = math.absf %141 : vector<32x512xf32>
    %cst_59 = arith.constant 0.327591091 : f32
    %148 = vector.broadcast %cst_59 : f32 to vector<32x512xf32>
    %149 = arith.mulf %148, %147 : vector<32x512xf32>
    %cst_60 = arith.constant 1.000000e+00 : f32
    %150 = vector.broadcast %cst_60 : f32 to vector<32x512xf32>
    %151 = arith.addf %150, %149 : vector<32x512xf32>
    %cst_61 = arith.constant 1.000000e+00 : f32
    %152 = vector.broadcast %cst_61 : f32 to vector<32x512xf32>
    %153 = arith.divf %152, %151 : vector<32x512xf32>
    %cst_62 = arith.constant 1.06140542 : f32
    %154 = vector.broadcast %cst_62 : f32 to vector<32x512xf32>
    %155 = arith.mulf %154, %153 : vector<32x512xf32>
    %cst_63 = arith.constant -1.45315206 : f32
    %156 = vector.broadcast %cst_63 : f32 to vector<32x512xf32>
    %157 = arith.addf %155, %156 : vector<32x512xf32>
    %158 = arith.mulf %157, %153 : vector<32x512xf32>
    %cst_64 = arith.constant 1.42141378 : f32
    %159 = vector.broadcast %cst_64 : f32 to vector<32x512xf32>
    %160 = arith.addf %158, %159 : vector<32x512xf32>
    %161 = arith.mulf %160, %153 : vector<32x512xf32>
    %cst_65 = arith.constant -0.284496725 : f32
    %162 = vector.broadcast %cst_65 : f32 to vector<32x512xf32>
    %163 = arith.addf %161, %162 : vector<32x512xf32>
    %164 = arith.mulf %163, %153 : vector<32x512xf32>
    %cst_66 = arith.constant 0.254829586 : f32
    %165 = vector.broadcast %cst_66 : f32 to vector<32x512xf32>
    %166 = arith.addf %164, %165 : vector<32x512xf32>
    %167 = arith.mulf %166, %153 : vector<32x512xf32>
    %cst_67 = arith.constant 0.000000e+00 : f32
    %168 = vector.broadcast %cst_67 : f32 to vector<32x512xf32>
    %169 = arith.subf %168, %147 : vector<32x512xf32>
    %170 = arith.mulf %169, %147 : vector<32x512xf32>
    %171 = math.exp %170 : vector<32x512xf32>
    %172 = arith.mulf %167, %171 : vector<32x512xf32>
    %cst_68 = arith.constant 1.000000e+00 : f32
    %173 = vector.broadcast %cst_68 : f32 to vector<32x512xf32>
    %174 = arith.subf %173, %172 : vector<32x512xf32>
    %175 = arith.mulf %146, %174 : vector<32x512xf32>
    %cst_69 = arith.constant 1.000000e+00 : f32
    %176 = vector.broadcast %cst_69 : f32 to vector<32x512xf32>
    %177 = arith.addf %176, %175 : vector<32x512xf32>
    %178 = arith.mulf %139, %177 : vector<32x512xf32>
    %c0_70 = arith.constant 0 : index
    %c0_71 = arith.constant 0 : index
    %179 = vector.load %arg12[%c0_70, %c0_71] : memref<512x128xf32, #tpu.memory_space<vmem>>, vector<512x128xf32>
    %cst_72 = arith.constant dense<0.000000e+00> : vector<32x128xf32>
    %180 = tpu.matmul %178, %179, %cst_72 {dimension_numbers = #tpu.dot_dimension_numbers<[1], [0], [0], [1], [0, 0, 1, 1], [], []>} : vector<32x512xf32>, vector<512x128xf32>, vector<32x128xf32> -> vector<32x128xf32>
    %c0_73 = arith.constant 0 : index
    %c0_74 = arith.constant 0 : index
    %181 = vector.load %arg13[%c0_73, %c0_74] : memref<1x128xf32, #tpu.memory_space<vmem>>, vector<1x128xf32>
    %182 = vector.broadcast %181 : vector<1x128xf32> to vector<32x128xf32>
    %183 = arith.addf %180, %182 : vector<32x128xf32>
    %184 = arith.addf %108, %183 : vector<32x128xf32>
    %c0_75 = arith.constant 0 : index
    %c0_76 = arith.constant 0 : index
    %c0_77 = arith.constant 0 : index
    %185 = vector.load %arg14[%c0_75, %c0_76, %c0_77] : memref<1x32x128xf32, #tpu.memory_space<vmem>>, vector<1x32x128xf32>
    %186 = vector.shape_cast %185 : vector<1x32x128xf32> to vector<32x128xf32>
    %187 = vector.shape_cast %184 : vector<32x128xf32> to vector<1x32x128xf32>
    tpu.vector_store %arg14[%c0_75, %c0_76, %c0_77], %187 {strides = array<i32>} : memref<1x32x128xf32, #tpu.memory_space<vmem>>, vector<1x32x128xf32>,
    return
  }
  func.func @transform_0(%arg0: i32) -> (i32, i32, i32) {
    %c0_i32 = arith.constant 0 : i32
    %c0_i32_0 = arith.constant 0 : i32
    %c0_i32_1 = arith.constant 0 : i32
    return %arg0, %c0_i32, %c0_i32_0 : i32, i32, i32
  }
  func.func @transform_1(%arg0: i32) -> (i32, i32) {
    %c0_i32 = arith.constant 0 : i32
    %c0_i32_0 = arith.constant 0 : i32
    %c0_i32_1 = arith.constant 0 : i32
    return %c0_i32, %c0_i32_0 : i32, i32
  }
  func.func @transform_2(%arg0: i32) -> (i32, i32) {
    %c0_i32 = arith.constant 0 : i32
    %c0_i32_0 = arith.constant 0 : i32
    %c0_i32_1 = arith.constant 0 : i32
    return %c0_i32, %c0_i32_0 : i32, i32
  }
  func.func @transform_3(%arg0: i32) -> (i32, i32) {
    %c0_i32 = arith.constant 0 : i32
    %c0_i32_0 = arith.constant 0 : i32
    %c0_i32_1 = arith.constant 0 : i32
    return %c0_i32, %c0_i32_0 : i32, i32
  }
  func.func @transform_4(%arg0: i32) -> (i32, i32) {
    %c0_i32 = arith.constant 0 : i32
    %c0_i32_0 = arith.constant 0 : i32
    %c0_i32_1 = arith.constant 0 : i32
    return %c0_i32, %c0_i32_0 : i32, i32
  }
  func.func @transform_5(%arg0: i32) -> (i32, i32) {
    %c0_i32 = arith.constant 0 : i32
    %c0_i32_0 = arith.constant 0 : i32
    %c0_i32_1 = arith.constant 0 : i32
    return %c0_i32, %c0_i32_0 : i32, i32
  }
  func.func @transform_6(%arg0: i32) -> (i32, i32) {
    %c0_i32 = arith.constant 0 : i32
    %c0_i32_0 = arith.constant 0 : i32
    %c0_i32_1 = arith.constant 0 : i32
    return %c0_i32, %c0_i32_0 : i32, i32
  }
  func.func @transform_7(%arg0: i32) -> (i32, i32) {
    %c0_i32 = arith.constant 0 : i32
    %c0_i32_0 = arith.constant 0 : i32
    %c0_i32_1 = arith.constant 0 : i32
    return %c0_i32, %c0_i32_0 : i32, i32
  }
  func.func @transform_8(%arg0: i32) -> (i32, i32) {
    %c0_i32 = arith.constant 0 : i32
    %c0_i32_0 = arith.constant 0 : i32
    %c0_i32_1 = arith.constant 0 : i32
    return %c0_i32, %c0_i32_0 : i32, i32
  }
  func.func @transform_9(%arg0: i32) -> (i32, i32) {
    %c0_i32 = arith.constant 0 : i32
    %c0_i32_0 = arith.constant 0 : i32
    %c0_i32_1 = arith.constant 0 : i32
    return %c0_i32, %c0_i32_0 : i32, i32
  }
  func.func @transform_10(%arg0: i32) -> (i32, i32) {
    %c0_i32 = arith.constant 0 : i32
    %c0_i32_0 = arith.constant 0 : i32
    %c0_i32_1 = arith.constant 0 : i32
    return %c0_i32, %c0_i32_0 : i32, i32
  }
  func.func @transform_11(%arg0: i32) -> (i32, i32) {
    %c0_i32 = arith.constant 0 : i32
    %c0_i32_0 = arith.constant 0 : i32
    %c0_i32_1 = arith.constant 0 : i32
    return %c0_i32, %c0_i32_0 : i32, i32
  }
  func.func @transform_12(%arg0: i32) -> (i32, i32) {
    %c0_i32 = arith.constant 0 : i32
    %c0_i32_0 = arith.constant 0 : i32
    %c0_i32_1 = arith.constant 0 : i32
    return %c0_i32, %c0_i32_0 : i32, i32
  }
  func.func @transform_13(%arg0: i32) -> (i32, i32, i32) {
    %c0_i32 = arith.constant 0 : i32
    %c0_i32_0 = arith.constant 0 : i32
    %c0_i32_1 = arith.constant 0 : i32
    return %arg0, %c0_i32, %c0_i32_0 : i32, i32, i32
  }
}

</mosaic_0001>

<llo_original>
// kernel: tpu_custom_call.1
$region0: #{tpu_custom_call.1}
  #allocation0 [shape = 'u32[]', space=smem, size = 0x4, offset = 0x4, fixed_abs, tag = 'smem constant byte address 0x4 - core index']
  #allocation1 [shape = 'u32[144,128]{1,0:T(1,128)}', space=vmem, size = 0x12000, scoped, tag = 'internal scratch']
  %s0 = inlined_call_operand.hbm [shape: f32[2,32,128], index: 0, kind: input, shape index: {}]
  %s1 = inlined_call_operand.hbm [shape: f32[1,128], index: 1, kind: input, shape index: {}]
  %s2 = inlined_call_operand.hbm [shape: f32[1,128], index: 2, kind: input, shape index: {}]
  %s3 = inlined_call_operand.hbm [shape: f32[128,384], index: 3, kind: input, shape index: {}]
  %s4 = inlined_call_operand.vmem [shape: f32[1,384], index: 4, kind: input, shape index: {}]
  %s5 = inlined_call_operand.hbm [shape: f32[128,128], index: 5, kind: input, shape index: {}]
  %s6 = inlined_call_operand.vmem [shape: f32[1,128], index: 6, kind: input, shape index: {}]
  %s7 = inlined_call_operand.vmem [shape: f32[1,128], index: 7, kind: input, shape index: {}]
  %s8 = inlined_call_operand.vmem [shape: f32[1,128], index: 8, kind: input, shape index: {}]
  %s9 = inlined_call_operand.hbm [shape: f32[128,512], index: 9, kind: input, shape index: {}]
  %s10 = inlined_call_operand.vmem [shape: f32[1,512], index: 10, kind: input, shape index: {}]
  %s11 = inlined_call_operand.hbm [shape: f32[512,128], index: 11, kind: input, shape index: {}]
  %s12 = inlined_call_operand.vmem [shape: f32[1,128], index: 12, kind: input, shape index: {}]
  %s13 = inlined_call_operand.hbm [shape: f32[2,32,128], index: 13, kind: output, shape index: {}]
  %s14 = sld [smem:[#allocation0]]
  $region113: #{tpu_custom_call.1} parent=0
    _
  %s16 = ssub.s32 1, %s14
  %s17 = scalar_select 0, %s16, %s14
  $region1: #{tpu_custom_call.1} parent=0
    #allocation2 [shape = 'u8[32768]{0}', space=vmem, size = 0x8000, scoped, tag = 'input window, operand 0']
    #allocation3 [shape = 's32[2]{0}', space=sflag, size = 0x8, scoped, tag = 'scoped memory for tpu_custom_call.1']
    #allocation4 [shape = 's32[2]{0}', space=sflag, size = 0x8, scoped, tag = 'scoped memory for tpu_custom_call.1']
    #allocation5 [shape = 'u8[512]{0}', space=vmem, size = 0x400, scoped, tag = 'input window, operand 1, single buffered']
    #allocation6 [shape = 's32[1]{0}', space=sflag, size = 0x4, scoped, tag = 'scoped memory for tpu_custom_call.1']
    #allocation7 [shape = 'u8[512]{0}', space=vmem, size = 0x400, scoped, tag = 'input window, operand 2, single buffered']
    #allocation8 [shape = 'u8[196608]{0}', space=vmem, size = 0x30000, scoped, tag = 'input window, operand 3, single buffered']
    #allocation9 [shape = 's32[1]{0}', space=sflag, size = 0x4, scoped, tag = 'scoped memory for tpu_custom_call.1']
    #allocation10 [shape = 'u8[65536]{0}', space=vmem, size = 0x10000, scoped, tag = 'input window, operand 5, single buffered']
    #allocation11 [shape = 'u8[262144]{0}', space=vmem, size = 0x40000, scoped, tag = 'input window, operand 9, single buffered']
    #allocation12 [shape = 's32[1]{0}', space=sflag, size = 0x4, scoped, tag = 'scoped memory for tpu_custom_call.1']
    #allocation13 [shape = 'u8[262144]{0}', space=vmem, size = 0x40000, scoped, tag = 'input window, operand 11, single buffered']
    #allocation14 [shape = 'u8[32768]{0}', space=vmem, size = 0x8000, scoped, tag = 'output window, operand 0']
    %18 = vsyncpa [#allocation3], 0
    %s19 = scalar_lea.sflag [#allocation3], 1
    %20 = vsyncpa %s19, 0
    %21 = vsyncpa [#allocation6], 0
    %22 = vsyncpa [#allocation9], 0
    %23 = vsyncpa [#allocation12], 0
    %24 = vsyncpa [#allocation4], 0
    %s25 = scalar_lea.sflag [#allocation4], 1
    %26 = vsyncpa %s25, 0
    loop: start=0, step=1, limit=4
    $region2: #{tpu_custom_call.1} parent=1 // loop_pre_header
      _
    $region3: #{tpu_custom_call.1} parent=1 // loop_header
      %s28 = sphi 0, %s32
      %p29 = scmp.ge.s32.totalorder %s28, 4
      %s38 = sphi 0, %s40
      %s41 = sphi 0, %s38
      %s42 = sphi 0, %s41
      %s58 = sphi 0, %s42
      %s62 = sphi 0, %s62
      %s64 = sphi 0, %s62
      %s65 = sphi 0, %s64
      %s79 = sphi 0, %s65
      %s83 = sphi 0, %s83
      %s85 = sphi 0, %s83
      %s86 = sphi 0, %s85
      %s100 = sphi 0, %s86
      %s104 = sphi 0, %s104
      %s106 = sphi 0, %s104
      %s107 = sphi 0, %s106
      %s121 = sphi 0, %s107
      %s125 = sphi 0, %s125
      %s127 = sphi 0, %s125
      %s128 = sphi 0, %s127
      %s142 = sphi 0, %s128
      %s146 = sphi 0, %s146
      %s148 = sphi 0, %s146
      %s149 = sphi 0, %s148
      %s163 = sphi 0, %s149
      %s167 = sphi 0, %s167
      %s169 = sphi 0, %s167
      %s170 = sphi 0, %s169
      %s184 = sphi 0, %s170
      %s188 = sphi 0, %s188
      %s190 = sphi 0, %s188
      %s191 = sphi 0, %s190
      %s205 = sphi 0, %s191
      %s209 = sphi 0, %s209
      %s211 = sphi 0, %s209
      %s212 = sphi 0, %s211
      %s226 = sphi 0, %s212
      %s230 = sphi 0, %s230
      %s232 = sphi 0, %s230
      %s233 = sphi 0, %s232
      %s247 = sphi 0, %s233
      %s251 = sphi 0, %s251
      %s253 = sphi 0, %s251
      %s254 = sphi 0, %s253
      %s268 = sphi 0, %s254
      %s272 = sphi 0, %s272
      %s274 = sphi 0, %s272
      %s275 = sphi 0, %s274
      %s289 = sphi 0, %s275
      %s293 = sphi 0, %s293
      %s295 = sphi 0, %s293
      %s296 = sphi 0, %s295
      %s310 = sphi 0, %s296
      %s316 = sphi 0, %s318
      %s319 = sphi 0, %s316
      %s320 = sphi 0, %s319
      %s336 = sphi 0, %s320
    $region4: #{tpu_custom_call.1} parent=1 // loop_header_branch
      %31 = sbr.rel (%p29) target = $region8
    $region5: #{tpu_custom_call.1} parent=1 // loop_body
      %s33 = ssub.s32 %s28, 1
      %s34 = ssub.s32 %s28, 2
      %s35 = sadd.s32 %s28, 1
      %s36 = ssub.s32 %s28, %s35
      %p37 = scmp.eq.s32.totalorder %s36, 0
      %s39 = sadd.s32 %s38, 1
      %s40 = scalar_select %p37, %s38, %s39
      %p43 = pneg %p37
      %p44 = scmp.eq.s32.totalorder %s28, 1
      %p45 = por %p43, %p44
      %p46 = scmp.ne.s32.totalorder %s38, %s41
      %p47 = scmp.eq.s32.totalorder %s28, 0
      %p48 = por %p46, %p47
      %p49 = scmp.ne.s32.totalorder %s38, %s41
      %p50 = scmp.eq.s32.totalorder %s33, 1
      %p51 = por %p49, %p50
      %p52 = scmp.ne.s32.totalorder %s41, %s42
      %p53 = scmp.eq.s32.totalorder %s33, 0
      %p54 = por %p52, %p53
      %p55 = scmp.ne.s32.totalorder %s41, %s42
      %p56 = scmp.eq.s32.totalorder %s34, 1
      %p57 = por %p55, %p56
      %p59 = scmp.ne.s32.totalorder %s42, %s58
      %p60 = scmp.eq.s32.totalorder %s34, 0
      %p61 = por %p59, %p60
      %s63 = sadd.s32 %s62, 1
      %p66 = scmp.eq.s32.totalorder %s28, 1
      %p67 = scmp.ne.s32.totalorder %s62, %s64
      %p68 = scmp.eq.s32.totalorder %s28, 0
      %p69 = por %p67, %p68
      %p70 = scmp.ne.s32.totalorder %s62, %s64
      %p71 = scmp.eq.s32.totalorder %s33, 1
      %p72 = por %p70, %p71
      %p73 = scmp.ne.s32.totalorder %s64, %s65
      %p74 = scmp.eq.s32.totalorder %s33, 0
      %p75 = por %p73, %p74
      %p76 = scmp.ne.s32.totalorder %s64, %s65
      %p77 = scmp.eq.s32.totalorder %s34, 1
      %p78 = por %p76, %p77
      %p80 = scmp.ne.s32.totalorder %s65, %s79
      %p81 = scmp.eq.s32.totalorder %s34, 0
      %p82 = por %p80, %p81
      %s84 = sadd.s32 %s83, 1
      %p87 = scmp.eq.s32.totalorder %s28, 1
      %p88 = scmp.ne.s32.totalorder %s83, %s85
      %p89 = scmp.eq.s32.totalorder %s28, 0
      %p90 = por %p88, %p89
      %p91 = scmp.ne.s32.totalorder %s83, %s85
      %p92 = scmp.eq.s32.totalorder %s33, 1
      %p93 = por %p91, %p92
      %p94 = scmp.ne.s32.totalorder %s85, %s86
      %p95 = scmp.eq.s32.totalorder %s33, 0
      %p96 = por %p94, %p95
      %p97 = scmp.ne.s32.totalorder %s85, %s86
      %p98 = scmp.eq.s32.totalorder %s34, 1
      %p99 = por %p97, %p98
      %p101 = scmp.ne.s32.totalorder %s86, %s100
      %p102 = scmp.eq.s32.totalorder %s34, 0
      %p103 = por %p101, %p102
      %s105 = sadd.s32 %s104, 1
      %p108 = scmp.eq.s32.totalorder %s28, 1
      %p109 = scmp.ne.s32.totalorder %s104, %s106
      %p110 = scmp.eq.s32.totalorder %s28, 0
      %p111 = por %p109, %p110
      %p112 = scmp.ne.s32.totalorder %s104, %s106
      %p113 = scmp.eq.s32.totalorder %s33, 1
      %p114 = por %p112, %p113
      %p115 = scmp.ne.s32.totalorder %s106, %s107
      %p116 = scmp.eq.s32.totalorder %s33, 0
      %p117 = por %p115, %p116
      %p118 = scmp.ne.s32.totalorder %s106, %s107
      %p119 = scmp.eq.s32.totalorder %s34, 1
      %p120 = por %p118, %p119
      %p122 = scmp.ne.s32.totalorder %s107, %s121
      %p123 = scmp.eq.s32.totalorder %s34, 0
      %p124 = por %p122, %p123
      %s126 = sadd.s32 %s125, 1
      %p129 = scmp.eq.s32.totalorder %s28, 1
      %p130 = scmp.ne.s32.totalorder %s125, %s127
      %p131 = scmp.eq.s32.totalorder %s28, 0
      %p132 = por %p130, %p131
      %p133 = scmp.ne.s32.totalorder %s125, %s127
      %p134 = scmp.eq.s32.totalorder %s33, 1
      %p135 = por %p133, %p134
      %p136 = scmp.ne.s32.totalorder %s127, %s128
      %p137 = scmp.eq.s32.totalorder %s33, 0
      %p138 = por %p136, %p137
      %p139 = scmp.ne.s32.totalorder %s127, %s128
      %p140 = scmp.eq.s32.totalorder %s34, 1
      %p141 = por %p139, %p140
      %p143 = scmp.ne.s32.totalorder %s128, %s142
      %p144 = scmp.eq.s32.totalorder %s34, 0
      %p145 = por %p143, %p144
      %s147 = sadd.s32 %s146, 1
      %p150 = scmp.eq.s32.totalorder %s28, 1
      %p151 = scmp.ne.s32.totalorder %s146, %s148
      %p152 = scmp.eq.s32.totalorder %s28, 0
      %p153 = por %p151, %p152
      %p154 = scmp.ne.s32.totalorder %s146, %s148
      %p155 = scmp.eq.s32.totalorder %s33, 1
      %p156 = por %p154, %p155
      %p157 = scmp.ne.s32.totalorder %s148, %s149
      %p158 = scmp.eq.s32.totalorder %s33, 0
      %p159 = por %p157, %p158
      %p160 = scmp.ne.s32.totalorder %s148, %s149
      %p161 = scmp.eq.s32.totalorder %s34, 1
      %p162 = por %p160, %p161
      %p164 = scmp.ne.s32.totalorder %s149, %s163
      %p165 = scmp.eq.s32.totalorder %s34, 0
      %p166 = por %p164, %p165
      %s168 = sadd.s32 %s167, 1
      %p171 = scmp.eq.s32.totalorder %s28, 1
      %p172 = scmp.ne.s32.totalorder %s167, %s169
      %p173 = scmp.eq.s32.totalorder %s28, 0
      %p174 = por %p172, %p173
      %p175 = scmp.ne.s32.totalorder %s167, %s169
      %p176 = scmp.eq.s32.totalorder %s33, 1
      %p177 = por %p175, %p176
      %p178 = scmp.ne.s32.totalorder %s169, %s170
      %p179 = scmp.eq.s32.totalorder %s33, 0
      %p180 = por %p178, %p179
      %p181 = scmp.ne.s32.totalorder %s169, %s170
      %p182 = scmp.eq.s32.totalorder %s34, 1
      %p183 = por %p181, %p182
      %p185 = scmp.ne.s32.totalorder %s170, %s184
      %p186 = scmp.eq.s32.totalorder %s34, 0
      %p187 = por %p185, %p186
      %s189 = sadd.s32 %s188, 1
      %p192 = scmp.eq.s32.totalorder %s28, 1
      %p193 = scmp.ne.s32.totalorder %s188, %s190
      %p194 = scmp.eq.s32.totalorder %s28, 0
      %p195 = por %p193, %p194
      %p196 = scmp.ne.s32.totalorder %s188, %s190
      %p197 = scmp.eq.s32.totalorder %s33, 1
      %p198 = por %p196, %p197
      %p199 = scmp.ne.s32.totalorder %s190, %s191
      %p200 = scmp.eq.s32.totalorder %s33, 0
      %p201 = por %p199, %p200
      %p202 = scmp.ne.s32.totalorder %s190, %s191
      %p203 = scmp.eq.s32.totalorder %s34, 1
      %p204 = por %p202, %p203
      %p206 = scmp.ne.s32.totalorder %s191, %s205
      %p207 = scmp.eq.s32.totalorder %s34, 0
      %p208 = por %p206, %p207
      %s210 = sadd.s32 %s209, 1
      %p213 = scmp.eq.s32.totalorder %s28, 1
      %p214 = scmp.ne.s32.totalorder %s209, %s211
      %p215 = scmp.eq.s32.totalorder %s28, 0
      %p216 = por %p214, %p215
      %p217 = scmp.ne.s32.totalorder %s209, %s211
      %p218 = scmp.eq.s32.totalorder %s33, 1
      %p219 = por %p217, %p218
      %p220 = scmp.ne.s32.totalorder %s211, %s212
      %p221 = scmp.eq.s32.totalorder %s33, 0
      %p222 = por %p220, %p221
      %p223 = scmp.ne.s32.totalorder %s211, %s212
      %p224 = scmp.eq.s32.totalorder %s34, 1
      %p225 = por %p223, %p224
      %p227 = scmp.ne.s32.totalorder %s212, %s226
      %p228 = scmp.eq.s32.totalorder %s34, 0
      %p229 = por %p227, %p228
      %s231 = sadd.s32 %s230, 1
      %p234 = scmp.eq.s32.totalorder %s28, 1
      %p235 = scmp.ne.s32.totalorder %s230, %s232
      %p236 = scmp.eq.s32.totalorder %s28, 0
      %p237 = por %p235, %p236
      %p238 = scmp.ne.s32.totalorder %s230, %s232
      %p239 = scmp.eq.s32.totalorder %s33, 1
      %p240 = por %p238, %p239
      %p241 = scmp.ne.s32.totalorder %s232, %s233
      %p242 = scmp.eq.s32.totalorder %s33, 0
      %p243 = por %p241, %p242
      %p244 = scmp.ne.s32.totalorder %s232, %s233
      %p245 = scmp.eq.s32.totalorder %s34, 1
      %p246 = por %p244, %p245
      %p248 = scmp.ne.s32.totalorder %s233, %s247
      %p249 = scmp.eq.s32.totalorder %s34, 0
      %p250 = por %p248, %p249
      %s252 = sadd.s32 %s251, 1
      %p255 = scmp.eq.s32.totalorder %s28, 1
      %p256 = scmp.ne.s32.totalorder %s251, %s253
      %p257 = scmp.eq.s32.totalorder %s28, 0
      %p258 = por %p256, %p257
      %p259 = scmp.ne.s32.totalorder %s251, %s253
      %p260 = scmp.eq.s32.totalorder %s33, 1
      %p261 = por %p259, %p260
      %p262 = scmp.ne.s32.totalorder %s253, %s254
      %p263 = scmp.eq.s32.totalorder %s33, 0
      %p264 = por %p262, %p263
      %p265 = scmp.ne.s32.totalorder %s253, %s254
      %p266 = scmp.eq.s32.totalorder %s34, 1
      %p267 = por %p265, %p266
      %p269 = scmp.ne.s32.totalorder %s254, %s268
      %p270 = scmp.eq.s32.totalorder %s34, 0
      %p271 = por %p269, %p270
      %s273 = sadd.s32 %s272, 1
      %p276 = scmp.eq.s32.totalorder %s28, 1
      %p277 = scmp.ne.s32.totalorder %s272, %s274
      %p278 = scmp.eq.s32.totalorder %s28, 0
      %p279 = por %p277, %p278
      %p280 = scmp.ne.s32.totalorder %s272, %s274
      %p281 = scmp.eq.s32.totalorder %s33, 1
      %p282 = por %p280, %p281
      %p283 = scmp.ne.s32.totalorder %s274, %s275
      %p284 = scmp.eq.s32.totalorder %s33, 0
      %p285 = por %p283, %p284
      %p286 = scmp.ne.s32.totalorder %s274, %s275
      %p287 = scmp.eq.s32.totalorder %s34, 1
      %p288 = por %p286, %p287
      %p290 = scmp.ne.s32.totalorder %s275, %s289
      %p291 = scmp.eq.s32.totalorder %s34, 0
      %p292 = por %p290, %p291
      %s294 = sadd.s32 %s293, 1
      %p297 = scmp.eq.s32.totalorder %s28, 1
      %p298 = scmp.ne.s32.totalorder %s293, %s295
      %p299 = scmp.eq.s32.totalorder %s28, 0
      %p300 = por %p298, %p299
      %p301 = scmp.ne.s32.totalorder %s293, %s295
      %p302 = scmp.eq.s32.totalorder %s33, 1
      %p303 = por %p301, %p302
      %p304 = scmp.ne.s32.totalorder %s295, %s296
      %p305 = scmp.eq.s32.totalorder %s33, 0
      %p306 = por %p304, %p305
      %p307 = scmp.ne.s32.totalorder %s295, %s296
      %p308 = scmp.eq.s32.totalorder %s34, 1
      %p309 = por %p307, %p308
      %p311 = scmp.ne.s32.totalorder %s296, %s310
      %p312 = scmp.eq.s32.totalorder %s34, 0
      %p313 = por %p311, %p312
      %s314 = ssub.s32 %s28, %s35
      %p315 = scmp.eq.s32.totalorder %s314, 0
      %s317 = sadd.s32 %s316, 1
      %s318 = scalar_select %p315, %s316, %s317
      %p321 = pneg %p315
      %p322 = scmp.eq.s32.totalorder %s28, 1
      %p323 = por %p321, %p322
      %p324 = scmp.ne.s32.totalorder %s316, %s319
      %p325 = scmp.eq.s32.totalorder %s28, 0
      %p326 = por %p324, %p325
      %p327 = scmp.ne.s32.totalorder %s316, %s319
      %p328 = scmp.eq.s32.totalorder %s33, 1
      %p329 = por %p327, %p328
      %p330 = scmp.ne.s32.totalorder %s319, %s320
      %p331 = scmp.eq.s32.totalorder %s33, 0
      %p332 = por %p330, %p331
      %p333 = scmp.ne.s32.totalorder %s319, %s320
      %p334 = scmp.eq.s32.totalorder %s34, 1
      %p335 = por %p333, %p334
      %p337 = scmp.ne.s32.totalorder %s320, %s336
      %p338 = scmp.eq.s32.totalorder %s34, 0
      %p339 = por %p337, %p338
      %p340 = scmp.le.s32.totalorder 1, %s28
      %p341 = scmp.lt.s32.totalorder %s28, 3
      %p342 = pnand %p340, %p341
      %p343 = pneg %p342
      // Predicated region
      $region9: #{tpu_custom_call.1} parent=5 // pred_check
        _
      $region10: #{tpu_custom_call.1} parent=5 // pred_check_branch
        %345 = sbr.rel (%p342) target = $region12
      $region11: #{tpu_custom_call.1} parent=5 // pred_region
        %s346 = ssub.s32 %s28, 1
        // Predicated region
        $region13: #{tpu_custom_call.1} parent=11 // pred_check
          %p347 = pneg %p75
        $region14: #{tpu_custom_call.1} parent=11 // pred_check_branch
          %349 = sbr.rel (%p347) target = $region16
        $region15: #{tpu_custom_call.1} parent=11 // pred_region
          %s351 = ssub.s32 16, 16
          %352 = vsyncadd [#allocation6], %s351
          %s354 = sshll.u32 [#allocation5], 4
          %s355 = int_to_ptr.vmem [resolvable:$true] %s354
          %357 = dma.hbm_to_vmem [thread:$0]  %s1, 16, %s355, [#allocation6]
        $region16: #{tpu_custom_call.1} parent=11 // pred_fallthru
          _
        // Predicated region
        $region17: #{tpu_custom_call.1} parent=11 // pred_check
          %p358 = pneg %p96
        $region18: #{tpu_custom_call.1} parent=11 // pred_check_branch
          %360 = sbr.rel (%p358) target = $region20
        $region19: #{tpu_custom_call.1} parent=11 // pred_region
          %s362 = ssub.s32 16, 16
          %363 = vsyncadd [#allocation6], %s362
          %s365 = sshll.u32 [#allocation7], 4
          %s366 = int_to_ptr.vmem [resolvable:$true] %s365
          %368 = dma.hbm_to_vmem [thread:$0]  %s2, 16, %s366, [#allocation6]
        $region20: #{tpu_custom_call.1} parent=11 // pred_fallthru
          _
        // Predicated region
        $region21: #{tpu_custom_call.1} parent=11 // pred_check
          %p369 = pneg %p117
        $region22: #{tpu_custom_call.1} parent=11 // pred_check_branch
          %371 = sbr.rel (%p369) target = $region24
        $region23: #{tpu_custom_call.1} parent=11 // pred_region
          %s373 = ssub.s32 6144, 6144
          %374 = vsyncadd [#allocation9], %s373
          %s375 = sshll.u32 [#allocation8], 4
          %s376 = int_to_ptr.vmem [resolvable:$true] %s375
          %381 = dma.hbm_to_vmem [thread:$0]  %s3, 6144, %s376, [#allocation9], 384, 384, 24
        $region24: #{tpu_custom_call.1} parent=11 // pred_fallthru
          _
        // Predicated region
        $region25: #{tpu_custom_call.1} parent=11 // pred_check
          %p382 = pneg %p138
        $region26: #{tpu_custom_call.1} parent=11 // pred_check_branch
          %384 = sbr.rel (%p382) target = $region28
        $region27: #{tpu_custom_call.1} parent=11 // pred_region
          _
        $region28: #{tpu_custom_call.1} parent=11 // pred_fallthru
          _
        // Predicated region
        $region29: #{tpu_custom_call.1} parent=11 // pred_check
          %p385 = pneg %p159
        $region30: #{tpu_custom_call.1} parent=11 // pred_check_branch
          %387 = sbr.rel (%p385) target = $region32
        $region31: #{tpu_custom_call.1} parent=11 // pred_region
          %s389 = ssub.s32 2048, 2048
          %390 = vsyncadd [#allocation9], %s389
          %s391 = sshll.u32 [#allocation10], 4
          %s392 = int_to_ptr.vmem [resolvable:$true] %s391
          %397 = dma.hbm_to_vmem [thread:$0]  %s5, 2048, %s392, [#allocation9], 128, 128, 8
        $region32: #{tpu_custom_call.1} parent=11 // pred_fallthru
          _
        // Predicated region
        $region33: #{tpu_custom_call.1} parent=11 // pred_check
          %p398 = pneg %p180
        $region34: #{tpu_custom_call.1} parent=11 // pred_check_branch
          %400 = sbr.rel (%p398) target = $region36
        $region35: #{tpu_custom_call.1} parent=11 // pred_region
          _
        $region36: #{tpu_custom_call.1} parent=11 // pred_fallthru
          _
        // Predicated region
        $region37: #{tpu_custom_call.1} parent=11 // pred_check
          %p401 = pneg %p201
        $region38: #{tpu_custom_call.1} parent=11 // pred_check_branch
          %403 = sbr.rel (%p401) target = $region40
        $region39: #{tpu_custom_call.1} parent=11 // pred_region
          _
        $region40: #{tpu_custom_call.1} parent=11 // pred_fallthru
          _
        // Predicated region
        $region41: #{tpu_custom_call.1} parent=11 // pred_check
          %p404 = pneg %p222
        $region42: #{tpu_custom_call.1} parent=11 // pred_check_branch
          %406 = sbr.rel (%p404) target = $region44
        $region43: #{tpu_custom_call.1} parent=11 // pred_region
          _
        $region44: #{tpu_custom_call.1} parent=11 // pred_fallthru
          _
        // Predicated region
        $region45: #{tpu_custom_call.1} parent=11 // pred_check
          %p407 = pneg %p243
        $region46: #{tpu_custom_call.1} parent=11 // pred_check_branch
          %409 = sbr.rel (%p407) target = $region48
        $region47: #{tpu_custom_call.1} parent=11 // pred_region
          %s411 = ssub.s32 8192, 8192
          %412 = vsyncadd [#allocation12], %s411
          %s413 = sshll.u32 [#allocation11], 4
          %s414 = int_to_ptr.vmem [resolvable:$true] %s413
          %419 = dma.hbm_to_vmem [thread:$0]  %s9, 8192, %s414, [#allocation12], 512, 512, 32
        $region48: #{tpu_custom_call.1} parent=11 // pred_fallthru
          _
        // Predicated region
        $region49: #{tpu_custom_call.1} parent=11 // pred_check
          %p420 = pneg %p264
        $region50: #{tpu_custom_call.1} parent=11 // pred_check_branch
          %422 = sbr.rel (%p420) target = $region52
        $region51: #{tpu_custom_call.1} parent=11 // pred_region
          _
        $region52: #{tpu_custom_call.1} parent=11 // pred_fallthru
          _
        // Predicated region
        $region53: #{tpu_custom_call.1} parent=11 // pred_check
          %p423 = pneg %p285
        $region54: #{tpu_custom_call.1} parent=11 // pred_check_branch
          %425 = sbr.rel (%p423) target = $region56
        $region55: #{tpu_custom_call.1} parent=11 // pred_region
          %s427 = ssub.s32 8192, 8192
          %428 = vsyncadd [#allocation12], %s427
          %s429 = sshll.u32 [#allocation13], 4
          %s430 = int_to_ptr.vmem [resolvable:$true] %s429
          %435 = dma.hbm_to_vmem [thread:$0]  %s11, 8192, %s430, [#allocation12], 128, 128, 8
        $region56: #{tpu_custom_call.1} parent=11 // pred_fallthru
          _
        // Predicated region
        $region57: #{tpu_custom_call.1} parent=11 // pred_check
          %p436 = pneg %p306
        $region58: #{tpu_custom_call.1} parent=11 // pred_check_branch
          %438 = sbr.rel (%p436) target = $region60
        $region59: #{tpu_custom_call.1} parent=11 // pred_region
          _
        $region60: #{tpu_custom_call.1} parent=11 // pred_fallthru
          _
      $region12: #{tpu_custom_call.1} parent=5 // pred_fallthru
        _
      %p439 = scmp.lt.s32.totalorder %s28, 2
      // Predicated region
      $region61: #{tpu_custom_call.1} parent=5 // pred_check
        %p440 = pneg %p439
      $region62: #{tpu_custom_call.1} parent=5 // pred_check_branch
        %442 = sbr.rel (%p440) target = $region64
      $region63: #{tpu_custom_call.1} parent=5 // pred_region
        // Predicated region
        $region65: #{tpu_custom_call.1} parent=63 // pred_check
          %p443 = pneg %p48
        $region66: #{tpu_custom_call.1} parent=63 // pred_check_branch
          %445 = sbr.rel (%p443) target = $region68
        $region67: #{tpu_custom_call.1} parent=63 // pred_region
          %s446 = sand.u32 %s38, 1
          %s447 = scalar_lea.sflag [#allocation3], %s446
          %s448 = sand.u32 %s38, 1
          %s449 = smul.addr %s448, 32
          %s450 = scalar_lea.vmem [#allocation2], %s449
          %s452 = ssub.s32 512, 512
          %453 = vsyncadd %s447, %s452
          %s454 = smul.addr %s28, 4
          %s455 = smul.addr %s454, 128
          %s456 = scalar_lea.hbm %s0, %s455
          %s457 = sshll.u32 %s450, 4
          %s458 = int_to_ptr.vmem [resolvable:$true] %s457
          %463 = dma.hbm_to_vmem [thread:$0]  %s456, 512, %s458, %s447, 128, 128, 8
        $region68: #{tpu_custom_call.1} parent=63 // pred_fallthru
          _
      $region64: #{tpu_custom_call.1} parent=5 // pred_fallthru
        _
      %p464 = scmp.le.s32.totalorder 1, %s28
      %p465 = scmp.lt.s32.totalorder %s28, 3
      %p466 = pnand %p464, %p465
      %p467 = pneg %p466
      // Predicated region
      $region69: #{tpu_custom_call.1} parent=5 // pred_check
        _
      $region70: #{tpu_custom_call.1} parent=5 // pred_check_branch
        %469 = sbr.rel (%p466) target = $region72
      $region71: #{tpu_custom_call.1} parent=5 // pred_region
        %s470 = ssub.s32 %s28, 1
        %s471 = sand.u32 %s41, 1
        %s472 = scalar_lea.sflag [#allocation3], %s471
        %s473 = sand.u32 %s41, 1
        %s474 = smul.addr %s473, 32
        %s475 = scalar_lea.vmem [#allocation2], %s474
        // Predicated region
        $region73: #{tpu_custom_call.1} parent=71 // pred_check
          %p476 = pneg %p54
        $region74: #{tpu_custom_call.1} parent=71 // pred_check_branch
          %478 = sbr.rel (%p476) target = $region76
        $region75: #{tpu_custom_call.1} parent=71 // pred_region
          %479 = dma.done %s472, 512
        $region76: #{tpu_custom_call.1} parent=71 // pred_fallthru
          _
        // Predicated region
        $region77: #{tpu_custom_call.1} parent=71 // pred_check
          %p480 = pneg %p75
        $region78: #{tpu_custom_call.1} parent=71 // pred_check_branch
          %482 = sbr.rel (%p480) target = $region80
        $region79: #{tpu_custom_call.1} parent=71 // pred_region
          %483 = dma.done [#allocation6], 16
        $region80: #{tpu_custom_call.1} parent=71 // pred_fallthru
          _
        // Predicated region
        $region81: #{tpu_custom_call.1} parent=71 // pred_check
          %p484 = pneg %p96
        $region82: #{tpu_custom_call.1} parent=71 // pred_check_branch
          %486 = sbr.rel (%p484) target = $region84
        $region83: #{tpu_custom_call.1} parent=71 // pred_region
          %487 = dma.done [#allocation6], 16
        $region84: #{tpu_custom_call.1} parent=71 // pred_fallthru
          _
        // Predicated region
        $region85: #{tpu_custom_call.1} parent=71 // pred_check
          %p488 = pneg %p117
        $region86: #{tpu_custom_call.1} parent=71 // pred_check_branch
          %490 = sbr.rel (%p488) target = $region88
        $region87: #{tpu_custom_call.1} parent=71 // pred_region
          %491 = dma.done [#allocation9], 6144
        $region88: #{tpu_custom_call.1} parent=71 // pred_fallthru
          _
        // Predicated region
        $region89: #{tpu_custom_call.1} parent=71 // pred_check
          %p492 = pneg %p159
        $region90: #{tpu_custom_call.1} parent=71 // pred_check_branch
          %494 = sbr.rel (%p492) target = $region92
        $region91: #{tpu_custom_call.1} parent=71 // pred_region
          %495 = dma.done [#allocation9], 2048
        $region92: #{tpu_custom_call.1} parent=71 // pred_fallthru
          _
        // Predicated region
        $region93: #{tpu_custom_call.1} parent=71 // pred_check
          %p496 = pneg %p243
        $region94: #{tpu_custom_call.1} parent=71 // pred_check_branch
          %498 = sbr.rel (%p496) target = $region96
        $region95: #{tpu_custom_call.1} parent=71 // pred_region
          %499 = dma.done [#allocation12], 8192
        $region96: #{tpu_custom_call.1} parent=71 // pred_fallthru
          _
        // Predicated region
        $region97: #{tpu_custom_call.1} parent=71 // pred_check
          %p500 = pneg %p285
        $region98: #{tpu_custom_call.1} parent=71 // pred_check_branch
          %502 = sbr.rel (%p500) target = $region100
        $region99: #{tpu_custom_call.1} parent=71 // pred_region
          %503 = dma.done [#allocation12], 8192
        $region100: #{tpu_custom_call.1} parent=71 // pred_fallthru
          _
        %s504 = sand.u32 %s41, 1
        %s505 = scalar_lea.sflag [#allocation3], %s504
        %s506 = sand.u32 %s41, 1
        %s507 = smul.addr %s506, 32
        %s508 = scalar_lea.vmem [#allocation2], %s507
        %p509 = pneg %p54
        %p510 = pneg %p51
        %p511 = pneg %p75
        %p512 = pneg %p72
        %p513 = pneg %p96
        %p514 = pneg %p93
        %p515 = pneg %p117
        %p516 = pneg %p114
        %p517 = pneg %p138
        %p518 = pneg %p135
        %p519 = pneg %p159
        %p520 = pneg %p156
        %p521 = pneg %p180
        %p522 = pneg %p177
        %p523 = pneg %p201
        %p524 = pneg %p198
        %p525 = pneg %p222
        %p526 = pneg %p219
        %p527 = pneg %p243
        %p528 = pneg %p240
        %p529 = pneg %p264
        %p530 = pneg %p261
        %p531 = pneg %p285
        %p532 = pneg %p282
        %p533 = pneg %p306
        %p534 = pneg %p303
        %p535 = pneg %p332
        %p536 = pneg %p329
        %s537 = sand.u32 %s319, 1
        %s538 = scalar_lea.sflag [#allocation4], %s537
        %s539 = sand.u32 %s319, 1
        %s540 = smul.addr %s539, 32
        %s541 = scalar_lea.vmem [#allocation14], %s540
        %v542 = vld [vmem:[%s475] sm:$0xff]
        %v543 = vld [vmem:[%s475 + $0x8] sm:$0xff]
        %v544 = vld [vmem:[%s475 + $0x10] sm:$0xff]
        %v545 = vld [vmem:[%s475 + $0x18] sm:$0xff]
        %v546 = vld [vmem:[#allocation5] sm:$0x1]
        %v547 = vld [vmem:[#allocation7] sm:$0x1]
        %548 = vadd.xlane.f32.xlu0 %v542
        %v549 = vpop.xlane.xlu0 %548
        %550 = vadd.xlane.f32.xlu0 %v543
        %v551 = vpop.xlane.xlu0 %550
        %552 = vadd.xlane.f32.xlu0 %v544
        %v553 = vpop.xlane.xlu0 %552
        %554 = vadd.xlane.f32.xlu0 %v545
        %v555 = vpop.xlane.xlu0 %554
        %v556 = vrcp.pop 128.0
        %v557 = vmul.f32 %v549, %v556
        %v558 = vmul.f32 %v551, %v556
        %v559 = vmul.f32 %v553, %v556
        %v560 = vmul.f32 %v555, %v556
        %v561 = vsub.f32 %v542, %v557
        %v562 = vsub.f32 %v543, %v558
        %v563 = vsub.f32 %v544, %v559
        %v564 = vsub.f32 %v545, %v560
        %v565 = vmul.f32 %v561, %v561
        %v566 = vmul.f32 %v562, %v562
        %v567 = vmul.f32 %v563, %v563
        %v568 = vmul.f32 %v564, %v564
        %569 = vadd.xlane.f32.xlu0 %v565
        %v570 = vpop.xlane.xlu0 %569
        %571 = vadd.xlane.f32.xlu0 %v566
        %v572 = vpop.xlane.xlu0 %571
        %573 = vadd.xlane.f32.xlu0 %v567
        %v574 = vpop.xlane.xlu0 %573
        %575 = vadd.xlane.f32.xlu0 %v568
        %v576 = vpop.xlane.xlu0 %575
        %v577 = vmul.f32 %v570, %v556
        %v578 = vmul.f32 %v572, %v556
        %v579 = vmul.f32 %v574, %v556
        %v580 = vmul.f32 %v576, %v556
        %v581 = vadd.f32 %v577, 1e-05
        %v582 = vadd.f32 %v578, 1e-05
        %v583 = vadd.f32 %v579, 1e-05
        %v584 = vadd.f32 %v580, 1e-05
        %v585 = vrsqrt.pop %v581
        %v586 = vmul.f32 %v581, %v585
        %vm587 = vcmp.eq.f32.partialorder %v581, inf
        %v588 = vsel %vm587, %v581, %v586
        %vm589 = vcmp.eq.f32.partialorder %v581, 0.0
        %v590 = vand.u32 %v581, 2147483648
        %v591 = vsel %vm589, %v590, %v588
        %v592 = vrsqrt.pop %v582
        %v593 = vmul.f32 %v582, %v592
        %vm594 = vcmp.eq.f32.partialorder %v582, inf
        %v595 = vsel %vm594, %v582, %v593
        %vm596 = vcmp.eq.f32.partialorder %v582, 0.0
        %v597 = vand.u32 %v582, 2147483648
        %v598 = vsel %vm596, %v597, %v595
        %v599 = vrsqrt.pop %v583
        %v600 = vmul.f32 %v583, %v599
        %vm601 = vcmp.eq.f32.partialorder %v583, inf
        %v602 = vsel %vm601, %v583, %v600
        %vm603 = vcmp.eq.f32.partialorder %v583, 0.0
        %v604 = vand.u32 %v583, 2147483648
        %v605 = vsel %vm603, %v604, %v602
        %v606 = vrsqrt.pop %v584
        %v607 = vmul.f32 %v584, %v606
        %vm608 = vcmp.eq.f32.partialorder %v584, inf
        %v609 = vsel %vm608, %v584, %v607
        %vm610 = vcmp.eq.f32.partialorder %v584, 0.0
        %v611 = vand.u32 %v584, 2147483648
        %v612 = vsel %vm610, %v611, %v609
        %v613 = vrcp.pop %v591
        %v614 = vmul.f32 %v561, %v613
        %v615 = vrcp.pop %v598
        %v616 = vmul.f32 %v562, %v615
        %v617 = vrcp.pop %v605
        %v618 = vmul.f32 %v563, %v617
        %v619 = vrcp.pop %v612
        %v620 = vmul.f32 %v564, %v619
        %v622 = vlaneseq
        %v623 = vshrl.u32 %v622, 7
        %v624 = vsub.s32 0, %v623
        %v625 = vrot.slane %v546, %v624
        %v627 = vmul.f32 %v614, %v625
        %v628 = vmul.f32 %v616, %v625
        %v629 = vmul.f32 %v618, %v625
        %v630 = vmul.f32 %v620, %v625
        %v632 = vlaneseq
        %v633 = vshrl.u32 %v632, 7
        %v634 = vsub.s32 0, %v633
        %v635 = vrot.slane %v547, %v634
        %v637 = vadd.f32 %v627, %v635
        %v638 = vadd.f32 %v628, %v635
        %v639 = vadd.f32 %v629, %v635
        %v640 = vadd.f32 %v630, %v635
        %v641 = vld [vmem:[#allocation8] sm:$0xff]
        %v642 = vld [vmem:[#allocation8 + $0x8] sm:$0xff]
        %v643 = vld [vmem:[#allocation8 + $0x10] sm:$0xff]
        %v644 = vld [vmem:[#allocation8 + $0x18] sm:$0xff]
        %v645 = vld [vmem:[#allocation8 + $0x20] sm:$0xff]
        %v646 = vld [vmem:[#allocation8 + $0x28] sm:$0xff]
        %v647 = vld [vmem:[#allocation8 + $0x30] sm:$0xff]
        %v648 = vld [vmem:[#allocation8 + $0x38] sm:$0xff]
        %v649 = vld [vmem:[#allocation8 + $0x40] sm:$0xff]
        %v650 = vld [vmem:[#allocation8 + $0x48] sm:$0xff]
        %v651 = vld [vmem:[#allocation8 + $0x50] sm:$0xff]
        %v652 = vld [vmem:[#allocation8 + $0x58] sm:$0xff]
        %v653 = vld [vmem:[#allocation8 + $0x60] sm:$0xff]
        %v654 = vld [vmem:[#allocation8 + $0x68] sm:$0xff]
        %v655 = vld [vmem:[#allocation8 + $0x70] sm:$0xff]
        %v656 = vld [vmem:[#allocation8 + $0x78] sm:$0xff]
        %v657 = vld [vmem:[#allocation8 + $0x80] sm:$0xff]
        %v658 = vld [vmem:[#allocation8 + $0x88] sm:$0xff]
        %v659 = vld [vmem:[#allocation8 + $0x90] sm:$0xff]
        %v660 = vld [vmem:[#allocation8 + $0x98] sm:$0xff]
        %v661 = vld [vmem:[#allocation8 + $0xa0] sm:$0xff]
        %v662 = vld [vmem:[#allocation8 + $0xa8] sm:$0xff]
        %v663 = vld [vmem:[#allocation8 + $0xb0] sm:$0xff]
        %v664 = vld [vmem:[#allocation8 + $0xb8] sm:$0xff]
        %v665 = vld [vmem:[#allocation8 + $0xc0] sm:$0xff]
        %v666 = vld [vmem:[#allocation8 + $0xc8] sm:$0xff]
        %v667 = vld [vmem:[#allocation8 + $0xd0] sm:$0xff]
        %v668 = vld [vmem:[#allocation8 + $0xd8] sm:$0xff]
        %v669 = vld [vmem:[#allocation8 + $0xe0] sm:$0xff]
        %v670 = vld [vmem:[#allocation8 + $0xe8] sm:$0xff]
        %v671 = vld [vmem:[#allocation8 + $0xf0] sm:$0xff]
        %v672 = vld [vmem:[#allocation8 + $0xf8] sm:$0xff]
        %v673 = vld [vmem:[#allocation8 + $0x100] sm:$0xff]
        %v674 = vld [vmem:[#allocation8 + $0x108] sm:$0xff]
        %v675 = vld [vmem:[#allocation8 + $0x110] sm:$0xff]
        %v676 = vld [vmem:[#allocation8 + $0x118] sm:$0xff]
        %v677 = vld [vmem:[#allocation8 + $0x120] sm:$0xff]
        %v678 = vld [vmem:[#allocation8 + $0x128] sm:$0xff]
        %v679 = vld [vmem:[#allocation8 + $0x130] sm:$0xff]
        %v680 = vld [vmem:[#allocation8 + $0x138] sm:$0xff]
        %v681 = vld [vmem:[#allocation8 + $0x140] sm:$0xff]
        %v682 = vld [vmem:[#allocation8 + $0x148] sm:$0xff]
        %v683 = vld [vmem:[#allocation8 + $0x150] sm:$0xff]
        %v684 = vld [vmem:[#allocation8 + $0x158] sm:$0xff]
        %v685 = vld [vmem:[#allocation8 + $0x160] sm:$0xff]
        %v686 = vld [vmem:[#allocation8 + $0x168] sm:$0xff]
        %v687 = vld [vmem:[#allocation8 + $0x170] sm:$0xff]
        %v688 = vld [vmem:[#allocation8 + $0x178] sm:$0xff]
        %v689 = vld [vmem:[%s4] sm:$0x7]
        %v691 = vlaneseq
        %v692 = vshrl.u32 %v691, 7
        %v693 = vsub.s32 0, %v692
        %v694 = vrot.slane %v689, %v693
        %v695 = vlaneseq
        %v696 = vshrl.u32 %v695, 7
        %v697 = vsub.s32 1, %v696
        %v698 = vrot.slane %v689, %v697
        %v699 = vlaneseq
        %v700 = vshrl.u32 %v699, 7
        %v701 = vsub.s32 2, %v700
        %v702 = vrot.slane %v689, %v701
        %706 = vmatprep.subr.mxu0 %v642
        %707 = vmatpush1.msra.mxu0 %v641
        %708 = vmatprep.subr.mxu0 %v645
        %709 = vmatpush1.msra.mxu0 %v644
        %710 = vmatprep.subr.mxu0 %v648
        %711 = vmatpush1.msra.mxu0 %v647
        %712 = vmatprep.subr.mxu0 %v651
        %713 = vmatpush1.msra.mxu0 %v650
        %714 = vmatprep.subr.mxu0 %v654
        %715 = vmatpush1.msra.mxu0 %v653
        %716 = vmatprep.subr.mxu0 %v657
        %717 = vmatpush1.msra.mxu0 %v656
        %718 = vmatprep.subr.mxu0 %v660
        %719 = vmatpush1.msra.mxu0 %v659
        %720 = vmatprep.subr.mxu0 %v663
        %721 = vmatpush1.msra.mxu0 %v662
        %722 = vmatprep.subr.mxu0 %v666
        %723 = vmatpush1.msra.mxu0 %v665
        %724 = vmatprep.subr.mxu0 %v669
        %725 = vmatpush1.msra.mxu0 %v668
        %726 = vmatprep.subr.mxu0 %v672
        %727 = vmatpush1.msra.mxu0 %v671
        %728 = vmatprep.subr.mxu0 %v675
        %729 = vmatpush1.msra.mxu0 %v674
        %730 = vmatprep.subr.mxu0 %v678
        %731 = vmatpush1.msra.mxu0 %v677
        %732 = vmatprep.subr.mxu0 %v681
        %733 = vmatpush1.msra.mxu0 %v680
        %734 = vmatprep.subr.mxu0 %v684
        %735 = vmatpush1.msra.mxu0 %v683
        %736 = vmatprep.subr.mxu0 %v687
        %737 = vmatpush1.msra.mxu0 %v686
        %738 = vmatprep.subr.mxu0 0.0
        %739 = vmatpush1.msra.mxu0 0.0
        %740 = vmatprep.subr.mxu0 0.0
        %741 = vmatpush1.msra.mxu0 0.0
        %742 = vmatprep.subr.mxu0 0.0
        %743 = vmatpush1.msra.mxu0 0.0
        %744 = vmatprep.subr.mxu0 0.0
        %745 = vmatpush1.msra.mxu0 0.0
        %746 = vmatprep.subr.mxu0 0.0
        %747 = vmatpush1.msra.mxu0 0.0
        %748 = vmatprep.subr.mxu0 0.0
        %749 = vmatpush1.msra.mxu0 0.0
        %750 = vmatprep.subr.mxu0 0.0
        %751 = vmatpush1.msra.mxu0 0.0
        %752 = vmatprep.subr.mxu0 0.0
        %753 = vmatpush1.msra.mxu0 0.0
        %754 = vmatprep.subr.mxu0 0.0
        %755 = vmatpush1.msra.mxu0 0.0
        %756 = vmatprep.subr.mxu0 0.0
        %757 = vmatpush1.msra.mxu0 0.0
        %758 = vmatprep.subr.mxu0 0.0
        %759 = vmatpush1.msra.mxu0 0.0
        %760 = vmatprep.subr.mxu0 0.0
        %761 = vmatpush1.msra.mxu0 0.0
        %762 = vmatprep.subr.mxu0 0.0
        %763 = vmatpush1.msra.mxu0 0.0
        %764 = vmatprep.subr.mxu0 0.0
        %765 = vmatpush1.msra.mxu0 0.0
        %766 = vmatprep.subr.mxu0 0.0
        %767 = vmatpush1.msra.mxu0 0.0
        %768 = vmatprep.subr.mxu0 0.0
        %769 = vmatpush1.msra.mxu0 0.0
        %770 = vmatprep.mubr.f32.mxu0 0.0
        %771 = vmatmul.mubr.f32.gmra.mrb[0].mxu0 %v637
        %v772 = vpop.f32.mrb[0].mxu0
        %v773 = vadd.f32 %v694, %v772
        %v774 = vpop.f32.mrb[0].mxu0
        %v775 = vadd.f32 %v698, %v774
        %776 = vmatprep.mubr.f32.mxu0 0.0
        %777 = vmatmul.mubr.f32.gmra.mrb[0].mxu0 %v638
        %v778 = vpop.f32.mrb[0].mxu0
        %v779 = vadd.f32 %v694, %v778
        %v780 = vpop.f32.mrb[0].mxu0
        %v781 = vadd.f32 %v698, %v780
        %782 = vmatprep.mubr.f32.mxu0 0.0
        %783 = vmatmul.mubr.f32.gmra.mrb[0].mxu0 %v639
        %v784 = vpop.f32.mrb[0].mxu0
        %v785 = vadd.f32 %v694, %v784
        %v786 = vpop.f32.mrb[0].mxu0
        %v787 = vadd.f32 %v698, %v786
        %788 = vmatprep.mubr.f32.mxu0 0.0
        %789 = vmatmul.mubr.f32.gmra.mrb[0].mxu0 %v640
        %v790 = vpop.f32.mrb[0].mxu0
        %v791 = vadd.f32 %v694, %v790
        %v792 = vpop.f32.mrb[0].mxu0
        %v793 = vadd.f32 %v698, %v792
        %794 = vdwg.mxu0
        %795 = vmatprep.subr.mxu0 0.0
        %796 = vmatpush1.msra.mxu0 %v643
        %797 = vmatprep.subr.mxu0 0.0
        %798 = vmatpush1.msra.mxu0 %v646
        %799 = vmatprep.subr.mxu0 0.0
        %800 = vmatpush1.msra.mxu0 %v649
        %801 = vmatprep.subr.mxu0 0.0
        %802 = vmatpush1.msra.mxu0 %v652
        %803 = vmatprep.subr.mxu0 0.0
        %804 = vmatpush1.msra.mxu0 %v655
        %805 = vmatprep.subr.mxu0 0.0
        %806 = vmatpush1.msra.mxu0 %v658
        %807 = vmatprep.subr.mxu0 0.0
        %808 = vmatpush1.msra.mxu0 %v661
        %809 = vmatprep.subr.mxu0 0.0
        %810 = vmatpush1.msra.mxu0 %v664
        %811 = vmatprep.subr.mxu0 0.0
        %812 = vmatpush1.msra.mxu0 %v667
        %813 = vmatprep.subr.mxu0 0.0
        %814 = vmatpush1.msra.mxu0 %v670
        %815 = vmatprep.subr.mxu0 0.0
        %816 = vmatpush1.msra.mxu0 %v673
        %817 = vmatprep.subr.mxu0 0.0
        %818 = vmatpush1.msra.mxu0 %v676
        %819 = vmatprep.subr.mxu0 0.0
        %820 = vmatpush1.msra.mxu0 %v679
        %821 = vmatprep.subr.mxu0 0.0
        %822 = vmatpush1.msra.mxu0 %v682
        %823 = vmatprep.subr.mxu0 0.0
        %824 = vmatpush1.msra.mxu0 %v685
        %825 = vmatprep.subr.mxu0 0.0
        %826 = vmatpush1.msra.mxu0 %v688
        %827 = vmatprep.subr.mxu0 0.0
        %828 = vmatpush1.msra.mxu0 0.0
        %829 = vmatprep.subr.mxu0 0.0
        %830 = vmatpush1.msra.mxu0 0.0
        %831 = vmatprep.subr.mxu0 0.0
        %832 = vmatpush1.msra.mxu0 0.0
        %833 = vmatprep.subr.mxu0 0.0
        %834 = vmatpush1.msra.mxu0 0.0
        %835 = vmatprep.subr.mxu0 0.0
        %836 = vmatpush1.msra.mxu0 0.0
        %837 = vmatprep.subr.mxu0 0.0
        %838 = vmatpush1.msra.mxu0 0.0
        %839 = vmatprep.subr.mxu0 0.0
        %840 = vmatpush1.msra.mxu0 0.0
        %841 = vmatprep.subr.mxu0 0.0
        %842 = vmatpush1.msra.mxu0 0.0
        %843 = vmatprep.subr.mxu0 0.0
        %844 = vmatpush1.msra.mxu0 0.0
        %845 = vmatprep.subr.mxu0 0.0
        %846 = vmatpush1.msra.mxu0 0.0
        %847 = vmatprep.subr.mxu0 0.0
        %848 = vmatpush1.msra.mxu0 0.0
        %849 = vmatprep.subr.mxu0 0.0
        %850 = vmatpush1.msra.mxu0 0.0
        %851 = vmatprep.subr.mxu0 0.0
        %852 = vmatpush1.msra.mxu0 0.0
        %853 = vmatprep.subr.mxu0 0.0
        %854 = vmatpush1.msra.mxu0 0.0
        %855 = vmatprep.subr.mxu0 0.0
        %856 = vmatpush1.msra.mxu0 0.0
        %857 = vmatprep.subr.mxu0 0.0
        %858 = vmatpush1.msra.mxu0 0.0
        %859 = vmatprep.mubr.f32.mxu0 0.0
        %860 = vmatmul.mubr.f32.gmra.mrb[0].mxu0 %v637
        %v861 = vpop.f32.mrb[0].mxu0
        %v862 = vadd.f32 %v702, %v861
        %v863 = vpop.f32.mrb[0].mxu0
        %864 = vmatprep.mubr.f32.mxu0 0.0
        %865 = vmatmul.mubr.f32.gmra.mrb[0].mxu0 %v638
        %v866 = vpop.f32.mrb[0].mxu0
        %v867 = vadd.f32 %v702, %v866
        %v868 = vpop.f32.mrb[0].mxu0
        %869 = vmatprep.mubr.f32.mxu0 0.0
        %870 = vmatmul.mubr.f32.gmra.mrb[0].mxu0 %v639
        %v871 = vpop.f32.mrb[0].mxu0
        %v872 = vadd.f32 %v702, %v871
        %v873 = vpop.f32.mrb[0].mxu0
        %874 = vmatprep.mubr.f32.mxu0 0.0
        %875 = vmatmul.mubr.f32.gmra.mrb[0].mxu0 %v640
        %v876 = vpop.f32.mrb[0].mxu0
        %v877 = vadd.f32 %v702, %v876
        %v878 = vpop.f32.mrb[0].mxu0
        %879 = vdwg.mxu0
        %vm880 = vcmask 261120
        %v882 = vsel %vm880, %v773, 0
        %v885 = vsel %vm880, %v779, 0
        %v888 = vsel %vm880, %v785, 0
        %v891 = vsel %vm880, %v791, 0
        %v894 = vsel %vm880, %v775, 0
        %v897 = vsel %vm880, %v781, 0
        %v900 = vsel %vm880, %v787, 0
        %v903 = vsel %vm880, %v793, 0
        %905 = vmatprep.subr.mxu0 0.0
        %906 = vmatpush1.xpose.msra.mxu0 %v894
        %907 = vmatprep.subr.mxu0 0.0
        %908 = vmatpush1.xpose.msra.mxu0 %v897
        %909 = vmatprep.subr.mxu0 0.0
        %910 = vmatpush1.xpose.msra.mxu0 %v900
        %911 = vmatprep.subr.mxu0 0.0
        %912 = vmatpush1.xpose.msra.mxu0 %v903
        %913 = vmatprep.subr.mxu0 0.0
        %914 = vmatpush1.xpose.msra.mxu0 0.0
        %915 = vmatprep.subr.mxu0 0.0
        %916 = vmatpush1.xpose.msra.mxu0 0.0
        %917 = vmatprep.subr.mxu0 0.0
        %918 = vmatpush1.xpose.msra.mxu0 0.0
        %919 = vmatprep.subr.mxu0 0.0
        %920 = vmatpush1.xpose.msra.mxu0 0.0
        %921 = vmatprep.subr.mxu0 0.0
        %922 = vmatpush1.xpose.msra.mxu0 0.0
        %923 = vmatprep.subr.mxu0 0.0
        %924 = vmatpush1.xpose.msra.mxu0 0.0
        %925 = vmatprep.subr.mxu0 0.0
        %926 = vmatpush1.xpose.msra.mxu0 0.0
        %927 = vmatprep.subr.mxu0 0.0
        %928 = vmatpush1.xpose.msra.mxu0 0.0
        %929 = vmatprep.subr.mxu0 0.0
        %930 = vmatpush1.xpose.msra.mxu0 0.0
        %931 = vmatprep.subr.mxu0 0.0
        %932 = vmatpush1.xpose.msra.mxu0 0.0
        %933 = vmatprep.subr.mxu0 0.0
        %934 = vmatpush1.xpose.msra.mxu0 0.0
        %935 = vmatprep.subr.mxu0 0.0
        %936 = vmatpush1.xpose.msra.mxu0 0.0
        %937 = vmatprep.subr.mxu0 0.0
        %938 = vmatpush1.xpose.msra.mxu0 0.0
        %939 = vmatprep.subr.mxu0 0.0
        %940 = vmatpush1.xpose.msra.mxu0 0.0
        %941 = vmatprep.subr.mxu0 0.0
        %942 = vmatpush1.xpose.msra.mxu0 0.0
        %943 = vmatprep.subr.mxu0 0.0
        %944 = vmatpush1.xpose.msra.mxu0 0.0
        %945 = vmatprep.subr.mxu0 0.0
        %946 = vmatpush1.xpose.msra.mxu0 0.0
        %947 = vmatprep.subr.mxu0 0.0
        %948 = vmatpush1.xpose.msra.mxu0 0.0
        %949 = vmatprep.subr.mxu0 0.0
        %950 = vmatpush1.xpose.msra.mxu0 0.0
        %951 = vmatprep.subr.mxu0 0.0
        %952 = vmatpush1.xpose.msra.mxu0 0.0
        %953 = vmatprep.subr.mxu0 0.0
        %954 = vmatpush1.xpose.msra.mxu0 0.0
        %955 = vmatprep.subr.mxu0 0.0
        %956 = vmatpush1.xpose.msra.mxu0 0.0
        %957 = vmatprep.subr.mxu0 0.0
        %958 = vmatpush1.xpose.msra.mxu0 0.0
        %959 = vmatprep.subr.mxu0 0.0
        %960 = vmatpush1.xpose.msra.mxu0 0.0
        %961 = vmatprep.subr.mxu0 0.0
        %962 = vmatpush1.xpose.msra.mxu0 0.0
        %963 = vmatprep.subr.mxu0 0.0
        %964 = vmatpush1.xpose.msra.mxu0 0.0
        %965 = vmatprep.subr.mxu0 0.0
        %966 = vmatpush1.xpose.msra.mxu0 0.0
        %967 = vmatprep.subr.mxu0 0.0
        %968 = vmatpush1.xpose.msra.mxu0 0.0
        %969 = vmatprep.mubr.f32.mxu0 0.0
        %970 = vmatmul.mubr.f32.gmra.mrb[0].mxu0 %v882
        %v971 = vpop.f32.mrb[0].mxu0
        %v972 = vadd.f32 0.0, %v971
        %v973 = vpop.f32.mrb[0].mxu0
        %974 = vmatprep.mubr.f32.mxu0 0.0
        %975 = vmatmul.mubr.f32.gmra.mrb[0].mxu0 %v885
        %v976 = vpop.f32.mrb[0].mxu0
        %v977 = vadd.f32 0.0, %v976
        %v978 = vpop.f32.mrb[0].mxu0
        %979 = vmatprep.mubr.f32.mxu0 0.0
        %980 = vmatmul.mubr.f32.gmra.mrb[0].mxu0 %v888
        %v981 = vpop.f32.mrb[0].mxu0
        %v982 = vadd.f32 0.0, %v981
        %v983 = vpop.f32.mrb[0].mxu0
        %984 = vmatprep.mubr.f32.mxu0 0.0
        %985 = vmatmul.mubr.f32.gmra.mrb[0].mxu0 %v891
        %v986 = vpop.f32.mrb[0].mxu0
        %v987 = vadd.f32 0.0, %v986
        %v988 = vpop.f32.mrb[0].mxu0
        %989 = vdwg.mxu0
        %v990 = vmul.f32 %v972, 0.17677669
        %v991 = vmul.f32 %v977, 0.17677669
        %v992 = vmul.f32 %v982, 0.17677669
        %v993 = vmul.f32 %v987, 0.17677669
        %v994 = vsel %vm880, %v990, -inf
        %995 = vmax.xlane.f32.xlu0 %v994
        %v996 = vpop.xlane.xlu0 %995
        %v997 = vsel %vm880, %v991, -inf
        %998 = vmax.xlane.f32.xlu0 %v997
        %v999 = vpop.xlane.xlu0 %998
        %v1000 = vsel %vm880, %v992, -inf
        %1001 = vmax.xlane.f32.xlu0 %v1000
        %v1002 = vpop.xlane.xlu0 %1001
        %v1003 = vsel %vm880, %v993, -inf
        %1004 = vmax.xlane.f32.xlu0 %v1003
        %v1005 = vpop.xlane.xlu0 %1004
        %v1006 = vsub.f32 %v990, %v996
        %v1007 = vsub.f32 %v991, %v999
        %v1008 = vsub.f32 %v992, %v1002
        %v1009 = vsub.f32 %v993, %v1005
        %v1010 = vmul.f32 %v1006, 1.442695
        %v1011 = vpow.pop %v1010
        %v1012 = vmul.f32 %v1007, 1.442695
        %v1013 = vpow.pop %v1012
        %v1014 = vmul.f32 %v1008, 1.442695
        %v1015 = vpow.pop %v1014
        %v1016 = vmul.f32 %v1009, 1.442695
        %v1017 = vpow.pop %v1016
        %v1018 = vsel %vm880, %v1011, 0.0
        %1019 = vadd.xlane.f32.xlu0 %v1018
        %v1020 = vpop.xlane.xlu0 %1019
        %v1021 = vsel %vm880, %v1013, 0.0
        %1022 = vadd.xlane.f32.xlu0 %v1021
        %v1023 = vpop.xlane.xlu0 %1022
        %v1024 = vsel %vm880, %v1015, 0.0
        %1025 = vadd.xlane.f32.xlu0 %v1024
        %v1026 = vpop.xlane.xlu0 %1025
        %v1027 = vsel %vm880, %v1017, 0.0
        %1028 = vadd.xlane.f32.xlu0 %v1027
        %v1029 = vpop.xlane.xlu0 %1028
        %v1030 = vrcp.pop %v1020
        %v1031 = vmul.f32 %v1011, %v1030
        %v1032 = vrcp.pop %v1023
        %v1033 = vmul.f32 %v1013, %v1032
        %v1034 = vrcp.pop %v1026
        %v1035 = vmul.f32 %v1015, %v1034
        %v1036 = vrcp.pop %v1029
        %v1037 = vmul.f32 %v1017, %v1036
        %v1039 = vsel %vm880, %v1031, 0
        %v1042 = vsel %vm880, %v1033, 0
        %v1045 = vsel %vm880, %v1035, 0
        %v1048 = vsel %vm880, %v1037, 0
        %1050 = vmatprep.subr.mxu0 0.0
        %1051 = vmatpush1.msra.mxu0 %v862
        %1052 = vmatprep.subr.mxu0 0.0
        %1053 = vmatpush1.msra.mxu0 %v867
        %1054 = vmatprep.subr.mxu0 0.0
        %1055 = vmatpush1.msra.mxu0 %v872
        %1056 = vmatprep.subr.mxu0 0.0
        %1057 = vmatpush1.msra.mxu0 %v877
        %1058 = vmatprep.subr.mxu0 0.0
        %1059 = vmatpush1.msra.mxu0 0.0
        %1060 = vmatprep.subr.mxu0 0.0
        %1061 = vmatpush1.msra.mxu0 0.0
        %1062 = vmatprep.subr.mxu0 0.0
        %1063 = vmatpush1.msra.mxu0 0.0
        %1064 = vmatprep.subr.mxu0 0.0
        %1065 = vmatpush1.msra.mxu0 0.0
        %1066 = vmatprep.subr.mxu0 0.0
        %1067 = vmatpush1.msra.mxu0 0.0
        %1068 = vmatprep.subr.mxu0 0.0
        %1069 = vmatpush1.msra.mxu0 0.0
        %1070 = vmatprep.subr.mxu0 0.0
        %1071 = vmatpush1.msra.mxu0 0.0
        %1072 = vmatprep.subr.mxu0 0.0
        %1073 = vmatpush1.msra.mxu0 0.0
        %1074 = vmatprep.subr.mxu0 0.0
        %1075 = vmatpush1.msra.mxu0 0.0
        %1076 = vmatprep.subr.mxu0 0.0
        %1077 = vmatpush1.msra.mxu0 0.0
        %1078 = vmatprep.subr.mxu0 0.0
        %1079 = vmatpush1.msra.mxu0 0.0
        %1080 = vmatprep.subr.mxu0 0.0
        %1081 = vmatpush1.msra.mxu0 0.0
        %1082 = vmatprep.subr.mxu0 0.0
        %1083 = vmatpush1.msra.mxu0 0.0
        %1084 = vmatprep.subr.mxu0 0.0
        %1085 = vmatpush1.msra.mxu0 0.0
        %1086 = vmatprep.subr.mxu0 0.0
        %1087 = vmatpush1.msra.mxu0 0.0
        %1088 = vmatprep.subr.mxu0 0.0
        %1089 = vmatpush1.msra.mxu0 0.0
        %1090 = vmatprep.subr.mxu0 0.0
        %1091 = vmatpush1.msra.mxu0 0.0
        %1092 = vmatprep.subr.mxu0 0.0
        %1093 = vmatpush1.msra.mxu0 0.0
        %1094 = vmatprep.subr.mxu0 0.0
        %1095 = vmatpush1.msra.mxu0 0.0
        %1096 = vmatprep.subr.mxu0 0.0
        %1097 = vmatpush1.msra.mxu0 0.0
        %1098 = vmatprep.subr.mxu0 0.0
        %1099 = vmatpush1.msra.mxu0 0.0
        %1100 = vmatprep.subr.mxu0 0.0
        %1101 = vmatpush1.msra.mxu0 0.0
        %1102 = vmatprep.subr.mxu0 0.0
        %1103 = vmatpush1.msra.mxu0 0.0
        %1104 = vmatprep.subr.mxu0 0.0
        %1105 = vmatpush1.msra.mxu0 0.0
        %1106 = vmatprep.subr.mxu0 0.0
        %1107 = vmatpush1.msra.mxu0 0.0
        %1108 = vmatprep.subr.mxu0 0.0
        %1109 = vmatpush1.msra.mxu0 0.0
        %1110 = vmatprep.subr.mxu0 0.0
        %1111 = vmatpush1.msra.mxu0 0.0
        %1112 = vmatprep.subr.mxu0 0.0
        %1113 = vmatpush1.msra.mxu0 0.0
        %1114 = vmatprep.mubr.f32.mxu0 0.0
        %1115 = vmatmul.mubr.f32.gmra.mrb[0].mxu0 %v1039
        %v1116 = vpop.f32.mrb[0].mxu0
        %v1117 = vadd.f32 0.0, %v1116
        %v1118 = vpop.f32.mrb[0].mxu0
        %1119 = vmatprep.mubr.f32.mxu0 0.0
        %1120 = vmatmul.mubr.f32.gmra.mrb[0].mxu0 %v1042
        %v1121 = vpop.f32.mrb[0].mxu0
        %v1122 = vadd.f32 0.0, %v1121
        %v1123 = vpop.f32.mrb[0].mxu0
        %1124 = vmatprep.mubr.f32.mxu0 0.0
        %1125 = vmatmul.mubr.f32.gmra.mrb[0].mxu0 %v1045
        %v1126 = vpop.f32.mrb[0].mxu0
        %v1127 = vadd.f32 0.0, %v1126
        %v1128 = vpop.f32.mrb[0].mxu0
        %1129 = vmatprep.mubr.f32.mxu0 0.0
        %1130 = vmatmul.mubr.f32.gmra.mrb[0].mxu0 %v1048
        %v1131 = vpop.f32.mrb[0].mxu0
        %v1132 = vadd.f32 0.0, %v1131
        %v1133 = vpop.f32.mrb[0].mxu0
        %1134 = vdwg.mxu0
        %1135 = vrot.lane.b32.xlu0 %v773, 96
        %v1136 = vpop.permute.xlu0 %1135
        %1137 = vrot.lane.b32.xlu0 %v779, 96
        %v1138 = vpop.permute.xlu0 %1137
        %1139 = vrot.lane.b32.xlu0 %v785, 96
        %v1140 = vpop.permute.xlu0 %1139
        %1141 = vrot.lane.b32.xlu0 %v791, 96
        %v1142 = vpop.permute.xlu0 %1141
        %1143 = vrot.lane.b32.xlu0 %v775, 96
        %v1144 = vpop.permute.xlu0 %1143
        %1145 = vrot.lane.b32.xlu0 %v781, 96
        %v1146 = vpop.permute.xlu0 %1145
        %1147 = vrot.lane.b32.xlu0 %v787, 96
        %v1148 = vpop.permute.xlu0 %1147
        %1149 = vrot.lane.b32.xlu0 %v793, 96
        %v1150 = vpop.permute.xlu0 %1149
        %v1151 = vsel %vm880, %v1136, 0
        %v1153 = vsel %vm880, %v1138, 0
        %v1155 = vsel %vm880, %v1140, 0
        %v1157 = vsel %vm880, %v1142, 0
        %v1159 = vsel %vm880, %v1144, 0
        %v1161 = vsel %vm880, %v1146, 0
        %v1163 = vsel %vm880, %v1148, 0
        %v1165 = vsel %vm880, %v1150, 0
        %1167 = vmatprep.subr.mxu0 0.0
        %1168 = vmatpush1.xpose.msra.mxu0 %v1159
        %1169 = vmatprep.subr.mxu0 0.0
        %1170 = vmatpush1.xpose.msra.mxu0 %v1161
        %1171 = vmatprep.subr.mxu0 0.0
        %1172 = vmatpush1.xpose.msra.mxu0 %v1163
        %1173 = vmatprep.subr.mxu0 0.0
        %1174 = vmatpush1.xpose.msra.mxu0 %v1165
        %1175 = vmatprep.subr.mxu0 0.0
        %1176 = vmatpush1.xpose.msra.mxu0 0.0
        %1177 = vmatprep.subr.mxu0 0.0
        %1178 = vmatpush1.xpose.msra.mxu0 0.0
        %1179 = vmatprep.subr.mxu0 0.0
        %1180 = vmatpush1.xpose.msra.mxu0 0.0
        %1181 = vmatprep.subr.mxu0 0.0
        %1182 = vmatpush1.xpose.msra.mxu0 0.0
        %1183 = vmatprep.subr.mxu0 0.0
        %1184 = vmatpush1.xpose.msra.mxu0 0.0
        %1185 = vmatprep.subr.mxu0 0.0
        %1186 = vmatpush1.xpose.msra.mxu0 0.0
        %1187 = vmatprep.subr.mxu0 0.0
        %1188 = vmatpush1.xpose.msra.mxu0 0.0
        %1189 = vmatprep.subr.mxu0 0.0
        %1190 = vmatpush1.xpose.msra.mxu0 0.0
        %1191 = vmatprep.subr.mxu0 0.0
        %1192 = vmatpush1.xpose.msra.mxu0 0.0
        %1193 = vmatprep.subr.mxu0 0.0
        %1194 = vmatpush1.xpose.msra.mxu0 0.0
        %1195 = vmatprep.subr.mxu0 0.0
        %1196 = vmatpush1.xpose.msra.mxu0 0.0
        %1197 = vmatprep.subr.mxu0 0.0
        %1198 = vmatpush1.xpose.msra.mxu0 0.0
        %1199 = vmatprep.subr.mxu0 0.0
        %1200 = vmatpush1.xpose.msra.mxu0 0.0
        %1201 = vmatprep.subr.mxu0 0.0
        %1202 = vmatpush1.xpose.msra.mxu0 0.0
        %1203 = vmatprep.subr.mxu0 0.0
        %1204 = vmatpush1.xpose.msra.mxu0 0.0
        %1205 = vmatprep.subr.mxu0 0.0
        %1206 = vmatpush1.xpose.msra.mxu0 0.0
        %1207 = vmatprep.subr.mxu0 0.0
        %1208 = vmatpush1.xpose.msra.mxu0 0.0
        %1209 = vmatprep.subr.mxu0 0.0
        %1210 = vmatpush1.xpose.msra.mxu0 0.0
        %1211 = vmatprep.subr.mxu0 0.0
        %1212 = vmatpush1.xpose.msra.mxu0 0.0
        %1213 = vmatprep.subr.mxu0 0.0
        %1214 = vmatpush1.xpose.msra.mxu0 0.0
        %1215 = vmatprep.subr.mxu0 0.0
        %1216 = vmatpush1.xpose.msra.mxu0 0.0
        %1217 = vmatprep.subr.mxu0 0.0
        %1218 = vmatpush1.xpose.msra.mxu0 0.0
        %1219 = vmatprep.subr.mxu0 0.0
        %1220 = vmatpush1.xpose.msra.mxu0 0.0
        %1221 = vmatprep.subr.mxu0 0.0
        %1222 = vmatpush1.xpose.msra.mxu0 0.0
        %1223 = vmatprep.subr.mxu0 0.0
        %1224 = vmatpush1.xpose.msra.mxu0 0.0
        %1225 = vmatprep.subr.mxu0 0.0
        %1226 = vmatpush1.xpose.msra.mxu0 0.0
        %1227 = vmatprep.subr.mxu0 0.0
        %1228 = vmatpush1.xpose.msra.mxu0 0.0
        %1229 = vmatprep.subr.mxu0 0.0
        %1230 = vmatpush1.xpose.msra.mxu0 0.0
        %1231 = vmatprep.mubr.f32.mxu0 0.0
        %1232 = vmatmul.mubr.f32.gmra.mrb[0].mxu0 %v1151
        %v1233 = vpop.f32.mrb[0].mxu0
        %v1234 = vadd.f32 0.0, %v1233
        %v1235 = vpop.f32.mrb[0].mxu0
        %1236 = vmatprep.mubr.f32.mxu0 0.0
        %1237 = vmatmul.mubr.f32.gmra.mrb[0].mxu0 %v1153
        %v1238 = vpop.f32.mrb[0].mxu0
        %v1239 = vadd.f32 0.0, %v1238
        %v1240 = vpop.f32.mrb[0].mxu0
        %1241 = vmatprep.mubr.f32.mxu0 0.0
        %1242 = vmatmul.mubr.f32.gmra.mrb[0].mxu0 %v1155
        %v1243 = vpop.f32.mrb[0].mxu0
        %v1244 = vadd.f32 0.0, %v1243
        %v1245 = vpop.f32.mrb[0].mxu0
        %1246 = vmatprep.mubr.f32.mxu0 0.0
        %1247 = vmatmul.mubr.f32.gmra.mrb[0].mxu0 %v1157
        %v1248 = vpop.f32.mrb[0].mxu0
        %v1249 = vadd.f32 0.0, %v1248
        %v1250 = vpop.f32.mrb[0].mxu0
        %1251 = vdwg.mxu0
        %v1252 = vmul.f32 %v1234, 0.17677669
        %v1253 = vmul.f32 %v1239, 0.17677669
        %v1254 = vmul.f32 %v1244, 0.17677669
        %v1255 = vmul.f32 %v1249, 0.17677669
        %v1256 = vsel %vm880, %v1252, -inf
        %1257 = vmax.xlane.f32.xlu0 %v1256
        %v1258 = vpop.xlane.xlu0 %1257
        %v1259 = vsel %vm880, %v1253, -inf
        %1260 = vmax.xlane.f32.xlu0 %v1259
        %v1261 = vpop.xlane.xlu0 %1260
        %v1262 = vsel %vm880, %v1254, -inf
        %1263 = vmax.xlane.f32.xlu0 %v1262
        %v1264 = vpop.xlane.xlu0 %1263
        %v1265 = vsel %vm880, %v1255, -inf
        %1266 = vmax.xlane.f32.xlu0 %v1265
        %v1267 = vpop.xlane.xlu0 %1266
        %v1268 = vsub.f32 %v1252, %v1258
        %v1269 = vsub.f32 %v1253, %v1261
        %v1270 = vsub.f32 %v1254, %v1264
        %v1271 = vsub.f32 %v1255, %v1267
        %v1272 = vmul.f32 %v1268, 1.442695
        %v1273 = vpow.pop %v1272
        %v1274 = vmul.f32 %v1269, 1.442695
        %v1275 = vpow.pop %v1274
        %v1276 = vmul.f32 %v1270, 1.442695
        %v1277 = vpow.pop %v1276
        %v1278 = vmul.f32 %v1271, 1.442695
        %v1279 = vpow.pop %v1278
        %v1280 = vsel %vm880, %v1273, 0.0
        %1281 = vadd.xlane.f32.xlu0 %v1280
        %v1282 = vpop.xlane.xlu0 %1281
        %v1283 = vsel %vm880, %v1275, 0.0
        %1284 = vadd.xlane.f32.xlu0 %v1283
        %v1285 = vpop.xlane.xlu0 %1284
        %v1286 = vsel %vm880, %v1277, 0.0
        %1287 = vadd.xlane.f32.xlu0 %v1286
        %v1288 = vpop.xlane.xlu0 %1287
        %v1289 = vsel %vm880, %v1279, 0.0
        %1290 = vadd.xlane.f32.xlu0 %v1289
        %v1291 = vpop.xlane.xlu0 %1290
        %v1292 = vrcp.pop %v1282
        %v1293 = vmul.f32 %v1273, %v1292
        %v1294 = vrcp.pop %v1285
        %v1295 = vmul.f32 %v1275, %v1294
        %v1296 = vrcp.pop %v1288
        %v1297 = vmul.f32 %v1277, %v1296
        %v1298 = vrcp.pop %v1291
        %v1299 = vmul.f32 %v1279, %v1298
        %1304 = vrot.lane.b32.xlu0 %v862, 96
        %v1305 = vpop.permute.xlu0 %1304
        %1306 = vrot.lane.b32.xlu0 %v867, 96
        %v1307 = vpop.permute.xlu0 %1306
        %1308 = vrot.lane.b32.xlu0 %v872, 96
        %v1309 = vpop.permute.xlu0 %1308
        %1310 = vrot.lane.b32.xlu0 %v877, 96
        %v1311 = vpop.permute.xlu0 %1310
        %v1317 = vsel %vm880, %v1293, 0
        %v1320 = vsel %vm880, %v1295, 0
        %v1323 = vsel %vm880, %v1297, 0
        %v1326 = vsel %vm880, %v1299, 0
        %1328 = vmatprep.subr.mxu0 0.0
        %1329 = vmatpush1.msra.mxu0 %v1305
        %1330 = vmatprep.subr.mxu0 0.0
        %1331 = vmatpush1.msra.mxu0 %v1307
        %1332 = vmatprep.subr.mxu0 0.0
        %1333 = vmatpush1.msra.mxu0 %v1309
        %1334 = vmatprep.subr.mxu0 0.0
        %1335 = vmatpush1.msra.mxu0 %v1311
        %1336 = vmatprep.subr.mxu0 0.0
        %1337 = vmatpush1.msra.mxu0 0.0
        %1338 = vmatprep.subr.mxu0 0.0
        %1339 = vmatpush1.msra.mxu0 0.0
        %1340 = vmatprep.subr.mxu0 0.0
        %1341 = vmatpush1.msra.mxu0 0.0
        %1342 = vmatprep.subr.mxu0 0.0
        %1343 = vmatpush1.msra.mxu0 0.0
        %1344 = vmatprep.subr.mxu0 0.0
        %1345 = vmatpush1.msra.mxu0 0.0
        %1346 = vmatprep.subr.mxu0 0.0
        %1347 = vmatpush1.msra.mxu0 0.0
        %1348 = vmatprep.subr.mxu0 0.0
        %1349 = vmatpush1.msra.mxu0 0.0
        %1350 = vmatprep.subr.mxu0 0.0
        %1351 = vmatpush1.msra.mxu0 0.0
        %1352 = vmatprep.subr.mxu0 0.0
        %1353 = vmatpush1.msra.mxu0 0.0
        %1354 = vmatprep.subr.mxu0 0.0
        %1355 = vmatpush1.msra.mxu0 0.0
        %1356 = vmatprep.subr.mxu0 0.0
        %1357 = vmatpush1.msra.mxu0 0.0
        %1358 = vmatprep.subr.mxu0 0.0
        %1359 = vmatpush1.msra.mxu0 0.0
        %1360 = vmatprep.subr.mxu0 0.0
        %1361 = vmatpush1.msra.mxu0 0.0
        %1362 = vmatprep.subr.mxu0 0.0
        %1363 = vmatpush1.msra.mxu0 0.0
        %1364 = vmatprep.subr.mxu0 0.0
        %1365 = vmatpush1.msra.mxu0 0.0
        %1366 = vmatprep.subr.mxu0 0.0
        %1367 = vmatpush1.msra.mxu0 0.0
        %1368 = vmatprep.subr.mxu0 0.0
        %1369 = vmatpush1.msra.mxu0 0.0
        %1370 = vmatprep.subr.mxu0 0.0
        %1371 = vmatpush1.msra.mxu0 0.0
        %1372 = vmatprep.subr.mxu0 0.0
        %1373 = vmatpush1.msra.mxu0 0.0
        %1374 = vmatprep.subr.mxu0 0.0
        %1375 = vmatpush1.msra.mxu0 0.0
        %1376 = vmatprep.subr.mxu0 0.0
        %1377 = vmatpush1.msra.mxu0 0.0
        %1378 = vmatprep.subr.mxu0 0.0
        %1379 = vmatpush1.msra.mxu0 0.0
        %1380 = vmatprep.subr.mxu0 0.0
        %1381 = vmatpush1.msra.mxu0 0.0
        %1382 = vmatprep.subr.mxu0 0.0
        %1383 = vmatpush1.msra.mxu0 0.0
        %1384 = vmatprep.subr.mxu0 0.0
        %1385 = vmatpush1.msra.mxu0 0.0
        %1386 = vmatprep.subr.mxu0 0.0
        %1387 = vmatpush1.msra.mxu0 0.0
        %1388 = vmatprep.subr.mxu0 0.0
        %1389 = vmatpush1.msra.mxu0 0.0
        %1390 = vmatprep.subr.mxu0 0.0
        %1391 = vmatpush1.msra.mxu0 0.0
        %1392 = vmatprep.mubr.f32.mxu0 0.0
        %1393 = vmatmul.mubr.f32.gmra.mrb[0].mxu0 %v1317
        %v1394 = vpop.f32.mrb[0].mxu0
        %v1395 = vadd.f32 0.0, %v1394
        %v1396 = vpop.f32.mrb[0].mxu0
        %1397 = vmatprep.mubr.f32.mxu0 0.0
        %1398 = vmatmul.mubr.f32.gmra.mrb[0].mxu0 %v1320
        %v1399 = vpop.f32.mrb[0].mxu0
        %v1400 = vadd.f32 0.0, %v1399
        %v1401 = vpop.f32.mrb[0].mxu0
        %1402 = vmatprep.mubr.f32.mxu0 0.0
        %1403 = vmatmul.mubr.f32.gmra.mrb[0].mxu0 %v1323
        %v1404 = vpop.f32.mrb[0].mxu0
        %v1405 = vadd.f32 0.0, %v1404
        %v1406 = vpop.f32.mrb[0].mxu0
        %1407 = vmatprep.mubr.f32.mxu0 0.0
        %1408 = vmatmul.mubr.f32.gmra.mrb[0].mxu0 %v1326
        %v1409 = vpop.f32.mrb[0].mxu0
        %v1410 = vadd.f32 0.0, %v1409
        %v1411 = vpop.f32.mrb[0].mxu0
        %1412 = vdwg.mxu0
        %1413 = vrot.lane.b32.xlu0 %v773, 64
        %v1414 = vpop.permute.xlu0 %1413
        %1415 = vrot.lane.b32.xlu0 %v779, 64
        %v1416 = vpop.permute.xlu0 %1415
        %1417 = vrot.lane.b32.xlu0 %v785, 64
        %v1418 = vpop.permute.xlu0 %1417
        %1419 = vrot.lane.b32.xlu0 %v791, 64
        %v1420 = vpop.permute.xlu0 %1419
        %1421 = vrot.lane.b32.xlu0 %v775, 64
        %v1422 = vpop.permute.xlu0 %1421
        %1423 = vrot.lane.b32.xlu0 %v781, 64
        %v1424 = vpop.permute.xlu0 %1423
        %1425 = vrot.lane.b32.xlu0 %v787, 64
        %v1426 = vpop.permute.xlu0 %1425
        %1427 = vrot.lane.b32.xlu0 %v793, 64
        %v1428 = vpop.permute.xlu0 %1427
        %v1429 = vsel %vm880, %v1414, 0
        %v1431 = vsel %vm880, %v1416, 0
        %v1433 = vsel %vm880, %v1418, 0
        %v1435 = vsel %vm880, %v1420, 0
        %v1437 = vsel %vm880, %v1422, 0
        %v1439 = vsel %vm880, %v1424, 0
        %v1441 = vsel %vm880, %v1426, 0
        %v1443 = vsel %vm880, %v1428, 0
        %1445 = vmatprep.subr.mxu0 0.0
        %1446 = vmatpush1.xpose.msra.mxu0 %v1437
        %1447 = vmatprep.subr.mxu0 0.0
        %1448 = vmatpush1.xpose.msra.mxu0 %v1439
        %1449 = vmatprep.subr.mxu0 0.0
        %1450 = vmatpush1.xpose.msra.mxu0 %v1441
        %1451 = vmatprep.subr.mxu0 0.0
        %1452 = vmatpush1.xpose.msra.mxu0 %v1443
        %1453 = vmatprep.subr.mxu0 0.0
        %1454 = vmatpush1.xpose.msra.mxu0 0.0
        %1455 = vmatprep.subr.mxu0 0.0
        %1456 = vmatpush1.xpose.msra.mxu0 0.0
        %1457 = vmatprep.subr.mxu0 0.0
        %1458 = vmatpush1.xpose.msra.mxu0 0.0
        %1459 = vmatprep.subr.mxu0 0.0
        %1460 = vmatpush1.xpose.msra.mxu0 0.0
        %1461 = vmatprep.subr.mxu0 0.0
        %1462 = vmatpush1.xpose.msra.mxu0 0.0
        %1463 = vmatprep.subr.mxu0 0.0
        %1464 = vmatpush1.xpose.msra.mxu0 0.0
        %1465 = vmatprep.subr.mxu0 0.0
        %1466 = vmatpush1.xpose.msra.mxu0 0.0
        %1467 = vmatprep.subr.mxu0 0.0
        %1468 = vmatpush1.xpose.msra.mxu0 0.0
        %1469 = vmatprep.subr.mxu0 0.0
        %1470 = vmatpush1.xpose.msra.mxu0 0.0
        %1471 = vmatprep.subr.mxu0 0.0
        %1472 = vmatpush1.xpose.msra.mxu0 0.0
        %1473 = vmatprep.subr.mxu0 0.0
        %1474 = vmatpush1.xpose.msra.mxu0 0.0
        %1475 = vmatprep.subr.mxu0 0.0
        %1476 = vmatpush1.xpose.msra.mxu0 0.0
        %1477 = vmatprep.subr.mxu0 0.0
        %1478 = vmatpush1.xpose.msra.mxu0 0.0
        %1479 = vmatprep.subr.mxu0 0.0
        %1480 = vmatpush1.xpose.msra.mxu0 0.0
        %1481 = vmatprep.subr.mxu0 0.0
        %1482 = vmatpush1.xpose.msra.mxu0 0.0
        %1483 = vmatprep.subr.mxu0 0.0
        %1484 = vmatpush1.xpose.msra.mxu0 0.0
        %1485 = vmatprep.subr.mxu0 0.0
        %1486 = vmatpush1.xpose.msra.mxu0 0.0
        %1487 = vmatprep.subr.mxu0 0.0
        %1488 = vmatpush1.xpose.msra.mxu0 0.0
        %1489 = vmatprep.subr.mxu0 0.0
        %1490 = vmatpush1.xpose.msra.mxu0 0.0
        %1491 = vmatprep.subr.mxu0 0.0
        %1492 = vmatpush1.xpose.msra.mxu0 0.0
        %1493 = vmatprep.subr.mxu0 0.0
        %1494 = vmatpush1.xpose.msra.mxu0 0.0
        %1495 = vmatprep.subr.mxu0 0.0
        %1496 = vmatpush1.xpose.msra.mxu0 0.0
        %1497 = vmatprep.subr.mxu0 0.0
        %1498 = vmatpush1.xpose.msra.mxu0 0.0
        %1499 = vmatprep.subr.mxu0 0.0
        %1500 = vmatpush1.xpose.msra.mxu0 0.0
        %1501 = vmatprep.subr.mxu0 0.0
        %1502 = vmatpush1.xpose.msra.mxu0 0.0
        %1503 = vmatprep.subr.mxu0 0.0
        %1504 = vmatpush1.xpose.msra.mxu0 0.0
        %1505 = vmatprep.subr.mxu0 0.0
        %1506 = vmatpush1.xpose.msra.mxu0 0.0
        %1507 = vmatprep.subr.mxu0 0.0
        %1508 = vmatpush1.xpose.msra.mxu0 0.0
        %1509 = vmatprep.mubr.f32.mxu0 0.0
        %1510 = vmatmul.mubr.f32.gmra.mrb[0].mxu0 %v1429
        %v1511 = vpop.f32.mrb[0].mxu0
        %v1512 = vadd.f32 0.0, %v1511
        %v1513 = vpop.f32.mrb[0].mxu0
        %1514 = vmatprep.mubr.f32.mxu0 0.0
        %1515 = vmatmul.mubr.f32.gmra.mrb[0].mxu0 %v1431
        %v1516 = vpop.f32.mrb[0].mxu0
        %v1517 = vadd.f32 0.0, %v1516
        %v1518 = vpop.f32.mrb[0].mxu0
        %1519 = vmatprep.mubr.f32.mxu0 0.0
        %1520 = vmatmul.mubr.f32.gmra.mrb[0].mxu0 %v1433
        %v1521 = vpop.f32.mrb[0].mxu0
        %v1522 = vadd.f32 0.0, %v1521
        %v1523 = vpop.f32.mrb[0].mxu0
        %1524 = vmatprep.mubr.f32.mxu0 0.0
        %1525 = vmatmul.mubr.f32.gmra.mrb[0].mxu0 %v1435
        %v1526 = vpop.f32.mrb[0].mxu0
        %v1527 = vadd.f32 0.0, %v1526
        %v1528 = vpop.f32.mrb[0].mxu0
        %1529 = vdwg.mxu0
        %v1530 = vmul.f32 %v1512, 0.17677669
        %v1531 = vmul.f32 %v1517, 0.17677669
        %v1532 = vmul.f32 %v1522, 0.17677669
        %v1533 = vmul.f32 %v1527, 0.17677669
        %v1534 = vsel %vm880, %v1530, -inf
        %1535 = vmax.xlane.f32.xlu0 %v1534
        %v1536 = vpop.xlane.xlu0 %1535
        %v1537 = vsel %vm880, %v1531, -inf
        %1538 = vmax.xlane.f32.xlu0 %v1537
        %v1539 = vpop.xlane.xlu0 %1538
        %v1540 = vsel %vm880, %v1532, -inf
        %1541 = vmax.xlane.f32.xlu0 %v1540
        %v1542 = vpop.xlane.xlu0 %1541
        %v1543 = vsel %vm880, %v1533, -inf
        %1544 = vmax.xlane.f32.xlu0 %v1543
        %v1545 = vpop.xlane.xlu0 %1544
        %v1546 = vsub.f32 %v1530, %v1536
        %v1547 = vsub.f32 %v1531, %v1539
        %v1548 = vsub.f32 %v1532, %v1542
        %v1549 = vsub.f32 %v1533, %v1545
        %v1550 = vmul.f32 %v1546, 1.442695
        %v1551 = vpow.pop %v1550
        %v1552 = vmul.f32 %v1547, 1.442695
        %v1553 = vpow.pop %v1552
        %v1554 = vmul.f32 %v1548, 1.442695
        %v1555 = vpow.pop %v1554
        %v1556 = vmul.f32 %v1549, 1.442695
        %v1557 = vpow.pop %v1556
        %v1558 = vsel %vm880, %v1551, 0.0
        %1559 = vadd.xlane.f32.xlu0 %v1558
        %v1560 = vpop.xlane.xlu0 %1559
        %v1561 = vsel %vm880, %v1553, 0.0
        %1562 = vadd.xlane.f32.xlu0 %v1561
        %v1563 = vpop.xlane.xlu0 %1562
        %v1564 = vsel %vm880, %v1555, 0.0
        %1565 = vadd.xlane.f32.xlu0 %v1564
        %v1566 = vpop.xlane.xlu0 %1565
        %v1567 = vsel %vm880, %v1557, 0.0
        %1568 = vadd.xlane.f32.xlu0 %v1567
        %v1569 = vpop.xlane.xlu0 %1568
        %v1570 = vrcp.pop %v1560
        %v1571 = vmul.f32 %v1551, %v1570
        %v1572 = vrcp.pop %v1563
        %v1573 = vmul.f32 %v1553, %v1572
        %v1574 = vrcp.pop %v1566
        %v1575 = vmul.f32 %v1555, %v1574
        %v1576 = vrcp.pop %v1569
        %v1577 = vmul.f32 %v1557, %v1576
        %1578 = vrot.lane.b32.xlu0 %v862, 64
        %v1579 = vpop.permute.xlu0 %1578
        %1580 = vrot.lane.b32.xlu0 %v867, 64
        %v1581 = vpop.permute.xlu0 %1580
        %1582 = vrot.lane.b32.xlu0 %v872, 64
        %v1583 = vpop.permute.xlu0 %1582
        %1584 = vrot.lane.b32.xlu0 %v877, 64
        %v1585 = vpop.permute.xlu0 %1584
        %v1591 = vsel %vm880, %v1571, 0
        %v1594 = vsel %vm880, %v1573, 0
        %v1597 = vsel %vm880, %v1575, 0
        %v1600 = vsel %vm880, %v1577, 0
        %1602 = vmatprep.subr.mxu0 0.0
        %1603 = vmatpush1.msra.mxu0 %v1579
        %1604 = vmatprep.subr.mxu0 0.0
        %1605 = vmatpush1.msra.mxu0 %v1581
        %1606 = vmatprep.subr.mxu0 0.0
        %1607 = vmatpush1.msra.mxu0 %v1583
        %1608 = vmatprep.subr.mxu0 0.0
        %1609 = vmatpush1.msra.mxu0 %v1585
        %1610 = vmatprep.subr.mxu0 0.0
        %1611 = vmatpush1.msra.mxu0 0.0
        %1612 = vmatprep.subr.mxu0 0.0
        %1613 = vmatpush1.msra.mxu0 0.0
        %1614 = vmatprep.subr.mxu0 0.0
        %1615 = vmatpush1.msra.mxu0 0.0
        %1616 = vmatprep.subr.mxu0 0.0
        %1617 = vmatpush1.msra.mxu0 0.0
        %1618 = vmatprep.subr.mxu0 0.0
        %1619 = vmatpush1.msra.mxu0 0.0
        %1620 = vmatprep.subr.mxu0 0.0
        %1621 = vmatpush1.msra.mxu0 0.0
        %1622 = vmatprep.subr.mxu0 0.0
        %1623 = vmatpush1.msra.mxu0 0.0
        %1624 = vmatprep.subr.mxu0 0.0
        %1625 = vmatpush1.msra.mxu0 0.0
        %1626 = vmatprep.subr.mxu0 0.0
        %1627 = vmatpush1.msra.mxu0 0.0
        %1628 = vmatprep.subr.mxu0 0.0
        %1629 = vmatpush1.msra.mxu0 0.0
        %1630 = vmatprep.subr.mxu0 0.0
        %1631 = vmatpush1.msra.mxu0 0.0
        %1632 = vmatprep.subr.mxu0 0.0
        %1633 = vmatpush1.msra.mxu0 0.0
        %1634 = vmatprep.subr.mxu0 0.0
        %1635 = vmatpush1.msra.mxu0 0.0
        %1636 = vmatprep.subr.mxu0 0.0
        %1637 = vmatpush1.msra.mxu0 0.0
        %1638 = vmatprep.subr.mxu0 0.0
        %1639 = vmatpush1.msra.mxu0 0.0
        %1640 = vmatprep.subr.mxu0 0.0
        %1641 = vmatpush1.msra.mxu0 0.0
        %1642 = vmatprep.subr.mxu0 0.0
        %1643 = vmatpush1.msra.mxu0 0.0
        %1644 = vmatprep.subr.mxu0 0.0
        %1645 = vmatpush1.msra.mxu0 0.0
        %1646 = vmatprep.subr.mxu0 0.0
        %1647 = vmatpush1.msra.mxu0 0.0
        %1648 = vmatprep.subr.mxu0 0.0
        %1649 = vmatpush1.msra.mxu0 0.0
        %1650 = vmatprep.subr.mxu0 0.0
        %1651 = vmatpush1.msra.mxu0 0.0
        %1652 = vmatprep.subr.mxu0 0.0
        %1653 = vmatpush1.msra.mxu0 0.0
        %1654 = vmatprep.subr.mxu0 0.0
        %1655 = vmatpush1.msra.mxu0 0.0
        %1656 = vmatprep.subr.mxu0 0.0
        %1657 = vmatpush1.msra.mxu0 0.0
        %1658 = vmatprep.subr.mxu0 0.0
        %1659 = vmatpush1.msra.mxu0 0.0
        %1660 = vmatprep.subr.mxu0 0.0
        %1661 = vmatpush1.msra.mxu0 0.0
        %1662 = vmatprep.subr.mxu0 0.0
        %1663 = vmatpush1.msra.mxu0 0.0
        %1664 = vmatprep.subr.mxu0 0.0
        %1665 = vmatpush1.msra.mxu0 0.0
        %1666 = vmatprep.mubr.f32.mxu0 0.0
        %1667 = vmatmul.mubr.f32.gmra.mrb[0].mxu0 %v1591
        %v1668 = vpop.f32.mrb[0].mxu0
        %v1669 = vadd.f32 0.0, %v1668
        %v1670 = vpop.f32.mrb[0].mxu0
        %1671 = vmatprep.mubr.f32.mxu0 0.0
        %1672 = vmatmul.mubr.f32.gmra.mrb[0].mxu0 %v1594
        %v1673 = vpop.f32.mrb[0].mxu0
        %v1674 = vadd.f32 0.0, %v1673
        %v1675 = vpop.f32.mrb[0].mxu0
        %1676 = vmatprep.mubr.f32.mxu0 0.0
        %1677 = vmatmul.mubr.f32.gmra.mrb[0].mxu0 %v1597
        %v1678 = vpop.f32.mrb[0].mxu0
        %v1679 = vadd.f32 0.0, %v1678
        %v1680 = vpop.f32.mrb[0].mxu0
        %1681 = vmatprep.mubr.f32.mxu0 0.0
        %1682 = vmatmul.mubr.f32.gmra.mrb[0].mxu0 %v1600
        %v1683 = vpop.f32.mrb[0].mxu0
        %v1684 = vadd.f32 0.0, %v1683
        %v1685 = vpop.f32.mrb[0].mxu0
        %1686 = vdwg.mxu0
        %1687 = vrot.lane.b32.xlu0 %v773, 32
        %v1688 = vpop.permute.xlu0 %1687
        %1689 = vrot.lane.b32.xlu0 %v779, 32
        %v1690 = vpop.permute.xlu0 %1689
        %1691 = vrot.lane.b32.xlu0 %v785, 32
        %v1692 = vpop.permute.xlu0 %1691
        %1693 = vrot.lane.b32.xlu0 %v791, 32
        %v1694 = vpop.permute.xlu0 %1693
        %1695 = vrot.lane.b32.xlu0 %v775, 32
        %v1696 = vpop.permute.xlu0 %1695
        %1697 = vrot.lane.b32.xlu0 %v781, 32
        %v1698 = vpop.permute.xlu0 %1697
        %1699 = vrot.lane.b32.xlu0 %v787, 32
        %v1700 = vpop.permute.xlu0 %1699
        %1701 = vrot.lane.b32.xlu0 %v793, 32
        %v1702 = vpop.permute.xlu0 %1701
        %v1703 = vsel %vm880, %v1688, 0
        %v1705 = vsel %vm880, %v1690, 0
        %v1707 = vsel %vm880, %v1692, 0
        %v1709 = vsel %vm880, %v1694, 0
        %v1711 = vsel %vm880, %v1696, 0
        %v1713 = vsel %vm880, %v1698, 0
        %v1715 = vsel %vm880, %v1700, 0
        %v1717 = vsel %vm880, %v1702, 0
        %1719 = vmatprep.subr.mxu0 0.0
        %1720 = vmatpush1.xpose.msra.mxu0 %v1711
        %1721 = vmatprep.subr.mxu0 0.0
        %1722 = vmatpush1.xpose.msra.mxu0 %v1713
        %1723 = vmatprep.subr.mxu0 0.0
        %1724 = vmatpush1.xpose.msra.mxu0 %v1715
        %1725 = vmatprep.subr.mxu0 0.0
        %1726 = vmatpush1.xpose.msra.mxu0 %v1717
        %1727 = vmatprep.subr.mxu0 0.0
        %1728 = vmatpush1.xpose.msra.mxu0 0.0
        %1729 = vmatprep.subr.mxu0 0.0
        %1730 = vmatpush1.xpose.msra.mxu0 0.0
        %1731 = vmatprep.subr.mxu0 0.0
        %1732 = vmatpush1.xpose.msra.mxu0 0.0
        %1733 = vmatprep.subr.mxu0 0.0
        %1734 = vmatpush1.xpose.msra.mxu0 0.0
        %1735 = vmatprep.subr.mxu0 0.0
        %1736 = vmatpush1.xpose.msra.mxu0 0.0
        %1737 = vmatprep.subr.mxu0 0.0
        %1738 = vmatpush1.xpose.msra.mxu0 0.0
        %1739 = vmatprep.subr.mxu0 0.0
        %1740 = vmatpush1.xpose.msra.mxu0 0.0
        %1741 = vmatprep.subr.mxu0 0.0
        %1742 = vmatpush1.xpose.msra.mxu0 0.0
        %1743 = vmatprep.subr.mxu0 0.0
        %1744 = vmatpush1.xpose.msra.mxu0 0.0
        %1745 = vmatprep.subr.mxu0 0.0
        %1746 = vmatpush1.xpose.msra.mxu0 0.0
        %1747 = vmatprep.subr.mxu0 0.0
        %1748 = vmatpush1.xpose.msra.mxu0 0.0
        %1749 = vmatprep.subr.mxu0 0.0
        %1750 = vmatpush1.xpose.msra.mxu0 0.0
        %1751 = vmatprep.subr.mxu0 0.0
        %1752 = vmatpush1.xpose.msra.mxu0 0.0
        %1753 = vmatprep.subr.mxu0 0.0
        %1754 = vmatpush1.xpose.msra.mxu0 0.0
        %1755 = vmatprep.subr.mxu0 0.0
        %1756 = vmatpush1.xpose.msra.mxu0 0.0
        %1757 = vmatprep.subr.mxu0 0.0
        %1758 = vmatpush1.xpose.msra.mxu0 0.0
        %1759 = vmatprep.subr.mxu0 0.0
        %1760 = vmatpush1.xpose.msra.mxu0 0.0
        %1761 = vmatprep.subr.mxu0 0.0
        %1762 = vmatpush1.xpose.msra.mxu0 0.0
        %1763 = vmatprep.subr.mxu0 0.0
        %1764 = vmatpush1.xpose.msra.mxu0 0.0
        %1765 = vmatprep.subr.mxu0 0.0
        %1766 = vmatpush1.xpose.msra.mxu0 0.0
        %1767 = vmatprep.subr.mxu0 0.0
        %1768 = vmatpush1.xpose.msra.mxu0 0.0
        %1769 = vmatprep.subr.mxu0 0.0
        %1770 = vmatpush1.xpose.msra.mxu0 0.0
        %1771 = vmatprep.subr.mxu0 0.0
        %1772 = vmatpush1.xpose.msra.mxu0 0.0
        %1773 = vmatprep.subr.mxu0 0.0
        %1774 = vmatpush1.xpose.msra.mxu0 0.0
        %1775 = vmatprep.subr.mxu0 0.0
        %1776 = vmatpush1.xpose.msra.mxu0 0.0
        %1777 = vmatprep.subr.mxu0 0.0
        %1778 = vmatpush1.xpose.msra.mxu0 0.0
        %1779 = vmatprep.subr.mxu0 0.0
        %1780 = vmatpush1.xpose.msra.mxu0 0.0
        %1781 = vmatprep.subr.mxu0 0.0
        %1782 = vmatpush1.xpose.msra.mxu0 0.0
        %1783 = vmatprep.mubr.f32.mxu0 0.0
        %1784 = vmatmul.mubr.f32.gmra.mrb[0].mxu0 %v1703
        %v1785 = vpop.f32.mrb[0].mxu0
        %v1786 = vadd.f32 0.0, %v1785
        %v1787 = vpop.f32.mrb[0].mxu0
        %1788 = vmatprep.mubr.f32.mxu0 0.0
        %1789 = vmatmul.mubr.f32.gmra.mrb[0].mxu0 %v1705
        %v1790 = vpop.f32.mrb[0].mxu0
        %v1791 = vadd.f32 0.0, %v1790
        %v1792 = vpop.f32.mrb[0].mxu0
        %1793 = vmatprep.mubr.f32.mxu0 0.0
        %1794 = vmatmul.mubr.f32.gmra.mrb[0].mxu0 %v1707
        %v1795 = vpop.f32.mrb[0].mxu0
        %v1796 = vadd.f32 0.0, %v1795
        %v1797 = vpop.f32.mrb[0].mxu0
        %1798 = vmatprep.mubr.f32.mxu0 0.0
        %1799 = vmatmul.mubr.f32.gmra.mrb[0].mxu0 %v1709
        %v1800 = vpop.f32.mrb[0].mxu0
        %v1801 = vadd.f32 0.0, %v1800
        %v1802 = vpop.f32.mrb[0].mxu0
        %1803 = vdwg.mxu0
        %v1804 = vmul.f32 %v1786, 0.17677669
        %v1805 = vmul.f32 %v1791, 0.17677669
        %v1806 = vmul.f32 %v1796, 0.17677669
        %v1807 = vmul.f32 %v1801, 0.17677669
        %v1808 = vsel %vm880, %v1804, -inf
        %1809 = vmax.xlane.f32.xlu0 %v1808
        %v1810 = vpop.xlane.xlu0 %1809
        %v1811 = vsel %vm880, %v1805, -inf
        %1812 = vmax.xlane.f32.xlu0 %v1811
        %v1813 = vpop.xlane.xlu0 %1812
        %v1814 = vsel %vm880, %v1806, -inf
        %1815 = vmax.xlane.f32.xlu0 %v1814
        %v1816 = vpop.xlane.xlu0 %1815
        %v1817 = vsel %vm880, %v1807, -inf
        %1818 = vmax.xlane.f32.xlu0 %v1817
        %v1819 = vpop.xlane.xlu0 %1818
        %v1820 = vsub.f32 %v1804, %v1810
        %v1821 = vsub.f32 %v1805, %v1813
        %v1822 = vsub.f32 %v1806, %v1816
        %v1823 = vsub.f32 %v1807, %v1819
        %v1824 = vmul.f32 %v1820, 1.442695
        %v1825 = vpow.pop %v1824
        %v1826 = vmul.f32 %v1821, 1.442695
        %v1827 = vpow.pop %v1826
        %v1828 = vmul.f32 %v1822, 1.442695
        %v1829 = vpow.pop %v1828
        %v1830 = vmul.f32 %v1823, 1.442695
        %v1831 = vpow.pop %v1830
        %v1832 = vsel %vm880, %v1825, 0.0
        %1833 = vadd.xlane.f32.xlu0 %v1832
        %v1834 = vpop.xlane.xlu0 %1833
        %v1835 = vsel %vm880, %v1827, 0.0
        %1836 = vadd.xlane.f32.xlu0 %v1835
        %v1837 = vpop.xlane.xlu0 %1836
        %v1838 = vsel %vm880, %v1829, 0.0
        %1839 = vadd.xlane.f32.xlu0 %v1838
        %v1840 = vpop.xlane.xlu0 %1839
        %v1841 = vsel %vm880, %v1831, 0.0
        %1842 = vadd.xlane.f32.xlu0 %v1841
        %v1843 = vpop.xlane.xlu0 %1842
        %v1844 = vrcp.pop %v1834
        %v1845 = vmul.f32 %v1825, %v1844
        %v1846 = vrcp.pop %v1837
        %v1847 = vmul.f32 %v1827, %v1846
        %v1848 = vrcp.pop %v1840
        %v1849 = vmul.f32 %v1829, %v1848
        %v1850 = vrcp.pop %v1843
        %v1851 = vmul.f32 %v1831, %v1850
        %1852 = vrot.lane.b32.xlu0 %v862, 32
        %v1853 = vpop.permute.xlu0 %1852
        %1854 = vrot.lane.b32.xlu0 %v867, 32
        %v1855 = vpop.permute.xlu0 %1854
        %1856 = vrot.lane.b32.xlu0 %v872, 32
        %v1857 = vpop.permute.xlu0 %1856
        %1858 = vrot.lane.b32.xlu0 %v877, 32
        %v1859 = vpop.permute.xlu0 %1858
        %v1865 = vsel %vm880, %v1845, 0
        %v1868 = vsel %vm880, %v1847, 0
        %v1871 = vsel %vm880, %v1849, 0
        %v1874 = vsel %vm880, %v1851, 0
        %1876 = vmatprep.subr.mxu0 0.0
        %1877 = vmatpush1.msra.mxu0 %v1853
        %1878 = vmatprep.subr.mxu0 0.0
        %1879 = vmatpush1.msra.mxu0 %v1855
        %1880 = vmatprep.subr.mxu0 0.0
        %1881 = vmatpush1.msra.mxu0 %v1857
        %1882 = vmatprep.subr.mxu0 0.0
        %1883 = vmatpush1.msra.mxu0 %v1859
        %1884 = vmatprep.subr.mxu0 0.0
        %1885 = vmatpush1.msra.mxu0 0.0
        %1886 = vmatprep.subr.mxu0 0.0
        %1887 = vmatpush1.msra.mxu0 0.0
        %1888 = vmatprep.subr.mxu0 0.0
        %1889 = vmatpush1.msra.mxu0 0.0
        %1890 = vmatprep.subr.mxu0 0.0
        %1891 = vmatpush1.msra.mxu0 0.0
        %1892 = vmatprep.subr.mxu0 0.0
        %1893 = vmatpush1.msra.mxu0 0.0
        %1894 = vmatprep.subr.mxu0 0.0
        %1895 = vmatpush1.msra.mxu0 0.0
        %1896 = vmatprep.subr.mxu0 0.0
        %1897 = vmatpush1.msra.mxu0 0.0
        %1898 = vmatprep.subr.mxu0 0.0
        %1899 = vmatpush1.msra.mxu0 0.0
        %1900 = vmatprep.subr.mxu0 0.0
        %1901 = vmatpush1.msra.mxu0 0.0
        %1902 = vmatprep.subr.mxu0 0.0
        %1903 = vmatpush1.msra.mxu0 0.0
        %1904 = vmatprep.subr.mxu0 0.0
        %1905 = vmatpush1.msra.mxu0 0.0
        %1906 = vmatprep.subr.mxu0 0.0
        %1907 = vmatpush1.msra.mxu0 0.0
        %1908 = vmatprep.subr.mxu0 0.0
        %1909 = vmatpush1.msra.mxu0 0.0
        %1910 = vmatprep.subr.mxu0 0.0
        %1911 = vmatpush1.msra.mxu0 0.0
        %1912 = vmatprep.subr.mxu0 0.0
        %1913 = vmatpush1.msra.mxu0 0.0
        %1914 = vmatprep.subr.mxu0 0.0
        %1915 = vmatpush1.msra.mxu0 0.0
        %1916 = vmatprep.subr.mxu0 0.0
        %1917 = vmatpush1.msra.mxu0 0.0
        %1918 = vmatprep.subr.mxu0 0.0
        %1919 = vmatpush1.msra.mxu0 0.0
        %1920 = vmatprep.subr.mxu0 0.0
        %1921 = vmatpush1.msra.mxu0 0.0
        %1922 = vmatprep.subr.mxu0 0.0
        %1923 = vmatpush1.msra.mxu0 0.0
        %1924 = vmatprep.subr.mxu0 0.0
        %1925 = vmatpush1.msra.mxu0 0.0
        %1926 = vmatprep.subr.mxu0 0.0
        %1927 = vmatpush1.msra.mxu0 0.0
        %1928 = vmatprep.subr.mxu0 0.0
        %1929 = vmatpush1.msra.mxu0 0.0
        %1930 = vmatprep.subr.mxu0 0.0
        %1931 = vmatpush1.msra.mxu0 0.0
        %1932 = vmatprep.subr.mxu0 0.0
        %1933 = vmatpush1.msra.mxu0 0.0
        %1934 = vmatprep.subr.mxu0 0.0
        %1935 = vmatpush1.msra.mxu0 0.0
        %1936 = vmatprep.subr.mxu0 0.0
        %1937 = vmatpush1.msra.mxu0 0.0
        %1938 = vmatprep.subr.mxu0 0.0
        %1939 = vmatpush1.msra.mxu0 0.0
        %1940 = vmatprep.mubr.f32.mxu0 0.0
        %1941 = vmatmul.mubr.f32.gmra.mrb[0].mxu0 %v1865
        %v1942 = vpop.f32.mrb[0].mxu0
        %v1943 = vadd.f32 0.0, %v1942
        %v1944 = vpop.f32.mrb[0].mxu0
        %1945 = vmatprep.mubr.f32.mxu0 0.0
        %1946 = vmatmul.mubr.f32.gmra.mrb[0].mxu0 %v1868
        %v1947 = vpop.f32.mrb[0].mxu0
        %v1948 = vadd.f32 0.0, %v1947
        %v1949 = vpop.f32.mrb[0].mxu0
        %1950 = vmatprep.mubr.f32.mxu0 0.0
        %1951 = vmatmul.mubr.f32.gmra.mrb[0].mxu0 %v1871
        %v1952 = vpop.f32.mrb[0].mxu0
        %v1953 = vadd.f32 0.0, %v1952
        %v1954 = vpop.f32.mrb[0].mxu0
        %1955 = vmatprep.mubr.f32.mxu0 0.0
        %1956 = vmatmul.mubr.f32.gmra.mrb[0].mxu0 %v1874
        %v1957 = vpop.f32.mrb[0].mxu0
        %v1958 = vadd.f32 0.0, %v1957
        %v1959 = vpop.f32.mrb[0].mxu0
        %1960 = vdwg.mxu0
        %1965 = vrot.lane.b32.xlu0 %v1395, 32
        %v1966 = vpop.permute.xlu0 %1965
        %1967 = vrot.lane.b32.xlu0 %v1400, 32
        %v1968 = vpop.permute.xlu0 %1967
        %1969 = vrot.lane.b32.xlu0 %v1405, 32
        %v1970 = vpop.permute.xlu0 %1969
        %1971 = vrot.lane.b32.xlu0 %v1410, 32
        %v1972 = vpop.permute.xlu0 %1971
        %1981 = vrot.lane.b32.xlu0 %v1669, 64
        %v1982 = vpop.permute.xlu0 %1981
        %1983 = vrot.lane.b32.xlu0 %v1674, 64
        %v1984 = vpop.permute.xlu0 %1983
        %1985 = vrot.lane.b32.xlu0 %v1679, 64
        %v1986 = vpop.permute.xlu0 %1985
        %1987 = vrot.lane.b32.xlu0 %v1684, 64
        %v1988 = vpop.permute.xlu0 %1987
        %1997 = vrot.lane.b32.xlu0 %v1943, 96
        %v1998 = vpop.permute.xlu0 %1997
        %1999 = vrot.lane.b32.xlu0 %v1948, 96
        %v2000 = vpop.permute.xlu0 %1999
        %2001 = vrot.lane.b32.xlu0 %v1953, 96
        %v2002 = vpop.permute.xlu0 %2001
        %2003 = vrot.lane.b32.xlu0 %v1958, 96
        %v2004 = vpop.permute.xlu0 %2003
        %v2009 = vsel %vm880, %v1117, %v1966
        %v2010 = vsel %vm880, %v1122, %v1968
        %v2011 = vsel %vm880, %v1127, %v1970
        %v2012 = vsel %vm880, %v1132, %v1972
        %vm2013 = vcmask 523264
        %v2014 = vsel %vm2013, %v2009, %v1982
        %v2015 = vsel %vm2013, %v2010, %v1984
        %v2016 = vsel %vm2013, %v2011, %v1986
        %v2017 = vsel %vm2013, %v2012, %v1988
        %vm2018 = vcmask 785408
        %v2019 = vsel %vm2018, %v2014, %v1998
        %v2020 = vsel %vm2018, %v2015, %v2000
        %v2021 = vsel %vm2018, %v2016, %v2002
        %v2022 = vsel %vm2018, %v2017, %v2004
        %v2023 = vld [vmem:[#allocation10] sm:$0xff]
        %v2024 = vld [vmem:[#allocation10 + $0x8] sm:$0xff]
        %v2025 = vld [vmem:[#allocation10 + $0x10] sm:$0xff]
        %v2026 = vld [vmem:[#allocation10 + $0x18] sm:$0xff]
        %v2027 = vld [vmem:[#allocation10 + $0x20] sm:$0xff]
        %v2028 = vld [vmem:[#allocation10 + $0x28] sm:$0xff]
        %v2029 = vld [vmem:[#allocation10 + $0x30] sm:$0xff]
        %v2030 = vld [vmem:[#allocation10 + $0x38] sm:$0xff]
        %v2031 = vld [vmem:[#allocation10 + $0x40] sm:$0xff]
        %v2032 = vld [vmem:[#allocation10 + $0x48] sm:$0xff]
        %v2033 = vld [vmem:[#allocation10 + $0x50] sm:$0xff]
        %v2034 = vld [vmem:[#allocation10 + $0x58] sm:$0xff]
        %v2035 = vld [vmem:[#allocation10 + $0x60] sm:$0xff]
        %v2036 = vld [vmem:[#allocation10 + $0x68] sm:$0xff]
        %v2037 = vld [vmem:[#allocation10 + $0x70] sm:$0xff]
        %v2038 = vld [vmem:[#allocation10 + $0x78] sm:$0xff]
        %v2039 = vld [vmem:[%s6] sm:$0x1]
        %v2041 = vlaneseq
        %v2042 = vshrl.u32 %v2041, 7
        %v2043 = vsub.s32 0, %v2042
        %v2044 = vrot.slane %v2039, %v2043
        %2046 = vmatprep.subr.mxu0 0.0
        %2047 = vmatpush1.msra.mxu0 %v2023
        %2048 = vmatprep.subr.mxu0 0.0
        %2049 = vmatpush1.msra.mxu0 %v2024
        %2050 = vmatprep.subr.mxu0 0.0
        %2051 = vmatpush1.msra.mxu0 %v2025
        %2052 = vmatprep.subr.mxu0 0.0
        %2053 = vmatpush1.msra.mxu0 %v2026
        %2054 = vmatprep.subr.mxu0 0.0
        %2055 = vmatpush1.msra.mxu0 %v2027
        %2056 = vmatprep.subr.mxu0 0.0
        %2057 = vmatpush1.msra.mxu0 %v2028
        %2058 = vmatprep.subr.mxu0 0.0
        %2059 = vmatpush1.msra.mxu0 %v2029
        %2060 = vmatprep.subr.mxu0 0.0
        %2061 = vmatpush1.msra.mxu0 %v2030
        %2062 = vmatprep.subr.mxu0 0.0
        %2063 = vmatpush1.msra.mxu0 %v2031
        %2064 = vmatprep.subr.mxu0 0.0
        %2065 = vmatpush1.msra.mxu0 %v2032
        %2066 = vmatprep.subr.mxu0 0.0
        %2067 = vmatpush1.msra.mxu0 %v2033
        %2068 = vmatprep.subr.mxu0 0.0
        %2069 = vmatpush1.msra.mxu0 %v2034
        %2070 = vmatprep.subr.mxu0 0.0
        %2071 = vmatpush1.msra.mxu0 %v2035
        %2072 = vmatprep.subr.mxu0 0.0
        %2073 = vmatpush1.msra.mxu0 %v2036
        %2074 = vmatprep.subr.mxu0 0.0
        %2075 = vmatpush1.msra.mxu0 %v2037
        %2076 = vmatprep.subr.mxu0 0.0
        %2077 = vmatpush1.msra.mxu0 %v2038
        %2078 = vmatprep.subr.mxu0 0.0
        %2079 = vmatpush1.msra.mxu0 0.0
        %2080 = vmatprep.subr.mxu0 0.0
        %2081 = vmatpush1.msra.mxu0 0.0
        %2082 = vmatprep.subr.mxu0 0.0
        %2083 = vmatpush1.msra.mxu0 0.0
        %2084 = vmatprep.subr.mxu0 0.0
        %2085 = vmatpush1.msra.mxu0 0.0
        %2086 = vmatprep.subr.mxu0 0.0
        %2087 = vmatpush1.msra.mxu0 0.0
        %2088 = vmatprep.subr.mxu0 0.0
        %2089 = vmatpush1.msra.mxu0 0.0
        %2090 = vmatprep.subr.mxu0 0.0
        %2091 = vmatpush1.msra.mxu0 0.0
        %2092 = vmatprep.subr.mxu0 0.0
        %2093 = vmatpush1.msra.mxu0 0.0
        %2094 = vmatprep.subr.mxu0 0.0
        %2095 = vmatpush1.msra.mxu0 0.0
        %2096 = vmatprep.subr.mxu0 0.0
        %2097 = vmatpush1.msra.mxu0 0.0
        %2098 = vmatprep.subr.mxu0 0.0
        %2099 = vmatpush1.msra.mxu0 0.0
        %2100 = vmatprep.subr.mxu0 0.0
        %2101 = vmatpush1.msra.mxu0 0.0
        %2102 = vmatprep.subr.mxu0 0.0
        %2103 = vmatpush1.msra.mxu0 0.0
        %2104 = vmatprep.subr.mxu0 0.0
        %2105 = vmatpush1.msra.mxu0 0.0
        %2106 = vmatprep.subr.mxu0 0.0
        %2107 = vmatpush1.msra.mxu0 0.0
        %2108 = vmatprep.subr.mxu0 0.0
        %2109 = vmatpush1.msra.mxu0 0.0
        %2110 = vmatprep.mubr.f32.mxu0 0.0
        %2111 = vmatmul.mubr.f32.gmra.mrb[0].mxu0 %v2019
        %v2112 = vpop.f32.mrb[0].mxu0
        %v2113 = vadd.f32 %v2044, %v2112
        %v2114 = vpop.f32.mrb[0].mxu0
        %2115 = vmatprep.mubr.f32.mxu0 0.0
        %2116 = vmatmul.mubr.f32.gmra.mrb[0].mxu0 %v2020
        %v2117 = vpop.f32.mrb[0].mxu0
        %v2118 = vadd.f32 %v2044, %v2117
        %v2119 = vpop.f32.mrb[0].mxu0
        %2120 = vmatprep.mubr.f32.mxu0 0.0
        %2121 = vmatmul.mubr.f32.gmra.mrb[0].mxu0 %v2021
        %v2122 = vpop.f32.mrb[0].mxu0
        %v2123 = vadd.f32 %v2044, %v2122
        %v2124 = vpop.f32.mrb[0].mxu0
        %2125 = vmatprep.mubr.f32.mxu0 0.0
        %2126 = vmatmul.mubr.f32.gmra.mrb[0].mxu0 %v2022
        %v2127 = vpop.f32.mrb[0].mxu0
        %v2128 = vadd.f32 %v2044, %v2127
        %v2129 = vpop.f32.mrb[0].mxu0
        %2130 = vdwg.mxu0
        %v2131 = vadd.f32 %v542, %v2113
        %v2132 = vadd.f32 %v543, %v2118
        %v2133 = vadd.f32 %v544, %v2123
        %v2134 = vadd.f32 %v545, %v2128
        %v2135 = vld [vmem:[%s7] sm:$0x1]
        %v2136 = vld [vmem:[%s8] sm:$0x1]
        %2137 = vadd.xlane.f32.xlu0 %v2131
        %v2138 = vpop.xlane.xlu0 %2137
        %2139 = vadd.xlane.f32.xlu0 %v2132
        %v2140 = vpop.xlane.xlu0 %2139
        %2141 = vadd.xlane.f32.xlu0 %v2133
        %v2142 = vpop.xlane.xlu0 %2141
        %2143 = vadd.xlane.f32.xlu0 %v2134
        %v2144 = vpop.xlane.xlu0 %2143
        %v2145 = vmul.f32 %v2138, %v556
        %v2146 = vmul.f32 %v2140, %v556
        %v2147 = vmul.f32 %v2142, %v556
        %v2148 = vmul.f32 %v2144, %v556
        %v2149 = vsub.f32 %v2131, %v2145
        %v2150 = vsub.f32 %v2132, %v2146
        %v2151 = vsub.f32 %v2133, %v2147
        %v2152 = vsub.f32 %v2134, %v2148
        %v2153 = vmul.f32 %v2149, %v2149
        %v2154 = vmul.f32 %v2150, %v2150
        %v2155 = vmul.f32 %v2151, %v2151
        %v2156 = vmul.f32 %v2152, %v2152
        %2157 = vadd.xlane.f32.xlu0 %v2153
        %v2158 = vpop.xlane.xlu0 %2157
        %2159 = vadd.xlane.f32.xlu0 %v2154
        %v2160 = vpop.xlane.xlu0 %2159
        %2161 = vadd.xlane.f32.xlu0 %v2155
        %v2162 = vpop.xlane.xlu0 %2161
        %2163 = vadd.xlane.f32.xlu0 %v2156
        %v2164 = vpop.xlane.xlu0 %2163
        %v2165 = vmul.f32 %v2158, %v556
        %v2166 = vmul.f32 %v2160, %v556
        %v2167 = vmul.f32 %v2162, %v556
        %v2168 = vmul.f32 %v2164, %v556
        %v2169 = vadd.f32 %v2165, 1e-05
        %v2170 = vadd.f32 %v2166, 1e-05
        %v2171 = vadd.f32 %v2167, 1e-05
        %v2172 = vadd.f32 %v2168, 1e-05
        %v2173 = vrsqrt.pop %v2169
        %v2174 = vmul.f32 %v2169, %v2173
        %vm2175 = vcmp.eq.f32.partialorder %v2169, inf
        %v2176 = vsel %vm2175, %v2169, %v2174
        %vm2177 = vcmp.eq.f32.partialorder %v2169, 0.0
        %v2178 = vand.u32 %v2169, 2147483648
        %v2179 = vsel %vm2177, %v2178, %v2176
        %v2180 = vrsqrt.pop %v2170
        %v2181 = vmul.f32 %v2170, %v2180
        %vm2182 = vcmp.eq.f32.partialorder %v2170, inf
        %v2183 = vsel %vm2182, %v2170, %v2181
        %vm2184 = vcmp.eq.f32.partialorder %v2170, 0.0
        %v2185 = vand.u32 %v2170, 2147483648
        %v2186 = vsel %vm2184, %v2185, %v2183
        %v2187 = vrsqrt.pop %v2171
        %v2188 = vmul.f32 %v2171, %v2187
        %vm2189 = vcmp.eq.f32.partialorder %v2171, inf
        %v2190 = vsel %vm2189, %v2171, %v2188
        %vm2191 = vcmp.eq.f32.partialorder %v2171, 0.0
        %v2192 = vand.u32 %v2171, 2147483648
        %v2193 = vsel %vm2191, %v2192, %v2190
        %v2194 = vrsqrt.pop %v2172
        %v2195 = vmul.f32 %v2172, %v2194
        %vm2196 = vcmp.eq.f32.partialorder %v2172, inf
        %v2197 = vsel %vm2196, %v2172, %v2195
        %vm2198 = vcmp.eq.f32.partialorder %v2172, 0.0
        %v2199 = vand.u32 %v2172, 2147483648
        %v2200 = vsel %vm2198, %v2199, %v2197
        %v2201 = vrcp.pop %v2179
        %v2202 = vmul.f32 %v2149, %v2201
        %v2203 = vrcp.pop %v2186
        %v2204 = vmul.f32 %v2150, %v2203
        %v2205 = vrcp.pop %v2193
        %v2206 = vmul.f32 %v2151, %v2205
        %v2207 = vrcp.pop %v2200
        %v2208 = vmul.f32 %v2152, %v2207
        %v2210 = vlaneseq
        %v2211 = vshrl.u32 %v2210, 7
        %v2212 = vsub.s32 0, %v2211
        %v2213 = vrot.slane %v2135, %v2212
        %v2215 = vmul.f32 %v2202, %v2213
        %v2216 = vmul.f32 %v2204, %v2213
        %v2217 = vmul.f32 %v2206, %v2213
        %v2218 = vmul.f32 %v2208, %v2213
        %v2220 = vlaneseq
        %v2221 = vshrl.u32 %v2220, 7
        %v2222 = vsub.s32 0, %v2221
        %v2223 = vrot.slane %v2136, %v2222
        %v2225 = vadd.f32 %v2215, %v2223
        %v2226 = vadd.f32 %v2216, %v2223
        %v2227 = vadd.f32 %v2217, %v2223
        %v2228 = vadd.f32 %v2218, %v2223
        %v2229 = vld [vmem:[#allocation11] sm:$0xff]
        %v2230 = vld [vmem:[#allocation11 + $0x8] sm:$0xff]
        %v2231 = vld [vmem:[#allocation11 + $0x10] sm:$0xff]
        %v2232 = vld [vmem:[#allocation11 + $0x18] sm:$0xff]
        %v2233 = vld [vmem:[#allocation11 + $0x20] sm:$0xff]
        %v2234 = vld [vmem:[#allocation11 + $0x28] sm:$0xff]
        %v2235 = vld [vmem:[#allocation11 + $0x30] sm:$0xff]
        %v2236 = vld [vmem:[#allocation11 + $0x38] sm:$0xff]
        %v2237 = vld [vmem:[#allocation11 + $0x40] sm:$0xff]
        %v2238 = vld [vmem:[#allocation11 + $0x48] sm:$0xff]
        %v2239 = vld [vmem:[#allocation11 + $0x50] sm:$0xff]
        %v2240 = vld [vmem:[#allocation11 + $0x58] sm:$0xff]
        %v2241 = vld [vmem:[#allocation11 + $0x60] sm:$0xff]
        %v2242 = vld [vmem:[#allocation11 + $0x68] sm:$0xff]
        %v2243 = vld [vmem:[#allocation11 + $0x70] sm:$0xff]
        %v2244 = vld [vmem:[#allocation11 + $0x78] sm:$0xff]
        %v2245 = vld [vmem:[#allocation11 + $0x80] sm:$0xff]
        %v2246 = vld [vmem:[#allocation11 + $0x88] sm:$0xff]
        %v2247 = vld [vmem:[#allocation11 + $0x90] sm:$0xff]
        %v2248 = vld [vmem:[#allocation11 + $0x98] sm:$0xff]
        %v2249 = vld [vmem:[#allocation11 + $0xa0] sm:$0xff]
        %v2250 = vld [vmem:[#allocation11 + $0xa8] sm:$0xff]
        %v2251 = vld [vmem:[#allocation11 + $0xb0] sm:$0xff]
        %v2252 = vld [vmem:[#allocation11 + $0xb8] sm:$0xff]
        %v2253 = vld [vmem:[#allocation11 + $0xc0] sm:$0xff]
        %v2254 = vld [vmem:[#allocation11 + $0xc8] sm:$0xff]
        %v2255 = vld [vmem:[#allocation11 + $0xd0] sm:$0xff]
        %v2256 = vld [vmem:[#allocation11 + $0xd8] sm:$0xff]
        %v2257 = vld [vmem:[#allocation11 + $0xe0] sm:$0xff]
        %v2258 = vld [vmem:[#allocation11 + $0xe8] sm:$0xff]
        %v2259 = vld [vmem:[#allocation11 + $0xf0] sm:$0xff]
        %v2260 = vld [vmem:[#allocation11 + $0xf8] sm:$0xff]
        %v2261 = vld [vmem:[#allocation11 + $0x100] sm:$0xff]
        %v2262 = vld [vmem:[#allocation11 + $0x108] sm:$0xff]
        %v2263 = vld [vmem:[#allocation11 + $0x110] sm:$0xff]
        %v2264 = vld [vmem:[#allocation11 + $0x118] sm:$0xff]
        %v2265 = vld [vmem:[#allocation11 + $0x120] sm:$0xff]
        %v2266 = vld [vmem:[#allocation11 + $0x128] sm:$0xff]
        %v2267 = vld [vmem:[#allocation11 + $0x130] sm:$0xff]
        %v2268 = vld [vmem:[#allocation11 + $0x138] sm:$0xff]
        %v2269 = vld [vmem:[#allocation11 + $0x140] sm:$0xff]
        %v2270 = vld [vmem:[#allocation11 + $0x148] sm:$0xff]
        %v2271 = vld [vmem:[#allocation11 + $0x150] sm:$0xff]
        %v2272 = vld [vmem:[#allocation11 + $0x158] sm:$0xff]
        %v2273 = vld [vmem:[#allocation11 + $0x160] sm:$0xff]
        %v2274 = vld [vmem:[#allocation11 + $0x168] sm:$0xff]
        %v2275 = vld [vmem:[#allocation11 + $0x170] sm:$0xff]
        %v2276 = vld [vmem:[#allocation11 + $0x178] sm:$0xff]
        %v2277 = vld [vmem:[#allocation11 + $0x180] sm:$0xff]
        %v2278 = vld [vmem:[#allocation11 + $0x188] sm:$0xff]
        %v2279 = vld [vmem:[#allocation11 + $0x190] sm:$0xff]
        %v2280 = vld [vmem:[#allocation11 + $0x198] sm:$0xff]
        %v2281 = vld [vmem:[#allocation11 + $0x1a0] sm:$0xff]
        %v2282 = vld [vmem:[#allocation11 + $0x1a8] sm:$0xff]
        %v2283 = vld [vmem:[#allocation11 + $0x1b0] sm:$0xff]
        %v2284 = vld [vmem:[#allocation11 + $0x1b8] sm:$0xff]
        %v2285 = vld [vmem:[#allocation11 + $0x1c0] sm:$0xff]
        %v2286 = vld [vmem:[#allocation11 + $0x1c8] sm:$0xff]
        %v2287 = vld [vmem:[#allocation11 + $0x1d0] sm:$0xff]
        %v2288 = vld [vmem:[#allocation11 + $0x1d8] sm:$0xff]
        %v2289 = vld [vmem:[#allocation11 + $0x1e0] sm:$0xff]
        %v2290 = vld [vmem:[#allocation11 + $0x1e8] sm:$0xff]
        %v2291 = vld [vmem:[#allocation11 + $0x1f0] sm:$0xff]
        %v2292 = vld [vmem:[#allocation11 + $0x1f8] sm:$0xff]
        %v2293 = vld [vmem:[%s10] sm:$0xf]
        %v2295 = vlaneseq
        %v2296 = vshrl.u32 %v2295, 7
        %v2297 = vsub.s32 0, %v2296
        %v2298 = vrot.slane %v2293, %v2297
        %v2299 = vlaneseq
        %v2300 = vshrl.u32 %v2299, 7
        %v2301 = vsub.s32 1, %v2300
        %v2302 = vrot.slane %v2293, %v2301
        %v2303 = vlaneseq
        %v2304 = vshrl.u32 %v2303, 7
        %v2305 = vsub.s32 2, %v2304
        %v2306 = vrot.slane %v2293, %v2305
        %v2307 = vlaneseq
        %v2308 = vshrl.u32 %v2307, 7
        %v2309 = vsub.s32 3, %v2308
        %v2310 = vrot.slane %v2293, %v2309
        %2315 = vmatprep.subr.mxu0 %v2230
        %2316 = vmatpush1.msra.mxu0 %v2229
        %2317 = vmatprep.subr.mxu0 %v2234
        %2318 = vmatpush1.msra.mxu0 %v2233
        %2319 = vmatprep.subr.mxu0 %v2238
        %2320 = vmatpush1.msra.mxu0 %v2237
        %2321 = vmatprep.subr.mxu0 %v2242
        %2322 = vmatpush1.msra.mxu0 %v2241
        %2323 = vmatprep.subr.mxu0 %v2246
        %2324 = vmatpush1.msra.mxu0 %v2245
        %2325 = vmatprep.subr.mxu0 %v2250
        %2326 = vmatpush1.msra.mxu0 %v2249
        %2327 = vmatprep.subr.mxu0 %v2254
        %2328 = vmatpush1.msra.mxu0 %v2253
        %2329 = vmatprep.subr.mxu0 %v2258
        %2330 = vmatpush1.msra.mxu0 %v2257
        %2331 = vmatprep.subr.mxu0 %v2262
        %2332 = vmatpush1.msra.mxu0 %v2261
        %2333 = vmatprep.subr.mxu0 %v2266
        %2334 = vmatpush1.msra.mxu0 %v2265
        %2335 = vmatprep.subr.mxu0 %v2270
        %2336 = vmatpush1.msra.mxu0 %v2269
        %2337 = vmatprep.subr.mxu0 %v2274
        %2338 = vmatpush1.msra.mxu0 %v2273
        %2339 = vmatprep.subr.mxu0 %v2278
        %2340 = vmatpush1.msra.mxu0 %v2277
        %2341 = vmatprep.subr.mxu0 %v2282
        %2342 = vmatpush1.msra.mxu0 %v2281
        %2343 = vmatprep.subr.mxu0 %v2286
        %2344 = vmatpush1.msra.mxu0 %v2285
        %2345 = vmatprep.subr.mxu0 %v2290
        %2346 = vmatpush1.msra.mxu0 %v2289
        %2347 = vmatprep.subr.mxu0 0.0
        %2348 = vmatpush1.msra.mxu0 0.0
        %2349 = vmatprep.subr.mxu0 0.0
        %2350 = vmatpush1.msra.mxu0 0.0
        %2351 = vmatprep.subr.mxu0 0.0
        %2352 = vmatpush1.msra.mxu0 0.0
        %2353 = vmatprep.subr.mxu0 0.0
        %2354 = vmatpush1.msra.mxu0 0.0
        %2355 = vmatprep.subr.mxu0 0.0
        %2356 = vmatpush1.msra.mxu0 0.0
        %2357 = vmatprep.subr.mxu0 0.0
        %2358 = vmatpush1.msra.mxu0 0.0
        %2359 = vmatprep.subr.mxu0 0.0
        %2360 = vmatpush1.msra.mxu0 0.0
        %2361 = vmatprep.subr.mxu0 0.0
        %2362 = vmatpush1.msra.mxu0 0.0
        %2363 = vmatprep.subr.mxu0 0.0
        %2364 = vmatpush1.msra.mxu0 0.0
        %2365 = vmatprep.subr.mxu0 0.0
        %2366 = vmatpush1.msra.mxu0 0.0
        %2367 = vmatprep.subr.mxu0 0.0
        %2368 = vmatpush1.msra.mxu0 0.0
        %2369 = vmatprep.subr.mxu0 0.0
        %2370 = vmatpush1.msra.mxu0 0.0
        %2371 = vmatprep.subr.mxu0 0.0
        %2372 = vmatpush1.msra.mxu0 0.0
        %2373 = vmatprep.subr.mxu0 0.0
        %2374 = vmatpush1.msra.mxu0 0.0
        %2375 = vmatprep.subr.mxu0 0.0
        %2376 = vmatpush1.msra.mxu0 0.0
        %2377 = vmatprep.subr.mxu0 0.0
        %2378 = vmatpush1.msra.mxu0 0.0
        %2379 = vmatprep.mubr.f32.mxu0 0.0
        %2380 = vmatmul.mubr.f32.gmra.mrb[0].mxu0 %v2225
        %v2381 = vpop.f32.mrb[0].mxu0
        %v2382 = vadd.f32 %v2298, %v2381
        %v2383 = vpop.f32.mrb[0].mxu0
        %v2384 = vadd.f32 %v2302, %v2383
        %2385 = vmatprep.mubr.f32.mxu0 0.0
        %2386 = vmatmul.mubr.f32.gmra.mrb[0].mxu0 %v2226
        %v2387 = vpop.f32.mrb[0].mxu0
        %v2388 = vadd.f32 %v2298, %v2387
        %v2389 = vpop.f32.mrb[0].mxu0
        %v2390 = vadd.f32 %v2302, %v2389
        %2391 = vmatprep.mubr.f32.mxu0 0.0
        %2392 = vmatmul.mubr.f32.gmra.mrb[0].mxu0 %v2227
        %v2393 = vpop.f32.mrb[0].mxu0
        %v2394 = vadd.f32 %v2298, %v2393
        %v2395 = vpop.f32.mrb[0].mxu0
        %v2396 = vadd.f32 %v2302, %v2395
        %2397 = vmatprep.mubr.f32.mxu0 0.0
        %2398 = vmatmul.mubr.f32.gmra.mrb[0].mxu0 %v2228
        %v2399 = vpop.f32.mrb[0].mxu0
        %v2400 = vadd.f32 %v2298, %v2399
        %v2401 = vpop.f32.mrb[0].mxu0
        %v2402 = vadd.f32 %v2302, %v2401
        %2403 = vdwg.mxu0
        %2404 = vmatprep.subr.mxu0 %v2232
        %2405 = vmatpush1.msra.mxu0 %v2231
        %2406 = vmatprep.subr.mxu0 %v2236
        %2407 = vmatpush1.msra.mxu0 %v2235
        %2408 = vmatprep.subr.mxu0 %v2240
        %2409 = vmatpush1.msra.mxu0 %v2239
        %2410 = vmatprep.subr.mxu0 %v2244
        %2411 = vmatpush1.msra.mxu0 %v2243
        %2412 = vmatprep.subr.mxu0 %v2248
        %2413 = vmatpush1.msra.mxu0 %v2247
        %2414 = vmatprep.subr.mxu0 %v2252
        %2415 = vmatpush1.msra.mxu0 %v2251
        %2416 = vmatprep.subr.mxu0 %v2256
        %2417 = vmatpush1.msra.mxu0 %v2255
        %2418 = vmatprep.subr.mxu0 %v2260
        %2419 = vmatpush1.msra.mxu0 %v2259
        %2420 = vmatprep.subr.mxu0 %v2264
        %2421 = vmatpush1.msra.mxu0 %v2263
        %2422 = vmatprep.subr.mxu0 %v2268
        %2423 = vmatpush1.msra.mxu0 %v2267
        %2424 = vmatprep.subr.mxu0 %v2272
        %2425 = vmatpush1.msra.mxu0 %v2271
        %2426 = vmatprep.subr.mxu0 %v2276
        %2427 = vmatpush1.msra.mxu0 %v2275
        %2428 = vmatprep.subr.mxu0 %v2280
        %2429 = vmatpush1.msra.mxu0 %v2279
        %2430 = vmatprep.subr.mxu0 %v2284
        %2431 = vmatpush1.msra.mxu0 %v2283
        %2432 = vmatprep.subr.mxu0 %v2288
        %2433 = vmatpush1.msra.mxu0 %v2287
        %2434 = vmatprep.subr.mxu0 %v2292
        %2435 = vmatpush1.msra.mxu0 %v2291
        %2436 = vmatprep.subr.mxu0 0.0
        %2437 = vmatpush1.msra.mxu0 0.0
        %2438 = vmatprep.subr.mxu0 0.0
        %2439 = vmatpush1.msra.mxu0 0.0
        %2440 = vmatprep.subr.mxu0 0.0
        %2441 = vmatpush1.msra.mxu0 0.0
        %2442 = vmatprep.subr.mxu0 0.0
        %2443 = vmatpush1.msra.mxu0 0.0
        %2444 = vmatprep.subr.mxu0 0.0
        %2445 = vmatpush1.msra.mxu0 0.0
        %2446 = vmatprep.subr.mxu0 0.0
        %2447 = vmatpush1.msra.mxu0 0.0
        %2448 = vmatprep.subr.mxu0 0.0
        %2449 = vmatpush1.msra.mxu0 0.0
        %2450 = vmatprep.subr.mxu0 0.0
        %2451 = vmatpush1.msra.mxu0 0.0
        %2452 = vmatprep.subr.mxu0 0.0
        %2453 = vmatpush1.msra.mxu0 0.0
        %2454 = vmatprep.subr.mxu0 0.0
        %2455 = vmatpush1.msra.mxu0 0.0
        %2456 = vmatprep.subr.mxu0 0.0
        %2457 = vmatpush1.msra.mxu0 0.0
        %2458 = vmatprep.subr.mxu0 0.0
        %2459 = vmatpush1.msra.mxu0 0.0
        %2460 = vmatprep.subr.mxu0 0.0
        %2461 = vmatpush1.msra.mxu0 0.0
        %2462 = vmatprep.subr.mxu0 0.0
        %2463 = vmatpush1.msra.mxu0 0.0
        %2464 = vmatprep.subr.mxu0 0.0
        %2465 = vmatpush1.msra.mxu0 0.0
        %2466 = vmatprep.subr.mxu0 0.0
        %2467 = vmatpush1.msra.mxu0 0.0
        %2468 = vmatprep.mubr.f32.mxu0 0.0
        %2469 = vmatmul.mubr.f32.gmra.mrb[0].mxu0 %v2225
        %v2470 = vpop.f32.mrb[0].mxu0
        %v2471 = vadd.f32 %v2306, %v2470
        %v2472 = vpop.f32.mrb[0].mxu0
        %v2473 = vadd.f32 %v2310, %v2472
        %2474 = vmatprep.mubr.f32.mxu0 0.0
        %2475 = vmatmul.mubr.f32.gmra.mrb[0].mxu0 %v2226
        %v2476 = vpop.f32.mrb[0].mxu0
        %v2477 = vadd.f32 %v2306, %v2476
        %v2478 = vpop.f32.mrb[0].mxu0
        %v2479 = vadd.f32 %v2310, %v2478
        %2480 = vmatprep.mubr.f32.mxu0 0.0
        %2481 = vmatmul.mubr.f32.gmra.mrb[0].mxu0 %v2227
        %v2482 = vpop.f32.mrb[0].mxu0
        %v2483 = vadd.f32 %v2306, %v2482
        %v2484 = vpop.f32.mrb[0].mxu0
        %v2485 = vadd.f32 %v2310, %v2484
        %2486 = vmatprep.mubr.f32.mxu0 0.0
        %2487 = vmatmul.mubr.f32.gmra.mrb[0].mxu0 %v2228
        %v2488 = vpop.f32.mrb[0].mxu0
        %v2489 = vadd.f32 %v2306, %v2488
        %v2490 = vpop.f32.mrb[0].mxu0
        %v2491 = vadd.f32 %v2310, %v2490
        %2492 = vdwg.mxu0
        %v2493 = vmul.f32 %v2382, 0.5
        %v2494 = vmul.f32 %v2384, 0.5
        %v2495 = vmul.f32 %v2471, 0.5
        %v2496 = vmul.f32 %v2473, 0.5
        %v2497 = vmul.f32 %v2388, 0.5
        %v2498 = vmul.f32 %v2390, 0.5
        %v2499 = vmul.f32 %v2477, 0.5
        %v2500 = vmul.f32 %v2479, 0.5
        %v2501 = vmul.f32 %v2394, 0.5
        %v2502 = vmul.f32 %v2396, 0.5
        %v2503 = vmul.f32 %v2483, 0.5
        %v2504 = vmul.f32 %v2485, 0.5
        %v2505 = vmul.f32 %v2400, 0.5
        %v2506 = vmul.f32 %v2402, 0.5
        %v2507 = vmul.f32 %v2489, 0.5
        %v2508 = vmul.f32 %v2491, 0.5
        %v2509 = vmul.f32 %v2382, 0.70710677
        %v2510 = vmul.f32 %v2384, 0.70710677
        %v2511 = vmul.f32 %v2471, 0.70710677
        %v2512 = vmul.f32 %v2473, 0.70710677
        %v2513 = vmul.f32 %v2388, 0.70710677
        %v2514 = vmul.f32 %v2390, 0.70710677
        %v2515 = vmul.f32 %v2477, 0.70710677
        %v2516 = vmul.f32 %v2479, 0.70710677
        %v2517 = vmul.f32 %v2394, 0.70710677
        %v2518 = vmul.f32 %v2396, 0.70710677
        %v2519 = vmul.f32 %v2483, 0.70710677
        %v2520 = vmul.f32 %v2485, 0.70710677
        %v2521 = vmul.f32 %v2400, 0.70710677
        %v2522 = vmul.f32 %v2402, 0.70710677
        %v2523 = vmul.f32 %v2489, 0.70710677
        %v2524 = vmul.f32 %v2491, 0.70710677
        %vm2525 = vcmp.ge.f32.partialorder %v2509, 0.0
        %vm2526 = vcmp.ge.f32.partialorder %v2510, 0.0
        %vm2527 = vcmp.ge.f32.partialorder %v2511, 0.0
        %vm2528 = vcmp.ge.f32.partialorder %v2512, 0.0
        %vm2529 = vcmp.ge.f32.partialorder %v2513, 0.0
        %vm2530 = vcmp.ge.f32.partialorder %v2514, 0.0
        %vm2531 = vcmp.ge.f32.partialorder %v2515, 0.0
        %vm2532 = vcmp.ge.f32.partialorder %v2516, 0.0
        %vm2533 = vcmp.ge.f32.partialorder %v2517, 0.0
        %vm2534 = vcmp.ge.f32.partialorder %v2518, 0.0
        %vm2535 = vcmp.ge.f32.partialorder %v2519, 0.0
        %vm2536 = vcmp.ge.f32.partialorder %v2520, 0.0
        %vm2537 = vcmp.ge.f32.partialorder %v2521, 0.0
        %vm2538 = vcmp.ge.f32.partialorder %v2522, 0.0
        %vm2539 = vcmp.ge.f32.partialorder %v2523, 0.0
        %vm2540 = vcmp.ge.f32.partialorder %v2524, 0.0
        %v2541 = vsel %vm2525, 1.0, -1.0
        %v2542 = vsel %vm2526, 1.0, -1.0
        %v2543 = vsel %vm2527, 1.0, -1.0
        %v2544 = vsel %vm2528, 1.0, -1.0
        %v2545 = vsel %vm2529, 1.0, -1.0
        %v2546 = vsel %vm2530, 1.0, -1.0
        %v2547 = vsel %vm2531, 1.0, -1.0
        %v2548 = vsel %vm2532, 1.0, -1.0
        %v2549 = vsel %vm2533, 1.0, -1.0
        %v2550 = vsel %vm2534, 1.0, -1.0
        %v2551 = vsel %vm2535, 1.0, -1.0
        %v2552 = vsel %vm2536, 1.0, -1.0
        %v2553 = vsel %vm2537, 1.0, -1.0
        %v2554 = vsel %vm2538, 1.0, -1.0
        %v2555 = vsel %vm2539, 1.0, -1.0
        %v2556 = vsel %vm2540, 1.0, -1.0
        %v2557 = vand.u32 2147483647, %v2509
        %v2558 = vand.u32 2147483647, %v2510
        %v2559 = vand.u32 2147483647, %v2511
        %v2560 = vand.u32 2147483647, %v2512
        %v2561 = vand.u32 2147483647, %v2513
        %v2562 = vand.u32 2147483647, %v2514
        %v2563 = vand.u32 2147483647, %v2515
        %v2564 = vand.u32 2147483647, %v2516
        %v2565 = vand.u32 2147483647, %v2517
        %v2566 = vand.u32 2147483647, %v2518
        %v2567 = vand.u32 2147483647, %v2519
        %v2568 = vand.u32 2147483647, %v2520
        %v2569 = vand.u32 2147483647, %v2521
        %v2570 = vand.u32 2147483647, %v2522
        %v2571 = vand.u32 2147483647, %v2523
        %v2572 = vand.u32 2147483647, %v2524
        %v2573 = vmul.f32 %v2557, 0.3275911
        %v2574 = vmul.f32 %v2558, 0.3275911
        %v2575 = vmul.f32 %v2559, 0.3275911
        %v2576 = vmul.f32 %v2560, 0.3275911
        %v2577 = vmul.f32 %v2561, 0.3275911
        %v2578 = vmul.f32 %v2562, 0.3275911
        %v2579 = vmul.f32 %v2563, 0.3275911
        %v2580 = vmul.f32 %v2564, 0.3275911
        %v2581 = vmul.f32 %v2565, 0.3275911
        %v2582 = vmul.f32 %v2566, 0.3275911
        %v2583 = vmul.f32 %v2567, 0.3275911
        %v2584 = vmul.f32 %v2568, 0.3275911
        %v2585 = vmul.f32 %v2569, 0.3275911
        %v2586 = vmul.f32 %v2570, 0.3275911
        %v2587 = vmul.f32 %v2571, 0.3275911
        %v2588 = vmul.f32 %v2572, 0.3275911
        %v2589 = vadd.f32 %v2573, 1.0
        %v2590 = vadd.f32 %v2574, 1.0
        %v2591 = vadd.f32 %v2575, 1.0
        %v2592 = vadd.f32 %v2576, 1.0
        %v2593 = vadd.f32 %v2577, 1.0
        %v2594 = vadd.f32 %v2578, 1.0
        %v2595 = vadd.f32 %v2579, 1.0
        %v2596 = vadd.f32 %v2580, 1.0
        %v2597 = vadd.f32 %v2581, 1.0
        %v2598 = vadd.f32 %v2582, 1.0
        %v2599 = vadd.f32 %v2583, 1.0
        %v2600 = vadd.f32 %v2584, 1.0
        %v2601 = vadd.f32 %v2585, 1.0
        %v2602 = vadd.f32 %v2586, 1.0
        %v2603 = vadd.f32 %v2587, 1.0
        %v2604 = vadd.f32 %v2588, 1.0
        %v2605 = vrcp.pop %v2589
        %v2606 = vmul.f32 1.0, %v2605
        %v2607 = vrcp.pop %v2590
        %v2608 = vmul.f32 1.0, %v2607
        %v2609 = vrcp.pop %v2591
        %v2610 = vmul.f32 1.0, %v2609
        %v2611 = vrcp.pop %v2592
        %v2612 = vmul.f32 1.0, %v2611
        %v2613 = vrcp.pop %v2593
        %v2614 = vmul.f32 1.0, %v2613
        %v2615 = vrcp.pop %v2594
        %v2616 = vmul.f32 1.0, %v2615
        %v2617 = vrcp.pop %v2595
        %v2618 = vmul.f32 1.0, %v2617
        %v2619 = vrcp.pop %v2596
        %v2620 = vmul.f32 1.0, %v2619
        %v2621 = vrcp.pop %v2597
        %v2622 = vmul.f32 1.0, %v2621
        %v2623 = vrcp.pop %v2598
        %v2624 = vmul.f32 1.0, %v2623
        %v2625 = vrcp.pop %v2599
        %v2626 = vmul.f32 1.0, %v2625
        %v2627 = vrcp.pop %v2600
        %v2628 = vmul.f32 1.0, %v2627
        %v2629 = vrcp.pop %v2601
        %v2630 = vmul.f32 1.0, %v2629
        %v2631 = vrcp.pop %v2602
        %v2632 = vmul.f32 1.0, %v2631
        %v2633 = vrcp.pop %v2603
        %v2634 = vmul.f32 1.0, %v2633
        %v2635 = vrcp.pop %v2604
        %v2636 = vmul.f32 1.0, %v2635
        %v2637 = vmul.f32 %v2606, 1.0614054
        %v2638 = vmul.f32 %v2608, 1.0614054
        %v2639 = vmul.f32 %v2610, 1.0614054
        %v2640 = vmul.f32 %v2612, 1.0614054
        %v2641 = vmul.f32 %v2614, 1.0614054
        %v2642 = vmul.f32 %v2616, 1.0614054
        %v2643 = vmul.f32 %v2618, 1.0614054
        %v2644 = vmul.f32 %v2620, 1.0614054
        %v2645 = vmul.f32 %v2622, 1.0614054
        %v2646 = vmul.f32 %v2624, 1.0614054
        %v2647 = vmul.f32 %v2626, 1.0614054
        %v2648 = vmul.f32 %v2628, 1.0614054
        %v2649 = vmul.f32 %v2630, 1.0614054
        %v2650 = vmul.f32 %v2632, 1.0614054
        %v2651 = vmul.f32 %v2634, 1.0614054
        %v2652 = vmul.f32 %v2636, 1.0614054
        %v2653 = vadd.f32 %v2637, -1.4531521
        %v2654 = vadd.f32 %v2638, -1.4531521
        %v2655 = vadd.f32 %v2639, -1.4531521
        %v2656 = vadd.f32 %v2640, -1.4531521
        %v2657 = vadd.f32 %v2641, -1.4531521
        %v2658 = vadd.f32 %v2642, -1.4531521
        %v2659 = vadd.f32 %v2643, -1.4531521
        %v2660 = vadd.f32 %v2644, -1.4531521
        %v2661 = vadd.f32 %v2645, -1.4531521
        %v2662 = vadd.f32 %v2646, -1.4531521
        %v2663 = vadd.f32 %v2647, -1.4531521
        %v2664 = vadd.f32 %v2648, -1.4531521
        %v2665 = vadd.f32 %v2649, -1.4531521
        %v2666 = vadd.f32 %v2650, -1.4531521
        %v2667 = vadd.f32 %v2651, -1.4531521
        %v2668 = vadd.f32 %v2652, -1.4531521
        %v2669 = vmul.f32 %v2653, %v2606
        %v2670 = vmul.f32 %v2654, %v2608
        %v2671 = vmul.f32 %v2655, %v2610
        %v2672 = vmul.f32 %v2656, %v2612
        %v2673 = vmul.f32 %v2657, %v2614
        %v2674 = vmul.f32 %v2658, %v2616
        %v2675 = vmul.f32 %v2659, %v2618
        %v2676 = vmul.f32 %v2660, %v2620
        %v2677 = vmul.f32 %v2661, %v2622
        %v2678 = vmul.f32 %v2662, %v2624
        %v2679 = vmul.f32 %v2663, %v2626
        %v2680 = vmul.f32 %v2664, %v2628
        %v2681 = vmul.f32 %v2665, %v2630
        %v2682 = vmul.f32 %v2666, %v2632
        %v2683 = vmul.f32 %v2667, %v2634
        %v2684 = vmul.f32 %v2668, %v2636
        %v2685 = vadd.f32 %v2669, 1.4214138
        %v2686 = vadd.f32 %v2670, 1.4214138
        %v2687 = vadd.f32 %v2671, 1.4214138
        %v2688 = vadd.f32 %v2672, 1.4214138
        %v2689 = vadd.f32 %v2673, 1.4214138
        %v2690 = vadd.f32 %v2674, 1.4214138
        %v2691 = vadd.f32 %v2675, 1.4214138
        %v2692 = vadd.f32 %v2676, 1.4214138
        %v2693 = vadd.f32 %v2677, 1.4214138
        %v2694 = vadd.f32 %v2678, 1.4214138
        %v2695 = vadd.f32 %v2679, 1.4214138
        %v2696 = vadd.f32 %v2680, 1.4214138
        %v2697 = vadd.f32 %v2681, 1.4214138
        %v2698 = vadd.f32 %v2682, 1.4214138
        %v2699 = vadd.f32 %v2683, 1.4214138
        %v2700 = vadd.f32 %v2684, 1.4214138
        %v2701 = vmul.f32 %v2685, %v2606
        %v2702 = vmul.f32 %v2686, %v2608
        %v2703 = vmul.f32 %v2687, %v2610
        %v2704 = vmul.f32 %v2688, %v2612
        %v2705 = vmul.f32 %v2689, %v2614
        %v2706 = vmul.f32 %v2690, %v2616
        %v2707 = vmul.f32 %v2691, %v2618
        %v2708 = vmul.f32 %v2692, %v2620
        %v2709 = vmul.f32 %v2693, %v2622
        %v2710 = vmul.f32 %v2694, %v2624
        %v2711 = vmul.f32 %v2695, %v2626
        %v2712 = vmul.f32 %v2696, %v2628
        %v2713 = vmul.f32 %v2697, %v2630
        %v2714 = vmul.f32 %v2698, %v2632
        %v2715 = vmul.f32 %v2699, %v2634
        %v2716 = vmul.f32 %v2700, %v2636
        %v2717 = vadd.f32 %v2701, -0.28449672
        %v2718 = vadd.f32 %v2702, -0.28449672
        %v2719 = vadd.f32 %v2703, -0.28449672
        %v2720 = vadd.f32 %v2704, -0.28449672
        %v2721 = vadd.f32 %v2705, -0.28449672
        %v2722 = vadd.f32 %v2706, -0.28449672
        %v2723 = vadd.f32 %v2707, -0.28449672
        %v2724 = vadd.f32 %v2708, -0.28449672
        %v2725 = vadd.f32 %v2709, -0.28449672
        %v2726 = vadd.f32 %v2710, -0.28449672
        %v2727 = vadd.f32 %v2711, -0.28449672
        %v2728 = vadd.f32 %v2712, -0.28449672
        %v2729 = vadd.f32 %v2713, -0.28449672
        %v2730 = vadd.f32 %v2714, -0.28449672
        %v2731 = vadd.f32 %v2715, -0.28449672
        %v2732 = vadd.f32 %v2716, -0.28449672
        %v2733 = vmul.f32 %v2717, %v2606
        %v2734 = vmul.f32 %v2718, %v2608
        %v2735 = vmul.f32 %v2719, %v2610
        %v2736 = vmul.f32 %v2720, %v2612
        %v2737 = vmul.f32 %v2721, %v2614
        %v2738 = vmul.f32 %v2722, %v2616
        %v2739 = vmul.f32 %v2723, %v2618
        %v2740 = vmul.f32 %v2724, %v2620
        %v2741 = vmul.f32 %v2725, %v2622
        %v2742 = vmul.f32 %v2726, %v2624
        %v2743 = vmul.f32 %v2727, %v2626
        %v2744 = vmul.f32 %v2728, %v2628
        %v2745 = vmul.f32 %v2729, %v2630
        %v2746 = vmul.f32 %v2730, %v2632
        %v2747 = vmul.f32 %v2731, %v2634
        %v2748 = vmul.f32 %v2732, %v2636
        %v2749 = vadd.f32 %v2733, 0.2548296
        %v2750 = vadd.f32 %v2734, 0.2548296
        %v2751 = vadd.f32 %v2735, 0.2548296
        %v2752 = vadd.f32 %v2736, 0.2548296
        %v2753 = vadd.f32 %v2737, 0.2548296
        %v2754 = vadd.f32 %v2738, 0.2548296
        %v2755 = vadd.f32 %v2739, 0.2548296
        %v2756 = vadd.f32 %v2740, 0.2548296
        %v2757 = vadd.f32 %v2741, 0.2548296
        %v2758 = vadd.f32 %v2742, 0.2548296
        %v2759 = vadd.f32 %v2743, 0.2548296
        %v2760 = vadd.f32 %v2744, 0.2548296
        %v2761 = vadd.f32 %v2745, 0.2548296
        %v2762 = vadd.f32 %v2746, 0.2548296
        %v2763 = vadd.f32 %v2747, 0.2548296
        %v2764 = vadd.f32 %v2748, 0.2548296
        %v2765 = vmul.f32 %v2749, %v2606
        %v2766 = vmul.f32 %v2750, %v2608
        %v2767 = vmul.f32 %v2751, %v2610
        %v2768 = vmul.f32 %v2752, %v2612
        %v2769 = vmul.f32 %v2753, %v2614
        %v2770 = vmul.f32 %v2754, %v2616
        %v2771 = vmul.f32 %v2755, %v2618
        %v2772 = vmul.f32 %v2756, %v2620
        %v2773 = vmul.f32 %v2757, %v2622
        %v2774 = vmul.f32 %v2758, %v2624
        %v2775 = vmul.f32 %v2759, %v2626
        %v2776 = vmul.f32 %v2760, %v2628
        %v2777 = vmul.f32 %v2761, %v2630
        %v2778 = vmul.f32 %v2762, %v2632
        %v2779 = vmul.f32 %v2763, %v2634
        %v2780 = vmul.f32 %v2764, %v2636
        %v2781 = vsub.f32 0.0, %v2557
        %v2782 = vsub.f32 0.0, %v2558
        %v2783 = vsub.f32 0.0, %v2559
        %v2784 = vsub.f32 0.0, %v2560
        %v2785 = vsub.f32 0.0, %v2561
        %v2786 = vsub.f32 0.0, %v2562
        %v2787 = vsub.f32 0.0, %v2563
        %v2788 = vsub.f32 0.0, %v2564
        %v2789 = vsub.f32 0.0, %v2565
        %v2790 = vsub.f32 0.0, %v2566
        %v2791 = vsub.f32 0.0, %v2567
        %v2792 = vsub.f32 0.0, %v2568
        %v2793 = vsub.f32 0.0, %v2569
        %v2794 = vsub.f32 0.0, %v2570
        %v2795 = vsub.f32 0.0, %v2571
        %v2796 = vsub.f32 0.0, %v2572
        %v2797 = vmul.f32 %v2781, %v2557
        %v2798 = vmul.f32 %v2782, %v2558
        %v2799 = vmul.f32 %v2783, %v2559
        %v2800 = vmul.f32 %v2784, %v2560
        %v2801 = vmul.f32 %v2785, %v2561
        %v2802 = vmul.f32 %v2786, %v2562
        %v2803 = vmul.f32 %v2787, %v2563
        %v2804 = vmul.f32 %v2788, %v2564
        %v2805 = vmul.f32 %v2789, %v2565
        %v2806 = vmul.f32 %v2790, %v2566
        %v2807 = vmul.f32 %v2791, %v2567
        %v2808 = vmul.f32 %v2792, %v2568
        %v2809 = vmul.f32 %v2793, %v2569
        %v2810 = vmul.f32 %v2794, %v2570
        %v2811 = vmul.f32 %v2795, %v2571
        %v2812 = vmul.f32 %v2796, %v2572
        %v2813 = vmul.f32 %v2797, 1.442695
        %v2814 = vpow.pop %v2813
        %v2815 = vmul.f32 %v2798, 1.442695
        %v2816 = vpow.pop %v2815
        %v2817 = vmul.f32 %v2799, 1.442695
        %v2818 = vpow.pop %v2817
        %v2819 = vmul.f32 %v2800, 1.442695
        %v2820 = vpow.pop %v2819
        %v2821 = vmul.f32 %v2801, 1.442695
        %v2822 = vpow.pop %v2821
        %v2823 = vmul.f32 %v2802, 1.442695
        %v2824 = vpow.pop %v2823
        %v2825 = vmul.f32 %v2803, 1.442695
        %v2826 = vpow.pop %v2825
        %v2827 = vmul.f32 %v2804, 1.442695
        %v2828 = vpow.pop %v2827
        %v2829 = vmul.f32 %v2805, 1.442695
        %v2830 = vpow.pop %v2829
        %v2831 = vmul.f32 %v2806, 1.442695
        %v2832 = vpow.pop %v2831
        %v2833 = vmul.f32 %v2807, 1.442695
        %v2834 = vpow.pop %v2833
        %v2835 = vmul.f32 %v2808, 1.442695
        %v2836 = vpow.pop %v2835
        %v2837 = vmul.f32 %v2809, 1.442695
        %v2838 = vpow.pop %v2837
        %v2839 = vmul.f32 %v2810, 1.442695
        %v2840 = vpow.pop %v2839
        %v2841 = vmul.f32 %v2811, 1.442695
        %v2842 = vpow.pop %v2841
        %v2843 = vmul.f32 %v2812, 1.442695
        %v2844 = vpow.pop %v2843
        %v2845 = vmul.f32 %v2765, %v2814
        %v2846 = vmul.f32 %v2766, %v2816
        %v2847 = vmul.f32 %v2767, %v2818
        %v2848 = vmul.f32 %v2768, %v2820
        %v2849 = vmul.f32 %v2769, %v2822
        %v2850 = vmul.f32 %v2770, %v2824
        %v2851 = vmul.f32 %v2771, %v2826
        %v2852 = vmul.f32 %v2772, %v2828
        %v2853 = vmul.f32 %v2773, %v2830
        %v2854 = vmul.f32 %v2774, %v2832
        %v2855 = vmul.f32 %v2775, %v2834
        %v2856 = vmul.f32 %v2776, %v2836
        %v2857 = vmul.f32 %v2777, %v2838
        %v2858 = vmul.f32 %v2778, %v2840
        %v2859 = vmul.f32 %v2779, %v2842
        %v2860 = vmul.f32 %v2780, %v2844
        %v2861 = vsub.f32 1.0, %v2845
        %v2862 = vsub.f32 1.0, %v2846
        %v2863 = vsub.f32 1.0, %v2847
        %v2864 = vsub.f32 1.0, %v2848
        %v2865 = vsub.f32 1.0, %v2849
        %v2866 = vsub.f32 1.0, %v2850
        %v2867 = vsub.f32 1.0, %v2851
        %v2868 = vsub.f32 1.0, %v2852
        %v2869 = vsub.f32 1.0, %v2853
        %v2870 = vsub.f32 1.0, %v2854
        %v2871 = vsub.f32 1.0, %v2855
        %v2872 = vsub.f32 1.0, %v2856
        %v2873 = vsub.f32 1.0, %v2857
        %v2874 = vsub.f32 1.0, %v2858
        %v2875 = vsub.f32 1.0, %v2859
        %v2876 = vsub.f32 1.0, %v2860
        %v2877 = vmul.f32 %v2541, %v2861
        %v2878 = vmul.f32 %v2542, %v2862
        %v2879 = vmul.f32 %v2543, %v2863
        %v2880 = vmul.f32 %v2544, %v2864
        %v2881 = vmul.f32 %v2545, %v2865
        %v2882 = vmul.f32 %v2546, %v2866
        %v2883 = vmul.f32 %v2547, %v2867
        %v2884 = vmul.f32 %v2548, %v2868
        %v2885 = vmul.f32 %v2549, %v2869
        %v2886 = vmul.f32 %v2550, %v2870
        %v2887 = vmul.f32 %v2551, %v2871
        %v2888 = vmul.f32 %v2552, %v2872
        %v2889 = vmul.f32 %v2553, %v2873
        %v2890 = vmul.f32 %v2554, %v2874
        %v2891 = vmul.f32 %v2555, %v2875
        %v2892 = vmul.f32 %v2556, %v2876
        %v2893 = vadd.f32 %v2877, 1.0
        %v2894 = vadd.f32 %v2878, 1.0
        %v2895 = vadd.f32 %v2879, 1.0
        %v2896 = vadd.f32 %v2880, 1.0
        %v2897 = vadd.f32 %v2881, 1.0
        %v2898 = vadd.f32 %v2882, 1.0
        %v2899 = vadd.f32 %v2883, 1.0
        %v2900 = vadd.f32 %v2884, 1.0
        %v2901 = vadd.f32 %v2885, 1.0
        %v2902 = vadd.f32 %v2886, 1.0
        %v2903 = vadd.f32 %v2887, 1.0
        %v2904 = vadd.f32 %v2888, 1.0
        %v2905 = vadd.f32 %v2889, 1.0
        %v2906 = vadd.f32 %v2890, 1.0
        %v2907 = vadd.f32 %v2891, 1.0
        %v2908 = vadd.f32 %v2892, 1.0
        %v2909 = vmul.f32 %v2493, %v2893
        %v2910 = vmul.f32 %v2494, %v2894
        %v2911 = vmul.f32 %v2495, %v2895
        %v2912 = vmul.f32 %v2496, %v2896
        %v2913 = vmul.f32 %v2497, %v2897
        %v2914 = vmul.f32 %v2498, %v2898
        %v2915 = vmul.f32 %v2499, %v2899
        %v2916 = vmul.f32 %v2500, %v2900
        %v2917 = vmul.f32 %v2501, %v2901
        %v2918 = vmul.f32 %v2502, %v2902
        %v2919 = vmul.f32 %v2503, %v2903
        %v2920 = vmul.f32 %v2504, %v2904
        %v2921 = vmul.f32 %v2505, %v2905
        %v2922 = vmul.f32 %v2506, %v2906
        %v2923 = vmul.f32 %v2507, %v2907
        %v2924 = vmul.f32 %v2508, %v2908
        %v2925 = vld [vmem:[#allocation13] sm:$0xff]
        %v2926 = vld [vmem:[#allocation13 + $0x8] sm:$0xff]
        %v2927 = vld [vmem:[#allocation13 + $0x10] sm:$0xff]
        %v2928 = vld [vmem:[#allocation13 + $0x18] sm:$0xff]
        %v2929 = vld [vmem:[#allocation13 + $0x20] sm:$0xff]
        %v2930 = vld [vmem:[#allocation13 + $0x28] sm:$0xff]
        %v2931 = vld [vmem:[#allocation13 + $0x30] sm:$0xff]
        %v2932 = vld [vmem:[#allocation13 + $0x38] sm:$0xff]
        %v2933 = vld [vmem:[#allocation13 + $0x40] sm:$0xff]
        %v2934 = vld [vmem:[#allocation13 + $0x48] sm:$0xff]
        %v2935 = vld [vmem:[#allocation13 + $0x50] sm:$0xff]
        %v2936 = vld [vmem:[#allocation13 + $0x58] sm:$0xff]
        %v2937 = vld [vmem:[#allocation13 + $0x60] sm:$0xff]
        %v2938 = vld [vmem:[#allocation13 + $0x68] sm:$0xff]
        %v2939 = vld [vmem:[#allocation13 + $0x70] sm:$0xff]
        %v2940 = vld [vmem:[#allocation13 + $0x78] sm:$0xff]
        %v2941 = vld [vmem:[#allocation13 + $0x80] sm:$0xff]
        %v2942 = vld [vmem:[#allocation13 + $0x88] sm:$0xff]
        %v2943 = vld [vmem:[#allocation13 + $0x90] sm:$0xff]
        %v2944 = vld [vmem:[#allocation13 + $0x98] sm:$0xff]
        %v2945 = vld [vmem:[#allocation13 + $0xa0] sm:$0xff]
        %v2946 = vld [vmem:[#allocation13 + $0xa8] sm:$0xff]
        %v2947 = vld [vmem:[#allocation13 + $0xb0] sm:$0xff]
        %v2948 = vld [vmem:[#allocation13 + $0xb8] sm:$0xff]
        %v2949 = vld [vmem:[#allocation13 + $0xc0] sm:$0xff]
        %v2950 = vld [vmem:[#allocation13 + $0xc8] sm:$0xff]
        %v2951 = vld [vmem:[#allocation13 + $0xd0] sm:$0xff]
        %v2952 = vld [vmem:[#allocation13 + $0xd8] sm:$0xff]
        %v2953 = vld [vmem:[#allocation13 + $0xe0] sm:$0xff]
        %v2954 = vld [vmem:[#allocation13 + $0xe8] sm:$0xff]
        %v2955 = vld [vmem:[#allocation13 + $0xf0] sm:$0xff]
        %v2956 = vld [vmem:[#allocation13 + $0xf8] sm:$0xff]
        %v2957 = vld [vmem:[#allocation13 + $0x100] sm:$0xff]
        %v2958 = vld [vmem:[#allocation13 + $0x108] sm:$0xff]
        %v2959 = vld [vmem:[#allocation13 + $0x110] sm:$0xff]
        %v2960 = vld [vmem:[#allocation13 + $0x118] sm:$0xff]
        %v2961 = vld [vmem:[#allocation13 + $0x120] sm:$0xff]
        %v2962 = vld [vmem:[#allocation13 + $0x128] sm:$0xff]
        %v2963 = vld [vmem:[#allocation13 + $0x130] sm:$0xff]
        %v2964 = vld [vmem:[#allocation13 + $0x138] sm:$0xff]
        %v2965 = vld [vmem:[#allocation13 + $0x140] sm:$0xff]
        %v2966 = vld [vmem:[#allocation13 + $0x148] sm:$0xff]
        %v2967 = vld [vmem:[#allocation13 + $0x150] sm:$0xff]
        %v2968 = vld [vmem:[#allocation13 + $0x158] sm:$0xff]
        %v2969 = vld [vmem:[#allocation13 + $0x160] sm:$0xff]
        %v2970 = vld [vmem:[#allocation13 + $0x168] sm:$0xff]
        %v2971 = vld [vmem:[#allocation13 + $0x170] sm:$0xff]
        %v2972 = vld [vmem:[#allocation13 + $0x178] sm:$0xff]
        %v2973 = vld [vmem:[#allocation13 + $0x180] sm:$0xff]
        %v2974 = vld [vmem:[#allocation13 + $0x188] sm:$0xff]
        %v2975 = vld [vmem:[#allocation13 + $0x190] sm:$0xff]
        %v2976 = vld [vmem:[#allocation13 + $0x198] sm:$0xff]
        %v2977 = vld [vmem:[#allocation13 + $0x1a0] sm:$0xff]
        %v2978 = vld [vmem:[#allocation13 + $0x1a8] sm:$0xff]
        %v2979 = vld [vmem:[#allocation13 + $0x1b0] sm:$0xff]
        %v2980 = vld [vmem:[#allocation13 + $0x1b8] sm:$0xff]
        %v2981 = vld [vmem:[#allocation13 + $0x1c0] sm:$0xff]
        %v2982 = vld [vmem:[#allocation13 + $0x1c8] sm:$0xff]
        %v2983 = vld [vmem:[#allocation13 + $0x1d0] sm:$0xff]
        %v2984 = vld [vmem:[#allocation13 + $0x1d8] sm:$0xff]
        %v2985 = vld [vmem:[#allocation13 + $0x1e0] sm:$0xff]
        %v2986 = vld [vmem:[#allocation13 + $0x1e8] sm:$0xff]
        %v2987 = vld [vmem:[#allocation13 + $0x1f0] sm:$0xff]
        %v2988 = vld [vmem:[#allocation13 + $0x1f8] sm:$0xff]
        %v2989 = vld [vmem:[%s12] sm:$0x1]
        %v2991 = vlaneseq
        %v2992 = vshrl.u32 %v2991, 7
        %v2993 = vsub.s32 0, %v2992
        %v2994 = vrot.slane %v2989, %v2993
        %2996 = vmatprep.subr.mxu0 0.0
        %2997 = vmatpush1.msra.mxu0 %v2925
        %2998 = vmatprep.subr.mxu0 0.0
        %2999 = vmatpush1.msra.mxu0 %v2926
        %3000 = vmatprep.subr.mxu0 0.0
        %3001 = vmatpush1.msra.mxu0 %v2927
        %3002 = vmatprep.subr.mxu0 0.0
        %3003 = vmatpush1.msra.mxu0 %v2928
        %3004 = vmatprep.subr.mxu0 0.0
        %3005 = vmatpush1.msra.mxu0 %v2929
        %3006 = vmatprep.subr.mxu0 0.0
        %3007 = vmatpush1.msra.mxu0 %v2930
        %3008 = vmatprep.subr.mxu0 0.0
        %3009 = vmatpush1.msra.mxu0 %v2931
        %3010 = vmatprep.subr.mxu0 0.0
        %3011 = vmatpush1.msra.mxu0 %v2932
        %3012 = vmatprep.subr.mxu0 0.0
        %3013 = vmatpush1.msra.mxu0 %v2933
        %3014 = vmatprep.subr.mxu0 0.0
        %3015 = vmatpush1.msra.mxu0 %v2934
        %3016 = vmatprep.subr.mxu0 0.0
        %3017 = vmatpush1.msra.mxu0 %v2935
        %3018 = vmatprep.subr.mxu0 0.0
        %3019 = vmatpush1.msra.mxu0 %v2936
        %3020 = vmatprep.subr.mxu0 0.0
        %3021 = vmatpush1.msra.mxu0 %v2937
        %3022 = vmatprep.subr.mxu0 0.0
        %3023 = vmatpush1.msra.mxu0 %v2938
        %3024 = vmatprep.subr.mxu0 0.0
        %3025 = vmatpush1.msra.mxu0 %v2939
        %3026 = vmatprep.subr.mxu0 0.0
        %3027 = vmatpush1.msra.mxu0 %v2940
        %3028 = vmatprep.subr.mxu0 0.0
        %3029 = vmatpush1.msra.mxu0 %v2941
        %3030 = vmatprep.subr.mxu0 0.0
        %3031 = vmatpush1.msra.mxu0 %v2942
        %3032 = vmatprep.subr.mxu0 0.0
        %3033 = vmatpush1.msra.mxu0 %v2943
        %3034 = vmatprep.subr.mxu0 0.0
        %3035 = vmatpush1.msra.mxu0 %v2944
        %3036 = vmatprep.subr.mxu0 0.0
        %3037 = vmatpush1.msra.mxu0 %v2945
        %3038 = vmatprep.subr.mxu0 0.0
        %3039 = vmatpush1.msra.mxu0 %v2946
        %3040 = vmatprep.subr.mxu0 0.0
        %3041 = vmatpush1.msra.mxu0 %v2947
        %3042 = vmatprep.subr.mxu0 0.0
        %3043 = vmatpush1.msra.mxu0 %v2948
        %3044 = vmatprep.subr.mxu0 0.0
        %3045 = vmatpush1.msra.mxu0 %v2949
        %3046 = vmatprep.subr.mxu0 0.0
        %3047 = vmatpush1.msra.mxu0 %v2950
        %3048 = vmatprep.subr.mxu0 0.0
        %3049 = vmatpush1.msra.mxu0 %v2951
        %3050 = vmatprep.subr.mxu0 0.0
        %3051 = vmatpush1.msra.mxu0 %v2952
        %3052 = vmatprep.subr.mxu0 0.0
        %3053 = vmatpush1.msra.mxu0 %v2953
        %3054 = vmatprep.subr.mxu0 0.0
        %3055 = vmatpush1.msra.mxu0 %v2954
        %3056 = vmatprep.subr.mxu0 0.0
        %3057 = vmatpush1.msra.mxu0 %v2955
        %3058 = vmatprep.subr.mxu0 0.0
        %3059 = vmatpush1.msra.mxu0 %v2956
        %3060 = vmatprep.mubr.f32.mxu0 %v2910
        %3061 = vmatmul.mubr.f32.gmra.mrb[0].mxu0 %v2909
        %v3062 = vpop.f32.mrb[0].mxu0
        %v3063 = vadd.f32 %v2994, %v3062
        %v3064 = vpop.f32.mrb[0].mxu0
        %3065 = vmatprep.mubr.f32.mxu0 %v2914
        %3066 = vmatmul.mubr.f32.gmra.mrb[0].mxu0 %v2913
        %v3067 = vpop.f32.mrb[0].mxu0
        %v3068 = vadd.f32 %v2994, %v3067
        %v3069 = vpop.f32.mrb[0].mxu0
        %3070 = vmatprep.mubr.f32.mxu0 %v2918
        %3071 = vmatmul.mubr.f32.gmra.mrb[0].mxu0 %v2917
        %v3072 = vpop.f32.mrb[0].mxu0
        %v3073 = vadd.f32 %v2994, %v3072
        %v3074 = vpop.f32.mrb[0].mxu0
        %3075 = vmatprep.mubr.f32.mxu0 %v2922
        %3076 = vmatmul.mubr.f32.gmra.mrb[0].mxu0 %v2921
        %v3077 = vpop.f32.mrb[0].mxu0
        %v3078 = vadd.f32 %v2994, %v3077
        %v3079 = vpop.f32.mrb[0].mxu0
        %3080 = vdwg.mxu0
        %3081 = vmatprep.subr.mxu0 0.0
        %3082 = vmatpush1.msra.mxu0 %v2957
        %3083 = vmatprep.subr.mxu0 0.0
        %3084 = vmatpush1.msra.mxu0 %v2958
        %3085 = vmatprep.subr.mxu0 0.0
        %3086 = vmatpush1.msra.mxu0 %v2959
        %3087 = vmatprep.subr.mxu0 0.0
        %3088 = vmatpush1.msra.mxu0 %v2960
        %3089 = vmatprep.subr.mxu0 0.0
        %3090 = vmatpush1.msra.mxu0 %v2961
        %3091 = vmatprep.subr.mxu0 0.0
        %3092 = vmatpush1.msra.mxu0 %v2962
        %3093 = vmatprep.subr.mxu0 0.0
        %3094 = vmatpush1.msra.mxu0 %v2963
        %3095 = vmatprep.subr.mxu0 0.0
        %3096 = vmatpush1.msra.mxu0 %v2964
        %3097 = vmatprep.subr.mxu0 0.0
        %3098 = vmatpush1.msra.mxu0 %v2965
        %3099 = vmatprep.subr.mxu0 0.0
        %3100 = vmatpush1.msra.mxu0 %v2966
        %3101 = vmatprep.subr.mxu0 0.0
        %3102 = vmatpush1.msra.mxu0 %v2967
        %3103 = vmatprep.subr.mxu0 0.0
        %3104 = vmatpush1.msra.mxu0 %v2968
        %3105 = vmatprep.subr.mxu0 0.0
        %3106 = vmatpush1.msra.mxu0 %v2969
        %3107 = vmatprep.subr.mxu0 0.0
        %3108 = vmatpush1.msra.mxu0 %v2970
        %3109 = vmatprep.subr.mxu0 0.0
        %3110 = vmatpush1.msra.mxu0 %v2971
        %3111 = vmatprep.subr.mxu0 0.0
        %3112 = vmatpush1.msra.mxu0 %v2972
        %3113 = vmatprep.subr.mxu0 0.0
        %3114 = vmatpush1.msra.mxu0 %v2973
        %3115 = vmatprep.subr.mxu0 0.0
        %3116 = vmatpush1.msra.mxu0 %v2974
        %3117 = vmatprep.subr.mxu0 0.0
        %3118 = vmatpush1.msra.mxu0 %v2975
        %3119 = vmatprep.subr.mxu0 0.0
        %3120 = vmatpush1.msra.mxu0 %v2976
        %3121 = vmatprep.subr.mxu0 0.0
        %3122 = vmatpush1.msra.mxu0 %v2977
        %3123 = vmatprep.subr.mxu0 0.0
        %3124 = vmatpush1.msra.mxu0 %v2978
        %3125 = vmatprep.subr.mxu0 0.0
        %3126 = vmatpush1.msra.mxu0 %v2979
        %3127 = vmatprep.subr.mxu0 0.0
        %3128 = vmatpush1.msra.mxu0 %v2980
        %3129 = vmatprep.subr.mxu0 0.0
        %3130 = vmatpush1.msra.mxu0 %v2981
        %3131 = vmatprep.subr.mxu0 0.0
        %3132 = vmatpush1.msra.mxu0 %v2982
        %3133 = vmatprep.subr.mxu0 0.0
        %3134 = vmatpush1.msra.mxu0 %v2983
        %3135 = vmatprep.subr.mxu0 0.0
        %3136 = vmatpush1.msra.mxu0 %v2984
        %3137 = vmatprep.subr.mxu0 0.0
        %3138 = vmatpush1.msra.mxu0 %v2985
        %3139 = vmatprep.subr.mxu0 0.0
        %3140 = vmatpush1.msra.mxu0 %v2986
        %3141 = vmatprep.subr.mxu0 0.0
        %3142 = vmatpush1.msra.mxu0 %v2987
        %3143 = vmatprep.subr.mxu0 0.0
        %3144 = vmatpush1.msra.mxu0 %v2988
        %3145 = vmatprep.mubr.f32.mxu0 %v2912
        %3146 = vmatmul.mubr.f32.gmra.mrb[0].mxu0 %v2911
        %v3147 = vpop.f32.mrb[0].mxu0
        %v3148 = vadd.f32 %v3063, %v3147
        %v3149 = vpop.f32.mrb[0].mxu0
        %3150 = vmatprep.mubr.f32.mxu0 %v2916
        %3151 = vmatmul.mubr.f32.gmra.mrb[0].mxu0 %v2915
        %v3152 = vpop.f32.mrb[0].mxu0
        %v3153 = vadd.f32 %v3068, %v3152
        %v3154 = vpop.f32.mrb[0].mxu0
        %3155 = vmatprep.mubr.f32.mxu0 %v2920
        %3156 = vmatmul.mubr.f32.gmra.mrb[0].mxu0 %v2919
        %v3157 = vpop.f32.mrb[0].mxu0
        %v3158 = vadd.f32 %v3073, %v3157
        %v3159 = vpop.f32.mrb[0].mxu0
        %3160 = vmatprep.mubr.f32.mxu0 %v2924
        %3161 = vmatmul.mubr.f32.gmra.mrb[0].mxu0 %v2923
        %v3162 = vpop.f32.mrb[0].mxu0
        %v3163 = vadd.f32 %v3078, %v3162
        %v3164 = vpop.f32.mrb[0].mxu0
        %3165 = vdwg.mxu0
        %v3166 = vadd.f32 %v2131, %v3148
        %v3167 = vadd.f32 %v2132, %v3153
        %v3168 = vadd.f32 %v2133, %v3158
        %v3169 = vadd.f32 %v2134, %v3163
        %3170 = vst [vmem:[%s541] sm:$0xff] %v3166
        %3171 = vst [vmem:[%s541 + $0x8] sm:$0xff] %v3167
        %3172 = vst [vmem:[%s541 + $0x10] sm:$0xff] %v3168
        %3173 = vst [vmem:[%s541 + $0x18] sm:$0xff] %v3169
        %s3174 = sand.u32 %s319, 1
        %s3175 = scalar_lea.sflag [#allocation4], %s3174
        %s3176 = sand.u32 %s319, 1
        %s3177 = smul.addr %s3176, 32
        %s3178 = scalar_lea.vmem [#allocation14], %s3177
        // Predicated region
        $region101: #{tpu_custom_call.1} parent=71 // pred_check
          %p3179 = pneg %p329
        $region102: #{tpu_custom_call.1} parent=71 // pred_check_branch
          %3181 = sbr.rel (%p3179) target = $region104
        $region103: #{tpu_custom_call.1} parent=71 // pred_region
          %s3183 = ssub.s32 512, 512
          %3184 = vsyncadd %s3175, %s3183
          %s3185 = smul.addr %s33, 4
          %s3186 = smul.addr %s3185, 128
          %s3187 = scalar_lea.hbm %s13, %s3186
          %s3188 = sshll.u32 %s3178, 4
          %s3189 = int_to_ptr.vmem [resolvable:$true] %s3188
          %3194 = dma.vmem_to_hbm [thread:$0]  %s3189, 512, %s3187, %s3175, 128, 128, 8
        $region104: #{tpu_custom_call.1} parent=71 // pred_fallthru
          _
      $region72: #{tpu_custom_call.1} parent=5 // pred_fallthru
        _
      %p3195 = scmp.le.s32.totalorder 2, %s28
      // Predicated region
      $region105: #{tpu_custom_call.1} parent=5 // pred_check
        %p3196 = pneg %p3195
      $region106: #{tpu_custom_call.1} parent=5 // pred_check_branch
        %3198 = sbr.rel (%p3196) target = $region108
      $region107: #{tpu_custom_call.1} parent=5 // pred_region
        %s3199 = ssub.s32 %s28, 2
        // Predicated region
        $region109: #{tpu_custom_call.1} parent=107 // pred_check
          %p3200 = pneg %p335
        $region110: #{tpu_custom_call.1} parent=107 // pred_check_branch
          %3202 = sbr.rel (%p3200) target = $region112
        $region111: #{tpu_custom_call.1} parent=107 // pred_region
          %s3203 = sand.u32 %s320, 1
          %s3204 = scalar_lea.sflag [#allocation4], %s3203
          %s3205 = sand.u32 %s320, 1
          %s3206 = smul.addr %s3205, 32
          %s3207 = scalar_lea.vmem [#allocation14], %s3206
          %3208 = dma.done %s3204, 512
        $region112: #{tpu_custom_call.1} parent=107 // pred_fallthru
          _
      $region108: #{tpu_custom_call.1} parent=5 // pred_fallthru
        _
    $region6: #{tpu_custom_call.1} parent=1 // loop_footer
      %s32 = sadd.s32 1, %s28
    $region7: #{tpu_custom_call.1} parent=1 // loop_footer_branch
      %27 = sbr.rel target = $region3
    $region8: #{tpu_custom_call.1} parent=1 // loop_exit
      _
    %3209 = vsyncpa [#allocation3], 1
    %s3210 = scalar_lea.sflag [#allocation3], 1
    %3211 = vsyncpa %s3210, 1
    %3212 = vsyncpa [#allocation6], 1
    %3213 = vsyncpa [#allocation9], 1
    %3214 = vsyncpa [#allocation12], 1
    %3215 = vsyncpa [#allocation4], 1
    %s3216 = scalar_lea.sflag [#allocation4], 1
    %3217 = vsyncpa %s3216, 1

</llo_original>
